<compile_context>
chip_gen: v7x
topology: tpu7x:2x2x1
jax: 0.10.0
libtpu: 0.0.40
codegen_flags: <defaults>
</compile_context>

<pallas_src>
import math

import jax
import jax.numpy as jnp
from jax import lax
from jax.experimental import pallas as pl
from jax.experimental.pallas import tpu as pltpu

# Storage / MXU-operand dtype for weights and activation scratches (review #5).
# Element-wise math, biases and carries stay f32 (v5e-safe, review #6).
MATMUL_DTYPE = jnp.bfloat16


# --------------------------------------------------------------------------
# Fused Pallas kernel: 3-layer bi-LSTM + last-hidden select + classifier
# --------------------------------------------------------------------------
def _fused_irony_kernel(
    lens_ref,    # (B, 1)  i32 : lens - 1  (B = sublane-padded batch)
    x_ref,       # (T*B, D)    : embedded input, row = t*B + b            (bf16)
    wih0_ref,    # (D, 8H)     : layer-0 W_ih^T, [fwd | bwd] on lanes     (bf16)
    b0_ref,      # (1, 8H) f32 : layer-0 fused bias, [fwd | bwd]
    wihA_ref,    # (2, H, 8H)  : layers 1-2 W_ih^T rows acting on y_fwd   (bf16)
    wihB_ref,    # (2, H, 8H)  : layers 1-2 W_ih^T rows acting on y_bwd   (bf16)
    b12_ref,     # (2, 1, 8H) f32
    whh_ref,     # (3, 2H, 8H) : block-diagonal W_hh^T per layer          (bf16)
    wcls_ref,    # (2H, O)     : classifier weight                        (bf16)
    bcls_ref,    # (1, O)  f32
    o_ref,       # (B, O)  f32 : log-softmax output
    xg_scr,      # (T*B, 8H)   : fused [fwd | bwd] input-projected gates  (bf16)
    yf_scr,      # (T*B, H)    : layer output, fwd direction              (bf16)
    yb_scr,      # (T*B, H)    : layer output, bwd direction              (bf16)
):
    TB = x_ref.shape[0]
    B = lens_ref.shape[0]
    T = TB // B
    H2 = whh_ref.shape[1]          # 2H
    H = H2 // 2
    H4 = 4 * H
    f32 = jnp.float32
    cdt = xg_scr.dtype             # matmul-operand dtype (bf16)

    lens_m1 = lens_ref[...]                                   # (B, 1)
    lane = lax.broadcasted_iota(jnp.int32, (B, H2), 1)        # last-hidden mask

    def run_layer(layer, is_last):
        """Bidirectional recurrence over the pre-projected gates in xg_scr."""
        w_blk = whh_ref[layer]                  # (2H, 8H), load hoisted out of loop
        zero = jnp.zeros((B, H2), f32)
        h_cat, c_cat, last_cat = zero, zero, zero
        for t in range(T):                      # static unroll (T small, rev #9)
            tb = T - 1 - t                      # bwd-direction time index
            # single fused recurrent matmul for both directions (rev #3)
            rec = jnp.dot(h_cat.astype(cdt), w_blk, preferred_element_type=f32)
            g_in = jnp.concatenate(
                [xg_scr[t * B:(t + 1) * B, 0:H4],          # fwd gates @ time t
                 xg_scr[tb * B:(tb + 1) * B, H4:2 * H4]],  # bwd gates @ time tb
                axis=1)
            g = rec + g_in.astype(f32)                     # (B, 8H) f32
            # full-width non-linearities: 2 EUP ops per step instead of 8 (rev #4)
            sg = jax.nn.sigmoid(g)
            tg = jnp.tanh(g)
            # PyTorch gate order i, f, g, o inside each 4H half
            c_f = (sg[:, H:2 * H] * c_cat[:, 0:H]
                   + sg[:, 0:H] * tg[:, 2 * H:3 * H])
            c_b = (sg[:, H4 + H:H4 + 2 * H] * c_cat[:, H:2 * H]
                   + sg[:, H4:H4 + H] * tg[:, H4 + 2 * H:H4 + 3 * H])
            c_cat = jnp.concatenate([c_f, c_b], axis=1)
            o_cat = jnp.concatenate(
                [sg[:, 3 * H:4 * H], sg[:, H4 + 3 * H:2 * H4]], axis=1)
            h_cat = o_cat * jnp.tanh(c_cat)
            if is_last:
                # keep h at t == lens-1 per direction with one full-width select
                target_t = jnp.where(lane < H, t, tb)
                sel = lens_m1 == target_t
                last_cat = jnp.where(sel, h_cat, last_cat)
            else:
                yf_scr[t * B:(t + 1) * B, :] = h_cat[:, 0:H].astype(yf_scr.dtype)
                yb_scr[tb * B:(tb + 1) * B, :] = h_cat[:, H:2 * H].astype(yb_scr.dtype)
        return last_cat

    # ---- layer 0: one fat input-projection matmul for all timesteps (rev #1/#2)
    xg_scr[...] = (jnp.dot(x_ref[...], wih0_ref[...], preferred_element_type=f32)
                   + b0_ref[...]).astype(xg_scr.dtype)
    run_layer(0, is_last=False)

    # ---- layers 1 & 2: projection reads the whole (T*B, H) y scratches
    last_cat = None
    for layer in (1, 2):
        wA = wihA_ref[layer - 1]
        wB = wihB_ref[layer - 1]
        bias = b12_ref[layer - 1]
        xg_scr[...] = (jnp.dot(yf_scr[...], wA, preferred_element_type=f32)
                       + jnp.dot(yb_scr[...], wB, preferred_element_type=f32)
                       + bias).astype(xg_scr.dtype)
        last_cat = run_layer(layer, is_last=(layer == 2))

    # ---- classifier (single (2H, O) matmul) + log-softmax
    logits = (jnp.dot(last_cat.astype(cdt), wcls_ref[...],
                      preferred_element_type=f32) + bcls_ref[...])
    m = jnp.max(logits, axis=-1, keepdims=True)
    lse = m + jnp.log(jnp.sum(jnp.exp(logits - m), axis=-1, keepdims=True))
    o_ref[...] = logits - lse


def fused_forward(lens_m1, x_flat, params):
    """lens_m1: (B, 1) int32; x_flat: (T*B, D), row = t*B + b -> (B, O) log-probs."""
    TB = x_flat.shape[0]
    B = lens_m1.shape[0]
    H = params["whh"].shape[1] // 2
    O = params["bcls"].shape[1]
    operands = (lens_m1, x_flat,
                params["wih0"], params["b0"],
                params["wihA"], params["wihB"], params["b12"],
                params["whh"], params["wcls"], params["bcls"])

    # Explicit VMEM budget (review #8): operands + output + scratches, x2 with
    # headroom, so the scoped limit never silently gates the tiling.
    item = jnp.dtype(MATMUL_DTYPE).itemsize
    scratch_bytes = TB * 8 * H * item + 2 * TB * H * item
    total = sum(int(a.size) * a.dtype.itemsize for a in operands)
    total += B * O * 4 + scratch_bytes
    vmem_budget = int(min(max(2 * total + (4 << 20), 16 << 20), 128 << 20))

    vmem = lambda: pl.BlockSpec(memory_space=pltpu.MemorySpace.VMEM)
    return pl.pallas_call(
        _fused_irony_kernel,
        out_shape=jax.ShapeDtypeStruct((B, O), jnp.float32),
        in_specs=[vmem() for _ in operands],
        out_specs=vmem(),
        scratch_shapes=[
            pltpu.VMEM((TB, 8 * H), MATMUL_DTYPE),   # fused gate pre-activations
            pltpu.VMEM((TB, H), MATMUL_DTYPE),       # layer outputs, fwd
            pltpu.VMEM((TB, H), MATMUL_DTYPE),       # layer outputs, bwd
        ],
        compiler_params=pltpu.CompilerParams(vmem_limit_bytes=vmem_budget),
    )(*operands)


# --------------------------------------------------------------------------
# Parameter construction (deterministic, PyTorch-style init) + forward wrapper
# --------------------------------------------------------------------------
def make_params(key, vocab_size, input_dim, hidden_dim, output_size, pad_idx,
                num_layers=3, matmul_dtype=MATMUL_DTYPE):
    keys = iter(jax.random.split(key, 64))
    H = hidden_dim
    H4, H8 = 4 * H, 8 * H
    f32 = jnp.float32
    params = {}

    emb = jax.random.normal(next(keys), (vocab_size, input_dim), f32)
    emb = emb.at[pad_idx].set(0.0)
    params["embeddings"] = emb

    k = 1.0 / math.sqrt(H)

    def dir_params(d_in):
        w_ih = jax.random.uniform(next(keys), (4 * H, d_in), f32, -k, k)
        w_hh = jax.random.uniform(next(keys), (4 * H, H), f32, -k, k)
        b_ih = jax.random.uniform(next(keys), (4 * H,), f32, -k, k)
        b_hh = jax.random.uniform(next(keys), (4 * H,), f32, -k, k)
        return w_ih.T, w_hh.T, (b_ih + b_hh)

    def blk_diag(whf, whb):
        blk = jnp.zeros((2 * H, H8), f32)
        return blk.at[:H, :H4].set(whf).at[H:, H4:].set(whb)

    whh_blk = []
    # layer 0 (input dim = input_dim); fwd/bwd input weights concatenated on N
    wf, whf, bf = dir_params(input_dim)
    wb, whb, bb = dir_params(input_dim)
    params["wih0"] = jnp.concatenate([wf, wb], axis=1).astype(matmul_dtype)   # (D, 8H)
    params["b0"] = jnp.concatenate([bf, bb]).reshape(1, H8)                   # f32
    whh_blk.append(blk_diag(whf, whb))

    # layers 1..num_layers-1 (input dim = 2H): split W_ih^T by input half so the
    # kernel never concatenates y_fwd/y_bwd; concatenate fwd/bwd along N.
    wihA, wihB, b12 = [], [], []
    for _layer in range(num_layers - 1):
        wf, whf, bf = dir_params(2 * H)          # wf: (2H, 4H)
        wb, whb, bb = dir_params(2 * H)
        wihA.append(jnp.concatenate([wf[:H], wb[:H]], axis=1))   # (H, 8H)
        wihB.append(jnp.concatenate([wf[H:], wb[H:]], axis=1))   # (H, 8H)
        b12.append(jnp.concatenate([bf, bb]).reshape(1, H8))
        whh_blk.append(blk_diag(whf, whb))
    params["wihA"] = jnp.stack(wihA).astype(matmul_dtype)        # (2, H, 8H)
    params["wihB"] = jnp.stack(wihB).astype(matmul_dtype)        # (2, H, 8H)
    params["b12"] = jnp.stack(b12)                               # (2, 1, 8H) f32
    params["whh"] = jnp.stack(whh_blk).astype(matmul_dtype)      # (3, 2H, 8H)

    kc = 1.0 / math.sqrt(2 * H)
    w_cls = jax.random.uniform(next(keys), (output_size, 2 * H), f32, -kc, kc)
    b_cls = jax.random.uniform(next(keys), (output_size,), f32, -kc, kc)
    params["wcls"] = w_cls.T.astype(matmul_dtype)                # (2H, O)
    params["bcls"] = b_cls.reshape(1, -1)                        # (1, O) f32
    return params


def irony_detector_forward(params, symbols, pad_idx):
    """symbols: (B, T) int32 token ids -> (B, 1, output_size) log-probs."""
    B, T = symbols.shape
    # pad batch to a multiple of 8 so every vreg / store uses all sublanes (rev #10)
    B_pad = ((B + 7) // 8) * 8
    sym = symbols
    if B_pad != B:
        sym = jnp.pad(symbols, ((0, B_pad - B), (0, 0)), constant_values=pad_idx)
    # 1. embedding lookup, time-major, flattened so each layer's input
    #    projection is one (T*B, Din) matmul inside the kernel (rev #1)
    x = jnp.take(params["embeddings"], sym.T, axis=0)            # (T, B_pad, D)
    x_flat = x.reshape(T * B_pad, -1).astype(MATMUL_DTYPE)       # row = t*B_pad + b
    # 2. dropout: identity at inference. TODO(synk): training-mode dropout.
    lens = jnp.sum((sym != pad_idx).astype(jnp.int32), axis=1)   # (B_pad,)
    # all-pad rows give lens-1 == -1 -> never selected -> zeros; those rows are
    # padding and sliced away below (PyTorch cannot handle length-0 rows anyway)
    lens_m1 = (lens - 1).reshape(B_pad, 1)
    # 3-5. fused bi-LSTM stack + last-hidden select + classifier + log-softmax
    logp = fused_forward(lens_m1, x_flat, params)                # (B_pad, O)
    return logp[:B, None, :]                                     # (B, 1, O)


# --------------------------------------------------------------------------
# Pure-JAX reference (same weights, f32 HIGHEST-precision math) for checking
# --------------------------------------------------------------------------
def _reference_forward(params, symbols, pad_idx):
    P = lax.Precision.HIGHEST
    f32 = jnp.float32
    B, T = symbols.shape
    H = params["whh"].shape[1] // 2
    H4 = 4 * H
    emb = jnp.take(params["embeddings"], symbols, axis=0)        # (B, T, D)
    # match the kernel's bf16 input rounding; the math itself stays f32
    x = jnp.transpose(emb, (1, 0, 2)).astype(MATMUL_DTYPE).astype(f32)
    lens = jnp.sum((symbols != pad_idx).astype(jnp.int32), axis=1)

    def one_dir(xg, whh, reverse):
        def body(carry, g):
            h, c = carry
            gates = g + jnp.dot(h, whh, precision=P)
            i = jax.nn.sigmoid(gates[:, 0:H])
            f = jax.nn.sigmoid(gates[:, H:2 * H])
            gg = jnp.tanh(gates[:, 2 * H:3 * H])
            o = jax.nn.sigmoid(gates[:, 3 * H:4 * H])
            c = f * c + i * gg
            h = o * jnp.tanh(c)
            return (h, c), h
        init = (jnp.zeros((B, H), f32), jnp.zeros((B, H), f32))
        seq = xg[::-1] if reverse else xg
        _, hs = lax.scan(body, init, seq)
        return hs[::-1] if reverse else hs

    whh_all = params["whh"].astype(f32)
    cur = x
    for layer in range(3):
        if layer == 0:
            w_cat = params["wih0"].astype(f32)                   # (D, 8H)
            b_cat = params["b0"]
        else:
            wA = params["wihA"][layer - 1].astype(f32)           # (H, 8H)
            wB = params["wihB"][layer - 1].astype(f32)
            w_cat = jnp.concatenate([wA, wB], axis=0)            # (2H, 8H)
            b_cat = params["b12"][layer - 1]
        whf = whh_all[layer][:H, :H4]
        whb = whh_all[layer][H:, H4:]
        Tl, Bl, Din = cur.shape
        flat = cur.reshape(Tl * Bl, Din)
        xg_cat = (jnp.dot(flat, w_cat, precision=P) + b_cat).reshape(Tl, Bl, 2 * H4)
        hs_f = one_dir(xg_cat[..., :H4], whf, False)
        hs_b = one_dir(xg_cat[..., H4:], whb, True)
        cur = jnp.concatenate([hs_f, hs_b], axis=-1)             # (T, B, 2H)
    encoded = jnp.transpose(cur, (1, 0, 2))                      # (B, T, 2H)
    last = encoded[jnp.arange(B), lens - 1, :]                   # (B, 2H)
    logits = jnp.dot(last, params["wcls"].astype(f32), precision=P) + params["bcls"]
    return jax.nn.log_softmax(logits, axis=-1)[:, None, :]


if __name__ == "__main__":
    # Small shapes consistent with the module.
    B, T = 2, 8
    vocab_size = 20
    input_dim = 32          # embedding dim == LSTM input_dim
    hidden_dim = 32
    output_size = 2
    pad_idx = 0

    key = jax.random.PRNGKey(0)
    pkey, skey = jax.random.split(key)

    params = make_params(pkey, vocab_size, input_dim, hidden_dim,
                         output_size, pad_idx)

    # Deterministic token ids in [1, vocab), with trailing padding.
    symbols = jax.random.randint(skey, (B, T), 1, vocab_size, dtype=jnp.int32)
    lens = jnp.array([T, 5], dtype=jnp.int32)
    mask = jnp.arange(T)[None, :] < lens[:, None]
    symbols = jnp.where(mask, symbols, pad_idx)

    out = irony_detector_forward(params, symbols, pad_idx)
    out = jax.block_until_ready(out)

    assert out.shape == (B, 1, output_size), out.shape
    assert bool(jnp.all(jnp.isfinite(out)))
    # log-softmax rows should sum (in prob space) to ~1
    assert bool(jnp.allclose(jnp.sum(jnp.exp(out), axis=-1), 1.0, atol=1e-5))

    # cross-check against the pure-JAX reference; bf16 weights/activations are
    # a consciously accepted accuracy trade (see performance review)
    ref = _reference_forward(params, symbols, pad_idx)
    tol = 3e-2 if MATMUL_DTYPE == jnp.bfloat16 else 2e-3
    assert bool(jnp.allclose(out, ref, atol=tol, rtol=tol)), (out, ref)

    print("KERNEL_OK")
</pallas_src>

<mosaic_0001>
module attributes {stable_mosaic.version = 11 : i64} {
  func.func @_fused_irony_kernel(%arg0: memref<8x1xi32, #tpu.memory_space<vmem>>, %arg1: memref<64x32xbf16, #tpu.memory_space<vmem>>, %arg2: memref<32x256xbf16, #tpu.memory_space<vmem>>, %arg3: memref<1x256xf32, #tpu.memory_space<vmem>>, %arg4: memref<2x32x256xbf16, #tpu.memory_space<vmem>>, %arg5: memref<2x32x256xbf16, #tpu.memory_space<vmem>>, %arg6: memref<2x1x256xf32, #tpu.memory_space<vmem>>, %arg7: memref<3x64x256xbf16, #tpu.memory_space<vmem>>, %arg8: memref<64x2xbf16, #tpu.memory_space<vmem>>, %arg9: memref<1x2xf32, #tpu.memory_space<vmem>>, %arg10: memref<8x2xf32, #tpu.memory_space<vmem>>, %arg11: memref<64x256xbf16, #tpu.memory_space<vmem>>, %arg12: memref<64x32xbf16, #tpu.memory_space<vmem>>, %arg13: memref<64x32xbf16, #tpu.memory_space<vmem>>) attributes {dimension_semantics = [], scalar_prefetch = 0 : i64, scratch_operands = 3 : i64, tpu.core_type = #tpu.core_type<tc>} {
    %c0 = arith.constant 0 : index
    %c0_0 = arith.constant 0 : index
    %0 = vector.load %arg0[%c0, %c0_0] : memref<8x1xi32, #tpu.memory_space<vmem>>, vector<8x1xi32>
    %1 = tpu.iota {dimensions = array<i32: 1>} : vector<8x64xi32>
    %c0_1 = arith.constant 0 : index
    %c0_2 = arith.constant 0 : index
    %2 = vector.load %arg1[%c0_1, %c0_2] : memref<64x32xbf16, #tpu.memory_space<vmem>>, vector<64x32xbf16>
    %c0_3 = arith.constant 0 : index
    %c0_4 = arith.constant 0 : index
    %3 = vector.load %arg2[%c0_3, %c0_4] : memref<32x256xbf16, #tpu.memory_space<vmem>>, vector<32x256xbf16>
    %cst = arith.constant dense<0.000000e+00> : vector<64x256xf32>
    %4 = tpu.matmul %2, %3, %cst {dimension_numbers = #tpu.dot_dimension_numbers<[1], [0], [0], [1], [0, 0, 1, 1], [], []>} : vector<64x32xbf16>, vector<32x256xbf16>, vector<64x256xf32> -> vector<64x256xf32>
    %c0_5 = arith.constant 0 : index
    %c0_6 = arith.constant 0 : index
    %5 = vector.load %arg3[%c0_5, %c0_6] : memref<1x256xf32, #tpu.memory_space<vmem>>, vector<1x256xf32>
    %6 = vector.broadcast %5 : vector<1x256xf32> to vector<64x256xf32>
    %7 = arith.addf %4, %6 : vector<64x256xf32>
    %8 = arith.truncf %7 : vector<64x256xf32> to vector<64x256xbf16>
    %c0_7 = arith.constant 0 : index
    %c0_8 = arith.constant 0 : index
    %9 = vector.load %arg11[%c0_7, %c0_8] : memref<64x256xbf16, #tpu.memory_space<vmem>>, vector<64x256xbf16>
    tpu.vector_store %arg11[%c0_7, %c0_8], %8 {strides = array<i32>} : memref<64x256xbf16, #tpu.memory_space<vmem>>, vector<64x256xbf16>,
    %c0_9 = arith.constant 0 : index
    %c0_10 = arith.constant 0 : index
    %c0_11 = arith.constant 0 : index
    %10 = vector.load %arg7[%c0_9, %c0_10, %c0_11] : memref<3x64x256xbf16, #tpu.memory_space<vmem>>, vector<1x64x256xbf16>
    %11 = vector.shape_cast %10 : vector<1x64x256xbf16> to vector<64x256xbf16>
    %cst_12 = arith.constant 0.000000e+00 : f32
    %12 = vector.broadcast %cst_12 : f32 to vector<8x64xf32>
    %13 = arith.truncf %12 : vector<8x64xf32> to vector<8x64xbf16>
    %cst_13 = arith.constant dense<0.000000e+00> : vector<8x256xf32>
    %14 = tpu.matmul %13, %11, %cst_13 {dimension_numbers = #tpu.dot_dimension_numbers<[1], [0], [0], [1], [0, 0, 1, 1], [], []>} : vector<8x64xbf16>, vector<64x256xbf16>, vector<8x256xf32> -> vector<8x256xf32>
    %c0_14 = arith.constant 0 : index
    %c0_15 = arith.constant 0 : index
    %15 = vector.load %arg11[%c0_14, %c0_15] : memref<64x256xbf16, #tpu.memory_space<vmem>>, vector<8x128xbf16>
    %c56 = arith.constant 56 : index
    %c128 = arith.constant 128 : index
    %16 = vector.load %arg11[%c56, %c128] : memref<64x256xbf16, #tpu.memory_space<vmem>>, vector<8x128xbf16>
    %17 = tpu.concatenate %15, %16 in 1 : vector<8x128xbf16>, vector<8x128xbf16> -> vector<8x256xbf16>
    %18 = arith.extf %17 : vector<8x256xbf16> to vector<8x256xf32>
    %19 = arith.addf %14, %18 : vector<8x256xf32>
    %20 = arith.negf %19 : vector<8x256xf32>
    %21 = math.exp %20 : vector<8x256xf32>
    %cst_16 = arith.constant 1.000000e+00 : f32
    %22 = vector.broadcast %cst_16 : f32 to vector<8x256xf32>
    %23 = arith.addf %22, %21 : vector<8x256xf32>
    %24 = arith.divf %22, %23 : vector<8x256xf32>
    %25 = math.tanh %19 : vector<8x256xf32>
    %26 = vector.extract_strided_slice %24 {offsets = [0, 32], sizes = [8, 32], strides = [1, 1]} : vector<8x256xf32> to vector<8x32xf32>
    %27 = vector.extract_strided_slice %12 {offsets = [0, 0], sizes = [8, 32], strides = [1, 1]} : vector<8x64xf32> to vector<8x32xf32>
    %28 = arith.mulf %26, %27 : vector<8x32xf32>
    %29 = vector.extract_strided_slice %24 {offsets = [0, 0], sizes = [8, 32], strides = [1, 1]} : vector<8x256xf32> to vector<8x32xf32>
    %30 = vector.extract_strided_slice %25 {offsets = [0, 64], sizes = [8, 32], strides = [1, 1]} : vector<8x256xf32> to vector<8x32xf32>
    %31 = arith.mulf %29, %30 : vector<8x32xf32>
    %32 = arith.addf %28, %31 : vector<8x32xf32>
    %33 = vector.extract_strided_slice %24 {offsets = [0, 160], sizes = [8, 32], strides = [1, 1]} : vector<8x256xf32> to vector<8x32xf32>
    %34 = vector.extract_strided_slice %12 {offsets = [0, 32], sizes = [8, 32], strides = [1, 1]} : vector<8x64xf32> to vector<8x32xf32>
    %35 = arith.mulf %33, %34 : vector<8x32xf32>
    %36 = vector.extract_strided_slice %24 {offsets = [0, 128], sizes = [8, 32], strides = [1, 1]} : vector<8x256xf32> to vector<8x32xf32>
    %37 = vector.extract_strided_slice %25 {offsets = [0, 192], sizes = [8, 32], strides = [1, 1]} : vector<8x256xf32> to vector<8x32xf32>
    %38 = arith.mulf %36, %37 : vector<8x32xf32>
    %39 = arith.addf %35, %38 : vector<8x32xf32>
    %40 = tpu.concatenate %32, %39 in 1 : vector<8x32xf32>, vector<8x32xf32> -> vector<8x64xf32>
    %41 = vector.extract_strided_slice %24 {offsets = [0, 96], sizes = [8, 32], strides = [1, 1]} : vector<8x256xf32> to vector<8x32xf32>
    %42 = vector.extract_strided_slice %24 {offsets = [0, 224], sizes = [8, 32], strides = [1, 1]} : vector<8x256xf32> to vector<8x32xf32>
    %43 = tpu.concatenate %41, %42 in 1 : vector<8x32xf32>, vector<8x32xf32> -> vector<8x64xf32>
    %44 = math.tanh %40 : vector<8x64xf32>
    %45 = arith.mulf %43, %44 : vector<8x64xf32>
    %46 = vector.extract_strided_slice %45 {offsets = [0, 0], sizes = [8, 32], strides = [1, 1]} : vector<8x64xf32> to vector<8x32xf32>
    %47 = arith.truncf %46 : vector<8x32xf32> to vector<8x32xbf16>
    %c0_17 = arith.constant 0 : index
    %c0_18 = arith.constant 0 : index
    %48 = vector.load %arg12[%c0_17, %c0_18] : memref<64x32xbf16, #tpu.memory_space<vmem>>, vector<8x32xbf16>
    tpu.vector_store %arg12[%c0_17, %c0_18], %47 {strides = array<i32>} : memref<64x32xbf16, #tpu.memory_space<vmem>>, vector<8x32xbf16>,
    %49 = vector.extract_strided_slice %45 {offsets = [0, 32], sizes = [8, 32], strides = [1, 1]} : vector<8x64xf32> to vector<8x32xf32>
    %50 = arith.truncf %49 : vector<8x32xf32> to vector<8x32xbf16>
    %c56_19 = arith.constant 56 : index
    %c0_20 = arith.constant 0 : index
    %51 = vector.load %arg13[%c56_19, %c0_20] : memref<64x32xbf16, #tpu.memory_space<vmem>>, vector<8x32xbf16>
    tpu.vector_store %arg13[%c56_19, %c0_20], %50 {strides = array<i32>} : memref<64x32xbf16, #tpu.memory_space<vmem>>, vector<8x32xbf16>,
    %52 = arith.truncf %45 : vector<8x64xf32> to vector<8x64xbf16>
    %cst_21 = arith.constant dense<0.000000e+00> : vector<8x256xf32>
    %53 = tpu.matmul %52, %11, %cst_21 {dimension_numbers = #tpu.dot_dimension_numbers<[1], [0], [0], [1], [0, 0, 1, 1], [], []>} : vector<8x64xbf16>, vector<64x256xbf16>, vector<8x256xf32> -> vector<8x256xf32>
    %c8 = arith.constant 8 : index
    %c0_22 = arith.constant 0 : index
    %54 = vector.load %arg11[%c8, %c0_22] : memref<64x256xbf16, #tpu.memory_space<vmem>>, vector<8x128xbf16>
    %c48 = arith.constant 48 : index
    %c128_23 = arith.constant 128 : index
    %55 = vector.load %arg11[%c48, %c128_23] : memref<64x256xbf16, #tpu.memory_space<vmem>>, vector<8x128xbf16>
    %56 = tpu.concatenate %54, %55 in 1 : vector<8x128xbf16>, vector<8x128xbf16> -> vector<8x256xbf16>
    %57 = arith.extf %56 : vector<8x256xbf16> to vector<8x256xf32>
    %58 = arith.addf %53, %57 : vector<8x256xf32>
    %59 = arith.negf %58 : vector<8x256xf32>
    %60 = math.exp %59 : vector<8x256xf32>
    %cst_24 = arith.constant 1.000000e+00 : f32
    %61 = vector.broadcast %cst_24 : f32 to vector<8x256xf32>
    %62 = arith.addf %61, %60 : vector<8x256xf32>
    %63 = arith.divf %61, %62 : vector<8x256xf32>
    %64 = math.tanh %58 : vector<8x256xf32>
    %65 = vector.extract_strided_slice %63 {offsets = [0, 32], sizes = [8, 32], strides = [1, 1]} : vector<8x256xf32> to vector<8x32xf32>
    %66 = vector.extract_strided_slice %40 {offsets = [0, 0], sizes = [8, 32], strides = [1, 1]} : vector<8x64xf32> to vector<8x32xf32>
    %67 = arith.mulf %65, %66 : vector<8x32xf32>
    %68 = vector.extract_strided_slice %63 {offsets = [0, 0], sizes = [8, 32], strides = [1, 1]} : vector<8x256xf32> to vector<8x32xf32>
    %69 = vector.extract_strided_slice %64 {offsets = [0, 64], sizes = [8, 32], strides = [1, 1]} : vector<8x256xf32> to vector<8x32xf32>
    %70 = arith.mulf %68, %69 : vector<8x32xf32>
    %71 = arith.addf %67, %70 : vector<8x32xf32>
    %72 = vector.extract_strided_slice %63 {offsets = [0, 160], sizes = [8, 32], strides = [1, 1]} : vector<8x256xf32> to vector<8x32xf32>
    %73 = vector.extract_strided_slice %40 {offsets = [0, 32], sizes = [8, 32], strides = [1, 1]} : vector<8x64xf32> to vector<8x32xf32>
    %74 = arith.mulf %72, %73 : vector<8x32xf32>
    %75 = vector.extract_strided_slice %63 {offsets = [0, 128], sizes = [8, 32], strides = [1, 1]} : vector<8x256xf32> to vector<8x32xf32>
    %76 = vector.extract_strided_slice %64 {offsets = [0, 192], sizes = [8, 32], strides = [1, 1]} : vector<8x256xf32> to vector<8x32xf32>
    %77 = arith.mulf %75, %76 : vector<8x32xf32>
    %78 = arith.addf %74, %77 : vector<8x32xf32>
    %79 = tpu.concatenate %71, %78 in 1 : vector<8x32xf32>, vector<8x32xf32> -> vector<8x64xf32>
    %80 = vector.extract_strided_slice %63 {offsets = [0, 96], sizes = [8, 32], strides = [1, 1]} : vector<8x256xf32> to vector<8x32xf32>
    %81 = vector.extract_strided_slice %63 {offsets = [0, 224], sizes = [8, 32], strides = [1, 1]} : vector<8x256xf32> to vector<8x32xf32>
    %82 = tpu.concatenate %80, %81 in 1 : vector<8x32xf32>, vector<8x32xf32> -> vector<8x64xf32>
    %83 = math.tanh %79 : vector<8x64xf32>
    %84 = arith.mulf %82, %83 : vector<8x64xf32>
    %85 = vector.extract_strided_slice %84 {offsets = [0, 0], sizes = [8, 32], strides = [1, 1]} : vector<8x64xf32> to vector<8x32xf32>
    %86 = arith.truncf %85 : vector<8x32xf32> to vector<8x32xbf16>
    %c8_25 = arith.constant 8 : index
    %c0_26 = arith.constant 0 : index
    %87 = vector.load %arg12[%c8_25, %c0_26] : memref<64x32xbf16, #tpu.memory_space<vmem>>, vector<8x32xbf16>
    tpu.vector_store %arg12[%c8_25, %c0_26], %86 {strides = array<i32>} : memref<64x32xbf16, #tpu.memory_space<vmem>>, vector<8x32xbf16>,
    %88 = vector.extract_strided_slice %84 {offsets = [0, 32], sizes = [8, 32], strides = [1, 1]} : vector<8x64xf32> to vector<8x32xf32>
    %89 = arith.truncf %88 : vector<8x32xf32> to vector<8x32xbf16>
    %c48_27 = arith.constant 48 : index
    %c0_28 = arith.constant 0 : index
    %90 = vector.load %arg13[%c48_27, %c0_28] : memref<64x32xbf16, #tpu.memory_space<vmem>>, vector<8x32xbf16>
    tpu.vector_store %arg13[%c48_27, %c0_28], %89 {strides = array<i32>} : memref<64x32xbf16, #tpu.memory_space<vmem>>, vector<8x32xbf16>,
    %91 = arith.truncf %84 : vector<8x64xf32> to vector<8x64xbf16>
    %cst_29 = arith.constant dense<0.000000e+00> : vector<8x256xf32>
    %92 = tpu.matmul %91, %11, %cst_29 {dimension_numbers = #tpu.dot_dimension_numbers<[1], [0], [0], [1], [0, 0, 1, 1], [], []>} : vector<8x64xbf16>, vector<64x256xbf16>, vector<8x256xf32> -> vector<8x256xf32>
    %c16 = arith.constant 16 : index
    %c0_30 = arith.constant 0 : index
    %93 = vector.load %arg11[%c16, %c0_30] : memref<64x256xbf16, #tpu.memory_space<vmem>>, vector<8x128xbf16>
    %c40 = arith.constant 40 : index
    %c128_31 = arith.constant 128 : index
    %94 = vector.load %arg11[%c40, %c128_31] : memref<64x256xbf16, #tpu.memory_space<vmem>>, vector<8x128xbf16>
    %95 = tpu.concatenate %93, %94 in 1 : vector<8x128xbf16>, vector<8x128xbf16> -> vector<8x256xbf16>
    %96 = arith.extf %95 : vector<8x256xbf16> to vector<8x256xf32>
    %97 = arith.addf %92, %96 : vector<8x256xf32>
    %98 = arith.negf %97 : vector<8x256xf32>
    %99 = math.exp %98 : vector<8x256xf32>
    %cst_32 = arith.constant 1.000000e+00 : f32
    %100 = vector.broadcast %cst_32 : f32 to vector<8x256xf32>
    %101 = arith.addf %100, %99 : vector<8x256xf32>
    %102 = arith.divf %100, %101 : vector<8x256xf32>
    %103 = math.tanh %97 : vector<8x256xf32>
    %104 = vector.extract_strided_slice %102 {offsets = [0, 32], sizes = [8, 32], strides = [1, 1]} : vector<8x256xf32> to vector<8x32xf32>
    %105 = vector.extract_strided_slice %79 {offsets = [0, 0], sizes = [8, 32], strides = [1, 1]} : vector<8x64xf32> to vector<8x32xf32>
    %106 = arith.mulf %104, %105 : vector<8x32xf32>
    %107 = vector.extract_strided_slice %102 {offsets = [0, 0], sizes = [8, 32], strides = [1, 1]} : vector<8x256xf32> to vector<8x32xf32>
    %108 = vector.extract_strided_slice %103 {offsets = [0, 64], sizes = [8, 32], strides = [1, 1]} : vector<8x256xf32> to vector<8x32xf32>
    %109 = arith.mulf %107, %108 : vector<8x32xf32>
    %110 = arith.addf %106, %109 : vector<8x32xf32>
    %111 = vector.extract_strided_slice %102 {offsets = [0, 160], sizes = [8, 32], strides = [1, 1]} : vector<8x256xf32> to vector<8x32xf32>
    %112 = vector.extract_strided_slice %79 {offsets = [0, 32], sizes = [8, 32], strides = [1, 1]} : vector<8x64xf32> to vector<8x32xf32>
    %113 = arith.mulf %111, %112 : vector<8x32xf32>
    %114 = vector.extract_strided_slice %102 {offsets = [0, 128], sizes = [8, 32], strides = [1, 1]} : vector<8x256xf32> to vector<8x32xf32>
    %115 = vector.extract_strided_slice %103 {offsets = [0, 192], sizes = [8, 32], strides = [1, 1]} : vector<8x256xf32> to vector<8x32xf32>
    %116 = arith.mulf %114, %115 : vector<8x32xf32>
    %117 = arith.addf %113, %116 : vector<8x32xf32>
    %118 = tpu.concatenate %110, %117 in 1 : vector<8x32xf32>, vector<8x32xf32> -> vector<8x64xf32>
    %119 = vector.extract_strided_slice %102 {offsets = [0, 96], sizes = [8, 32], strides = [1, 1]} : vector<8x256xf32> to vector<8x32xf32>
    %120 = vector.extract_strided_slice %102 {offsets = [0, 224], sizes = [8, 32], strides = [1, 1]} : vector<8x256xf32> to vector<8x32xf32>
    %121 = tpu.concatenate %119, %120 in 1 : vector<8x32xf32>, vector<8x32xf32> -> vector<8x64xf32>
    %122 = math.tanh %118 : vector<8x64xf32>
    %123 = arith.mulf %121, %122 : vector<8x64xf32>
    %124 = vector.extract_strided_slice %123 {offsets = [0, 0], sizes = [8, 32], strides = [1, 1]} : vector<8x64xf32> to vector<8x32xf32>
    %125 = arith.truncf %124 : vector<8x32xf32> to vector<8x32xbf16>
    %c16_33 = arith.constant 16 : index
    %c0_34 = arith.constant 0 : index
    %126 = vector.load %arg12[%c16_33, %c0_34] : memref<64x32xbf16, #tpu.memory_space<vmem>>, vector<8x32xbf16>
    tpu.vector_store %arg12[%c16_33, %c0_34], %125 {strides = array<i32>} : memref<64x32xbf16, #tpu.memory_space<vmem>>, vector<8x32xbf16>,
    %127 = vector.extract_strided_slice %123 {offsets = [0, 32], sizes = [8, 32], strides = [1, 1]} : vector<8x64xf32> to vector<8x32xf32>
    %128 = arith.truncf %127 : vector<8x32xf32> to vector<8x32xbf16>
    %c40_35 = arith.constant 40 : index
    %c0_36 = arith.constant 0 : index
    %129 = vector.load %arg13[%c40_35, %c0_36] : memref<64x32xbf16, #tpu.memory_space<vmem>>, vector<8x32xbf16>
    tpu.vector_store %arg13[%c40_35, %c0_36], %128 {strides = array<i32>} : memref<64x32xbf16, #tpu.memory_space<vmem>>, vector<8x32xbf16>,
    %130 = arith.truncf %123 : vector<8x64xf32> to vector<8x64xbf16>
    %cst_37 = arith.constant dense<0.000000e+00> : vector<8x256xf32>
    %131 = tpu.matmul %130, %11, %cst_37 {dimension_numbers = #tpu.dot_dimension_numbers<[1], [0], [0], [1], [0, 0, 1, 1], [], []>} : vector<8x64xbf16>, vector<64x256xbf16>, vector<8x256xf32> -> vector<8x256xf32>
    %c24 = arith.constant 24 : index
    %c0_38 = arith.constant 0 : index
    %132 = vector.load %arg11[%c24, %c0_38] : memref<64x256xbf16, #tpu.memory_space<vmem>>, vector<8x128xbf16>
    %c32 = arith.constant 32 : index
    %c128_39 = arith.constant 128 : index
    %133 = vector.load %arg11[%c32, %c128_39] : memref<64x256xbf16, #tpu.memory_space<vmem>>, vector<8x128xbf16>
    %134 = tpu.concatenate %132, %133 in 1 : vector<8x128xbf16>, vector<8x128xbf16> -> vector<8x256xbf16>
    %135 = arith.extf %134 : vector<8x256xbf16> to vector<8x256xf32>
    %136 = arith.addf %131, %135 : vector<8x256xf32>
    %137 = arith.negf %136 : vector<8x256xf32>
    %138 = math.exp %137 : vector<8x256xf32>
    %cst_40 = arith.constant 1.000000e+00 : f32
    %139 = vector.broadcast %cst_40 : f32 to vector<8x256xf32>
    %140 = arith.addf %139, %138 : vector<8x256xf32>
    %141 = arith.divf %139, %140 : vector<8x256xf32>
    %142 = math.tanh %136 : vector<8x256xf32>
    %143 = vector.extract_strided_slice %141 {offsets = [0, 32], sizes = [8, 32], strides = [1, 1]} : vector<8x256xf32> to vector<8x32xf32>
    %144 = vector.extract_strided_slice %118 {offsets = [0, 0], sizes = [8, 32], strides = [1, 1]} : vector<8x64xf32> to vector<8x32xf32>
    %145 = arith.mulf %143, %144 : vector<8x32xf32>
    %146 = vector.extract_strided_slice %141 {offsets = [0, 0], sizes = [8, 32], strides = [1, 1]} : vector<8x256xf32> to vector<8x32xf32>
    %147 = vector.extract_strided_slice %142 {offsets = [0, 64], sizes = [8, 32], strides = [1, 1]} : vector<8x256xf32> to vector<8x32xf32>
    %148 = arith.mulf %146, %147 : vector<8x32xf32>
    %149 = arith.addf %145, %148 : vector<8x32xf32>
    %150 = vector.extract_strided_slice %141 {offsets = [0, 160], sizes = [8, 32], strides = [1, 1]} : vector<8x256xf32> to vector<8x32xf32>
    %151 = vector.extract_strided_slice %118 {offsets = [0, 32], sizes = [8, 32], strides = [1, 1]} : vector<8x64xf32> to vector<8x32xf32>
    %152 = arith.mulf %150, %151 : vector<8x32xf32>
    %153 = vector.extract_strided_slice %141 {offsets = [0, 128], sizes = [8, 32], strides = [1, 1]} : vector<8x256xf32> to vector<8x32xf32>
    %154 = vector.extract_strided_slice %142 {offsets = [0, 192], sizes = [8, 32], strides = [1, 1]} : vector<8x256xf32> to vector<8x32xf32>
    %155 = arith.mulf %153, %154 : vector<8x32xf32>
    %156 = arith.addf %152, %155 : vector<8x32xf32>
    %157 = tpu.concatenate %149, %156 in 1 : vector<8x32xf32>, vector<8x32xf32> -> vector<8x64xf32>
    %158 = vector.extract_strided_slice %141 {offsets = [0, 96], sizes = [8, 32], strides = [1, 1]} : vector<8x256xf32> to vector<8x32xf32>
    %159 = vector.extract_strided_slice %141 {offsets = [0, 224], sizes = [8, 32], strides = [1, 1]} : vector<8x256xf32> to vector<8x32xf32>
    %160 = tpu.concatenate %158, %159 in 1 : vector<8x32xf32>, vector<8x32xf32> -> vector<8x64xf32>
    %161 = math.tanh %157 : vector<8x64xf32>
    %162 = arith.mulf %160, %161 : vector<8x64xf32>
    %163 = vector.extract_strided_slice %162 {offsets = [0, 0], sizes = [8, 32], strides = [1, 1]} : vector<8x64xf32> to vector<8x32xf32>
    %164 = arith.truncf %163 : vector<8x32xf32> to vector<8x32xbf16>
    %c24_41 = arith.constant 24 : index
    %c0_42 = arith.constant 0 : index
    %165 = vector.load %arg12[%c24_41, %c0_42] : memref<64x32xbf16, #tpu.memory_space<vmem>>, vector<8x32xbf16>
    tpu.vector_store %arg12[%c24_41, %c0_42], %164 {strides = array<i32>} : memref<64x32xbf16, #tpu.memory_space<vmem>>, vector<8x32xbf16>,
    %166 = vector.extract_strided_slice %162 {offsets = [0, 32], sizes = [8, 32], strides = [1, 1]} : vector<8x64xf32> to vector<8x32xf32>
    %167 = arith.truncf %166 : vector<8x32xf32> to vector<8x32xbf16>
    %c32_43 = arith.constant 32 : index
    %c0_44 = arith.constant 0 : index
    %168 = vector.load %arg13[%c32_43, %c0_44] : memref<64x32xbf16, #tpu.memory_space<vmem>>, vector<8x32xbf16>
    tpu.vector_store %arg13[%c32_43, %c0_44], %167 {strides = array<i32>} : memref<64x32xbf16, #tpu.memory_space<vmem>>, vector<8x32xbf16>,
    %169 = arith.truncf %162 : vector<8x64xf32> to vector<8x64xbf16>
    %cst_45 = arith.constant dense<0.000000e+00> : vector<8x256xf32>
    %170 = tpu.matmul %169, %11, %cst_45 {dimension_numbers = #tpu.dot_dimension_numbers<[1], [0], [0], [1], [0, 0, 1, 1], [], []>} : vector<8x64xbf16>, vector<64x256xbf16>, vector<8x256xf32> -> vector<8x256xf32>
    %c32_46 = arith.constant 32 : index
    %c0_47 = arith.constant 0 : index
    %171 = vector.load %arg11[%c32_46, %c0_47] : memref<64x256xbf16, #tpu.memory_space<vmem>>, vector<8x128xbf16>
    %c24_48 = arith.constant 24 : index
    %c128_49 = arith.constant 128 : index
    %172 = vector.load %arg11[%c24_48, %c128_49] : memref<64x256xbf16, #tpu.memory_space<vmem>>, vector<8x128xbf16>
    %173 = tpu.concatenate %171, %172 in 1 : vector<8x128xbf16>, vector<8x128xbf16> -> vector<8x256xbf16>
    %174 = arith.extf %173 : vector<8x256xbf16> to vector<8x256xf32>
    %175 = arith.addf %170, %174 : vector<8x256xf32>
    %176 = arith.negf %175 : vector<8x256xf32>
    %177 = math.exp %176 : vector<8x256xf32>
    %cst_50 = arith.constant 1.000000e+00 : f32
    %178 = vector.broadcast %cst_50 : f32 to vector<8x256xf32>
    %179 = arith.addf %178, %177 : vector<8x256xf32>
    %180 = arith.divf %178, %179 : vector<8x256xf32>
    %181 = math.tanh %175 : vector<8x256xf32>
    %182 = vector.extract_strided_slice %180 {offsets = [0, 32], sizes = [8, 32], strides = [1, 1]} : vector<8x256xf32> to vector<8x32xf32>
    %183 = vector.extract_strided_slice %157 {offsets = [0, 0], sizes = [8, 32], strides = [1, 1]} : vector<8x64xf32> to vector<8x32xf32>
    %184 = arith.mulf %182, %183 : vector<8x32xf32>
    %185 = vector.extract_strided_slice %180 {offsets = [0, 0], sizes = [8, 32], strides = [1, 1]} : vector<8x256xf32> to vector<8x32xf32>
    %186 = vector.extract_strided_slice %181 {offsets = [0, 64], sizes = [8, 32], strides = [1, 1]} : vector<8x256xf32> to vector<8x32xf32>
    %187 = arith.mulf %185, %186 : vector<8x32xf32>
    %188 = arith.addf %184, %187 : vector<8x32xf32>
    %189 = vector.extract_strided_slice %180 {offsets = [0, 160], sizes = [8, 32], strides = [1, 1]} : vector<8x256xf32> to vector<8x32xf32>
    %190 = vector.extract_strided_slice %157 {offsets = [0, 32], sizes = [8, 32], strides = [1, 1]} : vector<8x64xf32> to vector<8x32xf32>
    %191 = arith.mulf %189, %190 : vector<8x32xf32>
    %192 = vector.extract_strided_slice %180 {offsets = [0, 128], sizes = [8, 32], strides = [1, 1]} : vector<8x256xf32> to vector<8x32xf32>
    %193 = vector.extract_strided_slice %181 {offsets = [0, 192], sizes = [8, 32], strides = [1, 1]} : vector<8x256xf32> to vector<8x32xf32>
    %194 = arith.mulf %192, %193 : vector<8x32xf32>
    %195 = arith.addf %191, %194 : vector<8x32xf32>
    %196 = tpu.concatenate %188, %195 in 1 : vector<8x32xf32>, vector<8x32xf32> -> vector<8x64xf32>
    %197 = vector.extract_strided_slice %180 {offsets = [0, 96], sizes = [8, 32], strides = [1, 1]} : vector<8x256xf32> to vector<8x32xf32>
    %198 = vector.extract_strided_slice %180 {offsets = [0, 224], sizes = [8, 32], strides = [1, 1]} : vector<8x256xf32> to vector<8x32xf32>
    %199 = tpu.concatenate %197, %198 in 1 : vector<8x32xf32>, vector<8x32xf32> -> vector<8x64xf32>
    %200 = math.tanh %196 : vector<8x64xf32>
    %201 = arith.mulf %199, %200 : vector<8x64xf32>
    %202 = vector.extract_strided_slice %201 {offsets = [0, 0], sizes = [8, 32], strides = [1, 1]} : vector<8x64xf32> to vector<8x32xf32>
    %203 = arith.truncf %202 : vector<8x32xf32> to vector<8x32xbf16>
    %c32_51 = arith.constant 32 : index
    %c0_52 = arith.constant 0 : index
    %204 = vector.load %arg12[%c32_51, %c0_52] : memref<64x32xbf16, #tpu.memory_space<vmem>>, vector<8x32xbf16>
    tpu.vector_store %arg12[%c32_51, %c0_52], %203 {strides = array<i32>} : memref<64x32xbf16, #tpu.memory_space<vmem>>, vector<8x32xbf16>,
    %205 = vector.extract_strided_slice %201 {offsets = [0, 32], sizes = [8, 32], strides = [1, 1]} : vector<8x64xf32> to vector<8x32xf32>
    %206 = arith.truncf %205 : vector<8x32xf32> to vector<8x32xbf16>
    %c24_53 = arith.constant 24 : index
    %c0_54 = arith.constant 0 : index
    %207 = vector.load %arg13[%c24_53, %c0_54] : memref<64x32xbf16, #tpu.memory_space<vmem>>, vector<8x32xbf16>
    tpu.vector_store %arg13[%c24_53, %c0_54], %206 {strides = array<i32>} : memref<64x32xbf16, #tpu.memory_space<vmem>>, vector<8x32xbf16>,
    %208 = arith.truncf %201 : vector<8x64xf32> to vector<8x64xbf16>
    %cst_55 = arith.constant dense<0.000000e+00> : vector<8x256xf32>
    %209 = tpu.matmul %208, %11, %cst_55 {dimension_numbers = #tpu.dot_dimension_numbers<[1], [0], [0], [1], [0, 0, 1, 1], [], []>} : vector<8x64xbf16>, vector<64x256xbf16>, vector<8x256xf32> -> vector<8x256xf32>
    %c40_56 = arith.constant 40 : index
    %c0_57 = arith.constant 0 : index
    %210 = vector.load %arg11[%c40_56, %c0_57] : memref<64x256xbf16, #tpu.memory_space<vmem>>, vector<8x128xbf16>
    %c16_58 = arith.constant 16 : index
    %c128_59 = arith.constant 128 : index
    %211 = vector.load %arg11[%c16_58, %c128_59] : memref<64x256xbf16, #tpu.memory_space<vmem>>, vector<8x128xbf16>
    %212 = tpu.concatenate %210, %211 in 1 : vector<8x128xbf16>, vector<8x128xbf16> -> vector<8x256xbf16>
    %213 = arith.extf %212 : vector<8x256xbf16> to vector<8x256xf32>
    %214 = arith.addf %209, %213 : vector<8x256xf32>
    %215 = arith.negf %214 : vector<8x256xf32>
    %216 = math.exp %215 : vector<8x256xf32>
    %cst_60 = arith.constant 1.000000e+00 : f32
    %217 = vector.broadcast %cst_60 : f32 to vector<8x256xf32>
    %218 = arith.addf %217, %216 : vector<8x256xf32>
    %219 = arith.divf %217, %218 : vector<8x256xf32>
    %220 = math.tanh %214 : vector<8x256xf32>
    %221 = vector.extract_strided_slice %219 {offsets = [0, 32], sizes = [8, 32], strides = [1, 1]} : vector<8x256xf32> to vector<8x32xf32>
    %222 = vector.extract_strided_slice %196 {offsets = [0, 0], sizes = [8, 32], strides = [1, 1]} : vector<8x64xf32> to vector<8x32xf32>
    %223 = arith.mulf %221, %222 : vector<8x32xf32>
    %224 = vector.extract_strided_slice %219 {offsets = [0, 0], sizes = [8, 32], strides = [1, 1]} : vector<8x256xf32> to vector<8x32xf32>
    %225 = vector.extract_strided_slice %220 {offsets = [0, 64], sizes = [8, 32], strides = [1, 1]} : vector<8x256xf32> to vector<8x32xf32>
    %226 = arith.mulf %224, %225 : vector<8x32xf32>
    %227 = arith.addf %223, %226 : vector<8x32xf32>
    %228 = vector.extract_strided_slice %219 {offsets = [0, 160], sizes = [8, 32], strides = [1, 1]} : vector<8x256xf32> to vector<8x32xf32>
    %229 = vector.extract_strided_slice %196 {offsets = [0, 32], sizes = [8, 32], strides = [1, 1]} : vector<8x64xf32> to vector<8x32xf32>
    %230 = arith.mulf %228, %229 : vector<8x32xf32>
    %231 = vector.extract_strided_slice %219 {offsets = [0, 128], sizes = [8, 32], strides = [1, 1]} : vector<8x256xf32> to vector<8x32xf32>
    %232 = vector.extract_strided_slice %220 {offsets = [0, 192], sizes = [8, 32], strides = [1, 1]} : vector<8x256xf32> to vector<8x32xf32>
    %233 = arith.mulf %231, %232 : vector<8x32xf32>
    %234 = arith.addf %230, %233 : vector<8x32xf32>
    %235 = tpu.concatenate %227, %234 in 1 : vector<8x32xf32>, vector<8x32xf32> -> vector<8x64xf32>
    %236 = vector.extract_strided_slice %219 {offsets = [0, 96], sizes = [8, 32], strides = [1, 1]} : vector<8x256xf32> to vector<8x32xf32>
    %237 = vector.extract_strided_slice %219 {offsets = [0, 224], sizes = [8, 32], strides = [1, 1]} : vector<8x256xf32> to vector<8x32xf32>
    %238 = tpu.concatenate %236, %237 in 1 : vector<8x32xf32>, vector<8x32xf32> -> vector<8x64xf32>
    %239 = math.tanh %235 : vector<8x64xf32>
    %240 = arith.mulf %238, %239 : vector<8x64xf32>
    %241 = vector.extract_strided_slice %240 {offsets = [0, 0], sizes = [8, 32], strides = [1, 1]} : vector<8x64xf32> to vector<8x32xf32>
    %242 = arith.truncf %241 : vector<8x32xf32> to vector<8x32xbf16>
    %c40_61 = arith.constant 40 : index
    %c0_62 = arith.constant 0 : index
    %243 = vector.load %arg12[%c40_61, %c0_62] : memref<64x32xbf16, #tpu.memory_space<vmem>>, vector<8x32xbf16>
    tpu.vector_store %arg12[%c40_61, %c0_62], %242 {strides = array<i32>} : memref<64x32xbf16, #tpu.memory_space<vmem>>, vector<8x32xbf16>,
    %244 = vector.extract_strided_slice %240 {offsets = [0, 32], sizes = [8, 32], strides = [1, 1]} : vector<8x64xf32> to vector<8x32xf32>
    %245 = arith.truncf %244 : vector<8x32xf32> to vector<8x32xbf16>
    %c16_63 = arith.constant 16 : index
    %c0_64 = arith.constant 0 : index
    %246 = vector.load %arg13[%c16_63, %c0_64] : memref<64x32xbf16, #tpu.memory_space<vmem>>, vector<8x32xbf16>
    tpu.vector_store %arg13[%c16_63, %c0_64], %245 {strides = array<i32>} : memref<64x32xbf16, #tpu.memory_space<vmem>>, vector<8x32xbf16>,
    %247 = arith.truncf %240 : vector<8x64xf32> to vector<8x64xbf16>
    %cst_65 = arith.constant dense<0.000000e+00> : vector<8x256xf32>
    %248 = tpu.matmul %247, %11, %cst_65 {dimension_numbers = #tpu.dot_dimension_numbers<[1], [0], [0], [1], [0, 0, 1, 1], [], []>} : vector<8x64xbf16>, vector<64x256xbf16>, vector<8x256xf32> -> vector<8x256xf32>
    %c48_66 = arith.constant 48 : index
    %c0_67 = arith.constant 0 : index
    %249 = vector.load %arg11[%c48_66, %c0_67] : memref<64x256xbf16, #tpu.memory_space<vmem>>, vector<8x128xbf16>
    %c8_68 = arith.constant 8 : index
    %c128_69 = arith.constant 128 : index
    %250 = vector.load %arg11[%c8_68, %c128_69] : memref<64x256xbf16, #tpu.memory_space<vmem>>, vector<8x128xbf16>
    %251 = tpu.concatenate %249, %250 in 1 : vector<8x128xbf16>, vector<8x128xbf16> -> vector<8x256xbf16>
    %252 = arith.extf %251 : vector<8x256xbf16> to vector<8x256xf32>
    %253 = arith.addf %248, %252 : vector<8x256xf32>
    %254 = arith.negf %253 : vector<8x256xf32>
    %255 = math.exp %254 : vector<8x256xf32>
    %cst_70 = arith.constant 1.000000e+00 : f32
    %256 = vector.broadcast %cst_70 : f32 to vector<8x256xf32>
    %257 = arith.addf %256, %255 : vector<8x256xf32>
    %258 = arith.divf %256, %257 : vector<8x256xf32>
    %259 = math.tanh %253 : vector<8x256xf32>
    %260 = vector.extract_strided_slice %258 {offsets = [0, 32], sizes = [8, 32], strides = [1, 1]} : vector<8x256xf32> to vector<8x32xf32>
    %261 = vector.extract_strided_slice %235 {offsets = [0, 0], sizes = [8, 32], strides = [1, 1]} : vector<8x64xf32> to vector<8x32xf32>
    %262 = arith.mulf %260, %261 : vector<8x32xf32>
    %263 = vector.extract_strided_slice %258 {offsets = [0, 0], sizes = [8, 32], strides = [1, 1]} : vector<8x256xf32> to vector<8x32xf32>
    %264 = vector.extract_strided_slice %259 {offsets = [0, 64], sizes = [8, 32], strides = [1, 1]} : vector<8x256xf32> to vector<8x32xf32>
    %265 = arith.mulf %263, %264 : vector<8x32xf32>
    %266 = arith.addf %262, %265 : vector<8x32xf32>
    %267 = vector.extract_strided_slice %258 {offsets = [0, 160], sizes = [8, 32], strides = [1, 1]} : vector<8x256xf32> to vector<8x32xf32>
    %268 = vector.extract_strided_slice %235 {offsets = [0, 32], sizes = [8, 32], strides = [1, 1]} : vector<8x64xf32> to vector<8x32xf32>
    %269 = arith.mulf %267, %268 : vector<8x32xf32>
    %270 = vector.extract_strided_slice %258 {offsets = [0, 128], sizes = [8, 32], strides = [1, 1]} : vector<8x256xf32> to vector<8x32xf32>
    %271 = vector.extract_strided_slice %259 {offsets = [0, 192], sizes = [8, 32], strides = [1, 1]} : vector<8x256xf32> to vector<8x32xf32>
    %272 = arith.mulf %270, %271 : vector<8x32xf32>
    %273 = arith.addf %269, %272 : vector<8x32xf32>
    %274 = tpu.concatenate %266, %273 in 1 : vector<8x32xf32>, vector<8x32xf32> -> vector<8x64xf32>
    %275 = vector.extract_strided_slice %258 {offsets = [0, 96], sizes = [8, 32], strides = [1, 1]} : vector<8x256xf32> to vector<8x32xf32>
    %276 = vector.extract_strided_slice %258 {offsets = [0, 224], sizes = [8, 32], strides = [1, 1]} : vector<8x256xf32> to vector<8x32xf32>
    %277 = tpu.concatenate %275, %276 in 1 : vector<8x32xf32>, vector<8x32xf32> -> vector<8x64xf32>
    %278 = math.tanh %274 : vector<8x64xf32>
    %279 = arith.mulf %277, %278 : vector<8x64xf32>
    %280 = vector.extract_strided_slice %279 {offsets = [0, 0], sizes = [8, 32], strides = [1, 1]} : vector<8x64xf32> to vector<8x32xf32>
    %281 = arith.truncf %280 : vector<8x32xf32> to vector<8x32xbf16>
    %c48_71 = arith.constant 48 : index
    %c0_72 = arith.constant 0 : index
    %282 = vector.load %arg12[%c48_71, %c0_72] : memref<64x32xbf16, #tpu.memory_space<vmem>>, vector<8x32xbf16>
    tpu.vector_store %arg12[%c48_71, %c0_72], %281 {strides = array<i32>} : memref<64x32xbf16, #tpu.memory_space<vmem>>, vector<8x32xbf16>,
    %283 = vector.extract_strided_slice %279 {offsets = [0, 32], sizes = [8, 32], strides = [1, 1]} : vector<8x64xf32> to vector<8x32xf32>
    %284 = arith.truncf %283 : vector<8x32xf32> to vector<8x32xbf16>
    %c8_73 = arith.constant 8 : index
    %c0_74 = arith.constant 0 : index
    %285 = vector.load %arg13[%c8_73, %c0_74] : memref<64x32xbf16, #tpu.memory_space<vmem>>, vector<8x32xbf16>
    tpu.vector_store %arg13[%c8_73, %c0_74], %284 {strides = array<i32>} : memref<64x32xbf16, #tpu.memory_space<vmem>>, vector<8x32xbf16>,
    %286 = arith.truncf %279 : vector<8x64xf32> to vector<8x64xbf16>
    %cst_75 = arith.constant dense<0.000000e+00> : vector<8x256xf32>
    %287 = tpu.matmul %286, %11, %cst_75 {dimension_numbers = #tpu.dot_dimension_numbers<[1], [0], [0], [1], [0, 0, 1, 1], [], []>} : vector<8x64xbf16>, vector<64x256xbf16>, vector<8x256xf32> -> vector<8x256xf32>
    %c56_76 = arith.constant 56 : index
    %c0_77 = arith.constant 0 : index
    %288 = vector.load %arg11[%c56_76, %c0_77] : memref<64x256xbf16, #tpu.memory_space<vmem>>, vector<8x128xbf16>
    %c0_78 = arith.constant 0 : index
    %c128_79 = arith.constant 128 : index
    %289 = vector.load %arg11[%c0_78, %c128_79] : memref<64x256xbf16, #tpu.memory_space<vmem>>, vector<8x128xbf16>
    %290 = tpu.concatenate %288, %289 in 1 : vector<8x128xbf16>, vector<8x128xbf16> -> vector<8x256xbf16>
    %291 = arith.extf %290 : vector<8x256xbf16> to vector<8x256xf32>
    %292 = arith.addf %287, %291 : vector<8x256xf32>
    %293 = arith.negf %292 : vector<8x256xf32>
    %294 = math.exp %293 : vector<8x256xf32>
    %cst_80 = arith.constant 1.000000e+00 : f32
    %295 = vector.broadcast %cst_80 : f32 to vector<8x256xf32>
    %296 = arith.addf %295, %294 : vector<8x256xf32>
    %297 = arith.divf %295, %296 : vector<8x256xf32>
    %298 = math.tanh %292 : vector<8x256xf32>
    %299 = vector.extract_strided_slice %297 {offsets = [0, 32], sizes = [8, 32], strides = [1, 1]} : vector<8x256xf32> to vector<8x32xf32>
    %300 = vector.extract_strided_slice %274 {offsets = [0, 0], sizes = [8, 32], strides = [1, 1]} : vector<8x64xf32> to vector<8x32xf32>
    %301 = arith.mulf %299, %300 : vector<8x32xf32>
    %302 = vector.extract_strided_slice %297 {offsets = [0, 0], sizes = [8, 32], strides = [1, 1]} : vector<8x256xf32> to vector<8x32xf32>
    %303 = vector.extract_strided_slice %298 {offsets = [0, 64], sizes = [8, 32], strides = [1, 1]} : vector<8x256xf32> to vector<8x32xf32>
    %304 = arith.mulf %302, %303 : vector<8x32xf32>
    %305 = arith.addf %301, %304 : vector<8x32xf32>
    %306 = vector.extract_strided_slice %297 {offsets = [0, 160], sizes = [8, 32], strides = [1, 1]} : vector<8x256xf32> to vector<8x32xf32>
    %307 = vector.extract_strided_slice %274 {offsets = [0, 32], sizes = [8, 32], strides = [1, 1]} : vector<8x64xf32> to vector<8x32xf32>
    %308 = arith.mulf %306, %307 : vector<8x32xf32>
    %309 = vector.extract_strided_slice %297 {offsets = [0, 128], sizes = [8, 32], strides = [1, 1]} : vector<8x256xf32> to vector<8x32xf32>
    %310 = vector.extract_strided_slice %298 {offsets = [0, 192], sizes = [8, 32], strides = [1, 1]} : vector<8x256xf32> to vector<8x32xf32>
    %311 = arith.mulf %309, %310 : vector<8x32xf32>
    %312 = arith.addf %308, %311 : vector<8x32xf32>
    %313 = tpu.concatenate %305, %312 in 1 : vector<8x32xf32>, vector<8x32xf32> -> vector<8x64xf32>
    %314 = vector.extract_strided_slice %297 {offsets = [0, 96], sizes = [8, 32], strides = [1, 1]} : vector<8x256xf32> to vector<8x32xf32>
    %315 = vector.extract_strided_slice %297 {offsets = [0, 224], sizes = [8, 32], strides = [1, 1]} : vector<8x256xf32> to vector<8x32xf32>
    %316 = tpu.concatenate %314, %315 in 1 : vector<8x32xf32>, vector<8x32xf32> -> vector<8x64xf32>
    %317 = math.tanh %313 : vector<8x64xf32>
    %318 = arith.mulf %316, %317 : vector<8x64xf32>
    %319 = vector.extract_strided_slice %318 {offsets = [0, 0], sizes = [8, 32], strides = [1, 1]} : vector<8x64xf32> to vector<8x32xf32>
    %320 = arith.truncf %319 : vector<8x32xf32> to vector<8x32xbf16>
    %c56_81 = arith.constant 56 : index
    %c0_82 = arith.constant 0 : index
    %321 = vector.load %arg12[%c56_81, %c0_82] : memref<64x32xbf16, #tpu.memory_space<vmem>>, vector<8x32xbf16>
    tpu.vector_store %arg12[%c56_81, %c0_82], %320 {strides = array<i32>} : memref<64x32xbf16, #tpu.memory_space<vmem>>, vector<8x32xbf16>,
    %322 = vector.extract_strided_slice %318 {offsets = [0, 32], sizes = [8, 32], strides = [1, 1]} : vector<8x64xf32> to vector<8x32xf32>
    %323 = arith.truncf %322 : vector<8x32xf32> to vector<8x32xbf16>
    %c0_83 = arith.constant 0 : index
    %c0_84 = arith.constant 0 : index
    %324 = vector.load %arg13[%c0_83, %c0_84] : memref<64x32xbf16, #tpu.memory_space<vmem>>, vector<8x32xbf16>
    tpu.vector_store %arg13[%c0_83, %c0_84], %323 {strides = array<i32>} : memref<64x32xbf16, #tpu.memory_space<vmem>>, vector<8x32xbf16>,
    %c0_85 = arith.constant 0 : index
    %c0_86 = arith.constant 0 : index
    %c0_87 = arith.constant 0 : index
    %325 = vector.load %arg4[%c0_85, %c0_86, %c0_87] : memref<2x32x256xbf16, #tpu.memory_space<vmem>>, vector<1x32x256xbf16>
    %326 = vector.shape_cast %325 : vector<1x32x256xbf16> to vector<32x256xbf16>
    %c0_88 = arith.constant 0 : index
    %c0_89 = arith.constant 0 : index
    %c0_90 = arith.constant 0 : index
    %327 = vector.load %arg5[%c0_88, %c0_89, %c0_90] : memref<2x32x256xbf16, #tpu.memory_space<vmem>>, vector<1x32x256xbf16>
    %328 = vector.shape_cast %327 : vector<1x32x256xbf16> to vector<32x256xbf16>
    %c0_91 = arith.constant 0 : index
    %c0_92 = arith.constant 0 : index
    %c0_93 = arith.constant 0 : index
    %329 = vector.load %arg6[%c0_91, %c0_92, %c0_93] : memref<2x1x256xf32, #tpu.memory_space<vmem>>, vector<1x1x256xf32>
    %330 = vector.shape_cast %329 : vector<1x1x256xf32> to vector<1x256xf32>
    %c0_94 = arith.constant 0 : index
    %c0_95 = arith.constant 0 : index
    %331 = vector.load %arg12[%c0_94, %c0_95] : memref<64x32xbf16, #tpu.memory_space<vmem>>, vector<64x32xbf16>
    %cst_96 = arith.constant dense<0.000000e+00> : vector<64x256xf32>
    %332 = tpu.matmul %331, %326, %cst_96 {dimension_numbers = #tpu.dot_dimension_numbers<[1], [0], [0], [1], [0, 0, 1, 1], [], []>} : vector<64x32xbf16>, vector<32x256xbf16>, vector<64x256xf32> -> vector<64x256xf32>
    %c0_97 = arith.constant 0 : index
    %c0_98 = arith.constant 0 : index
    %333 = vector.load %arg13[%c0_97, %c0_98] : memref<64x32xbf16, #tpu.memory_space<vmem>>, vector<64x32xbf16>
    %cst_99 = arith.constant dense<0.000000e+00> : vector<64x256xf32>
    %334 = tpu.matmul %333, %328, %cst_99 {dimension_numbers = #tpu.dot_dimension_numbers<[1], [0], [0], [1], [0, 0, 1, 1], [], []>} : vector<64x32xbf16>, vector<32x256xbf16>, vector<64x256xf32> -> vector<64x256xf32>
    %335 = arith.addf %332, %334 : vector<64x256xf32>
    %336 = vector.broadcast %330 : vector<1x256xf32> to vector<64x256xf32>
    %337 = arith.addf %335, %336 : vector<64x256xf32>
    %338 = arith.truncf %337 : vector<64x256xf32> to vector<64x256xbf16>
    %c0_100 = arith.constant 0 : index
    %c0_101 = arith.constant 0 : index
    %339 = vector.load %arg11[%c0_100, %c0_101] : memref<64x256xbf16, #tpu.memory_space<vmem>>, vector<64x256xbf16>
    tpu.vector_store %arg11[%c0_100, %c0_101], %338 {strides = array<i32>} : memref<64x256xbf16, #tpu.memory_space<vmem>>, vector<64x256xbf16>,
    %c1 = arith.constant 1 : index
    %c0_102 = arith.constant 0 : index
    %c0_103 = arith.constant 0 : index
    %340 = vector.load %arg7[%c1, %c0_102, %c0_103] : memref<3x64x256xbf16, #tpu.memory_space<vmem>>, vector<1x64x256xbf16>
    %341 = vector.shape_cast %340 : vector<1x64x256xbf16> to vector<64x256xbf16>
    %cst_104 = arith.constant 0.000000e+00 : f32
    %342 = vector.broadcast %cst_104 : f32 to vector<8x64xf32>
    %343 = arith.truncf %342 : vector<8x64xf32> to vector<8x64xbf16>
    %cst_105 = arith.constant dense<0.000000e+00> : vector<8x256xf32>
    %344 = tpu.matmul %343, %341, %cst_105 {dimension_numbers = #tpu.dot_dimension_numbers<[1], [0], [0], [1], [0, 0, 1, 1], [], []>} : vector<8x64xbf16>, vector<64x256xbf16>, vector<8x256xf32> -> vector<8x256xf32>
    %c0_106 = arith.constant 0 : index
    %c0_107 = arith.constant 0 : index
    %345 = vector.load %arg11[%c0_106, %c0_107] : memref<64x256xbf16, #tpu.memory_space<vmem>>, vector<8x128xbf16>
    %c56_108 = arith.constant 56 : index
    %c128_109 = arith.constant 128 : index
    %346 = vector.load %arg11[%c56_108, %c128_109] : memref<64x256xbf16, #tpu.memory_space<vmem>>, vector<8x128xbf16>
    %347 = tpu.concatenate %345, %346 in 1 : vector<8x128xbf16>, vector<8x128xbf16> -> vector<8x256xbf16>
    %348 = arith.extf %347 : vector<8x256xbf16> to vector<8x256xf32>
    %349 = arith.addf %344, %348 : vector<8x256xf32>
    %350 = arith.negf %349 : vector<8x256xf32>
    %351 = math.exp %350 : vector<8x256xf32>
    %cst_110 = arith.constant 1.000000e+00 : f32
    %352 = vector.broadcast %cst_110 : f32 to vector<8x256xf32>
    %353 = arith.addf %352, %351 : vector<8x256xf32>
    %354 = arith.divf %352, %353 : vector<8x256xf32>
    %355 = math.tanh %349 : vector<8x256xf32>
    %356 = vector.extract_strided_slice %354 {offsets = [0, 32], sizes = [8, 32], strides = [1, 1]} : vector<8x256xf32> to vector<8x32xf32>
    %357 = vector.extract_strided_slice %342 {offsets = [0, 0], sizes = [8, 32], strides = [1, 1]} : vector<8x64xf32> to vector<8x32xf32>
    %358 = arith.mulf %356, %357 : vector<8x32xf32>
    %359 = vector.extract_strided_slice %354 {offsets = [0, 0], sizes = [8, 32], strides = [1, 1]} : vector<8x256xf32> to vector<8x32xf32>
    %360 = vector.extract_strided_slice %355 {offsets = [0, 64], sizes = [8, 32], strides = [1, 1]} : vector<8x256xf32> to vector<8x32xf32>
    %361 = arith.mulf %359, %360 : vector<8x32xf32>
    %362 = arith.addf %358, %361 : vector<8x32xf32>
    %363 = vector.extract_strided_slice %354 {offsets = [0, 160], sizes = [8, 32], strides = [1, 1]} : vector<8x256xf32> to vector<8x32xf32>
    %364 = vector.extract_strided_slice %342 {offsets = [0, 32], sizes = [8, 32], strides = [1, 1]} : vector<8x64xf32> to vector<8x32xf32>
    %365 = arith.mulf %363, %364 : vector<8x32xf32>
    %366 = vector.extract_strided_slice %354 {offsets = [0, 128], sizes = [8, 32], strides = [1, 1]} : vector<8x256xf32> to vector<8x32xf32>
    %367 = vector.extract_strided_slice %355 {offsets = [0, 192], sizes = [8, 32], strides = [1, 1]} : vector<8x256xf32> to vector<8x32xf32>
    %368 = arith.mulf %366, %367 : vector<8x32xf32>
    %369 = arith.addf %365, %368 : vector<8x32xf32>
    %370 = tpu.concatenate %362, %369 in 1 : vector<8x32xf32>, vector<8x32xf32> -> vector<8x64xf32>
    %371 = vector.extract_strided_slice %354 {offsets = [0, 96], sizes = [8, 32], strides = [1, 1]} : vector<8x256xf32> to vector<8x32xf32>
    %372 = vector.extract_strided_slice %354 {offsets = [0, 224], sizes = [8, 32], strides = [1, 1]} : vector<8x256xf32> to vector<8x32xf32>
    %373 = tpu.concatenate %371, %372 in 1 : vector<8x32xf32>, vector<8x32xf32> -> vector<8x64xf32>
    %374 = math.tanh %370 : vector<8x64xf32>
    %375 = arith.mulf %373, %374 : vector<8x64xf32>
    %376 = vector.extract_strided_slice %375 {offsets = [0, 0], sizes = [8, 32], strides = [1, 1]} : vector<8x64xf32> to vector<8x32xf32>
    %377 = arith.truncf %376 : vector<8x32xf32> to vector<8x32xbf16>
    %c0_111 = arith.constant 0 : index
    %c0_112 = arith.constant 0 : index
    %378 = vector.load %arg12[%c0_111, %c0_112] : memref<64x32xbf16, #tpu.memory_space<vmem>>, vector<8x32xbf16>
    tpu.vector_store %arg12[%c0_111, %c0_112], %377 {strides = array<i32>} : memref<64x32xbf16, #tpu.memory_space<vmem>>, vector<8x32xbf16>,
    %379 = vector.extract_strided_slice %375 {offsets = [0, 32], sizes = [8, 32], strides = [1, 1]} : vector<8x64xf32> to vector<8x32xf32>
    %380 = arith.truncf %379 : vector<8x32xf32> to vector<8x32xbf16>
    %c56_113 = arith.constant 56 : index
    %c0_114 = arith.constant 0 : index
    %381 = vector.load %arg13[%c56_113, %c0_114] : memref<64x32xbf16, #tpu.memory_space<vmem>>, vector<8x32xbf16>
    tpu.vector_store %arg13[%c56_113, %c0_114], %380 {strides = array<i32>} : memref<64x32xbf16, #tpu.memory_space<vmem>>, vector<8x32xbf16>,
    %382 = arith.truncf %375 : vector<8x64xf32> to vector<8x64xbf16>
    %cst_115 = arith.constant dense<0.000000e+00> : vector<8x256xf32>
    %383 = tpu.matmul %382, %341, %cst_115 {dimension_numbers = #tpu.dot_dimension_numbers<[1], [0], [0], [1], [0, 0, 1, 1], [], []>} : vector<8x64xbf16>, vector<64x256xbf16>, vector<8x256xf32> -> vector<8x256xf32>
    %c8_116 = arith.constant 8 : index
    %c0_117 = arith.constant 0 : index
    %384 = vector.load %arg11[%c8_116, %c0_117] : memref<64x256xbf16, #tpu.memory_space<vmem>>, vector<8x128xbf16>
    %c48_118 = arith.constant 48 : index
    %c128_119 = arith.constant 128 : index
    %385 = vector.load %arg11[%c48_118, %c128_119] : memref<64x256xbf16, #tpu.memory_space<vmem>>, vector<8x128xbf16>
    %386 = tpu.concatenate %384, %385 in 1 : vector<8x128xbf16>, vector<8x128xbf16> -> vector<8x256xbf16>
    %387 = arith.extf %386 : vector<8x256xbf16> to vector<8x256xf32>
    %388 = arith.addf %383, %387 : vector<8x256xf32>
    %389 = arith.negf %388 : vector<8x256xf32>
    %390 = math.exp %389 : vector<8x256xf32>
    %cst_120 = arith.constant 1.000000e+00 : f32
    %391 = vector.broadcast %cst_120 : f32 to vector<8x256xf32>
    %392 = arith.addf %391, %390 : vector<8x256xf32>
    %393 = arith.divf %391, %392 : vector<8x256xf32>
    %394 = math.tanh %388 : vector<8x256xf32>
    %395 = vector.extract_strided_slice %393 {offsets = [0, 32], sizes = [8, 32], strides = [1, 1]} : vector<8x256xf32> to vector<8x32xf32>
    %396 = vector.extract_strided_slice %370 {offsets = [0, 0], sizes = [8, 32], strides = [1, 1]} : vector<8x64xf32> to vector<8x32xf32>
    %397 = arith.mulf %395, %396 : vector<8x32xf32>
    %398 = vector.extract_strided_slice %393 {offsets = [0, 0], sizes = [8, 32], strides = [1, 1]} : vector<8x256xf32> to vector<8x32xf32>
    %399 = vector.extract_strided_slice %394 {offsets = [0, 64], sizes = [8, 32], strides = [1, 1]} : vector<8x256xf32> to vector<8x32xf32>
    %400 = arith.mulf %398, %399 : vector<8x32xf32>
    %401 = arith.addf %397, %400 : vector<8x32xf32>
    %402 = vector.extract_strided_slice %393 {offsets = [0, 160], sizes = [8, 32], strides = [1, 1]} : vector<8x256xf32> to vector<8x32xf32>
    %403 = vector.extract_strided_slice %370 {offsets = [0, 32], sizes = [8, 32], strides = [1, 1]} : vector<8x64xf32> to vector<8x32xf32>
    %404 = arith.mulf %402, %403 : vector<8x32xf32>
    %405 = vector.extract_strided_slice %393 {offsets = [0, 128], sizes = [8, 32], strides = [1, 1]} : vector<8x256xf32> to vector<8x32xf32>
    %406 = vector.extract_strided_slice %394 {offsets = [0, 192], sizes = [8, 32], strides = [1, 1]} : vector<8x256xf32> to vector<8x32xf32>
    %407 = arith.mulf %405, %406 : vector<8x32xf32>
    %408 = arith.addf %404, %407 : vector<8x32xf32>
    %409 = tpu.concatenate %401, %408 in 1 : vector<8x32xf32>, vector<8x32xf32> -> vector<8x64xf32>
    %410 = vector.extract_strided_slice %393 {offsets = [0, 96], sizes = [8, 32], strides = [1, 1]} : vector<8x256xf32> to vector<8x32xf32>
    %411 = vector.extract_strided_slice %393 {offsets = [0, 224], sizes = [8, 32], strides = [1, 1]} : vector<8x256xf32> to vector<8x32xf32>
    %412 = tpu.concatenate %410, %411 in 1 : vector<8x32xf32>, vector<8x32xf32> -> vector<8x64xf32>
    %413 = math.tanh %409 : vector<8x64xf32>
    %414 = arith.mulf %412, %413 : vector<8x64xf32>
    %415 = vector.extract_strided_slice %414 {offsets = [0, 0], sizes = [8, 32], strides = [1, 1]} : vector<8x64xf32> to vector<8x32xf32>
    %416 = arith.truncf %415 : vector<8x32xf32> to vector<8x32xbf16>
    %c8_121 = arith.constant 8 : index
    %c0_122 = arith.constant 0 : index
    %417 = vector.load %arg12[%c8_121, %c0_122] : memref<64x32xbf16, #tpu.memory_space<vmem>>, vector<8x32xbf16>
    tpu.vector_store %arg12[%c8_121, %c0_122], %416 {strides = array<i32>} : memref<64x32xbf16, #tpu.memory_space<vmem>>, vector<8x32xbf16>,
    %418 = vector.extract_strided_slice %414 {offsets = [0, 32], sizes = [8, 32], strides = [1, 1]} : vector<8x64xf32> to vector<8x32xf32>
    %419 = arith.truncf %418 : vector<8x32xf32> to vector<8x32xbf16>
    %c48_123 = arith.constant 48 : index
    %c0_124 = arith.constant 0 : index
    %420 = vector.load %arg13[%c48_123, %c0_124] : memref<64x32xbf16, #tpu.memory_space<vmem>>, vector<8x32xbf16>
    tpu.vector_store %arg13[%c48_123, %c0_124], %419 {strides = array<i32>} : memref<64x32xbf16, #tpu.memory_space<vmem>>, vector<8x32xbf16>,
    %421 = arith.truncf %414 : vector<8x64xf32> to vector<8x64xbf16>
    %cst_125 = arith.constant dense<0.000000e+00> : vector<8x256xf32>
    %422 = tpu.matmul %421, %341, %cst_125 {dimension_numbers = #tpu.dot_dimension_numbers<[1], [0], [0], [1], [0, 0, 1, 1], [], []>} : vector<8x64xbf16>, vector<64x256xbf16>, vector<8x256xf32> -> vector<8x256xf32>
    %c16_126 = arith.constant 16 : index
    %c0_127 = arith.constant 0 : index
    %423 = vector.load %arg11[%c16_126, %c0_127] : memref<64x256xbf16, #tpu.memory_space<vmem>>, vector<8x128xbf16>
    %c40_128 = arith.constant 40 : index
    %c128_129 = arith.constant 128 : index
    %424 = vector.load %arg11[%c40_128, %c128_129] : memref<64x256xbf16, #tpu.memory_space<vmem>>, vector<8x128xbf16>
    %425 = tpu.concatenate %423, %424 in 1 : vector<8x128xbf16>, vector<8x128xbf16> -> vector<8x256xbf16>
    %426 = arith.extf %425 : vector<8x256xbf16> to vector<8x256xf32>
    %427 = arith.addf %422, %426 : vector<8x256xf32>
    %428 = arith.negf %427 : vector<8x256xf32>
    %429 = math.exp %428 : vector<8x256xf32>
    %cst_130 = arith.constant 1.000000e+00 : f32
    %430 = vector.broadcast %cst_130 : f32 to vector<8x256xf32>
    %431 = arith.addf %430, %429 : vector<8x256xf32>
    %432 = arith.divf %430, %431 : vector<8x256xf32>
    %433 = math.tanh %427 : vector<8x256xf32>
    %434 = vector.extract_strided_slice %432 {offsets = [0, 32], sizes = [8, 32], strides = [1, 1]} : vector<8x256xf32> to vector<8x32xf32>
    %435 = vector.extract_strided_slice %409 {offsets = [0, 0], sizes = [8, 32], strides = [1, 1]} : vector<8x64xf32> to vector<8x32xf32>
    %436 = arith.mulf %434, %435 : vector<8x32xf32>
    %437 = vector.extract_strided_slice %432 {offsets = [0, 0], sizes = [8, 32], strides = [1, 1]} : vector<8x256xf32> to vector<8x32xf32>
    %438 = vector.extract_strided_slice %433 {offsets = [0, 64], sizes = [8, 32], strides = [1, 1]} : vector<8x256xf32> to vector<8x32xf32>
    %439 = arith.mulf %437, %438 : vector<8x32xf32>
    %440 = arith.addf %436, %439 : vector<8x32xf32>
    %441 = vector.extract_strided_slice %432 {offsets = [0, 160], sizes = [8, 32], strides = [1, 1]} : vector<8x256xf32> to vector<8x32xf32>
    %442 = vector.extract_strided_slice %409 {offsets = [0, 32], sizes = [8, 32], strides = [1, 1]} : vector<8x64xf32> to vector<8x32xf32>
    %443 = arith.mulf %441, %442 : vector<8x32xf32>
    %444 = vector.extract_strided_slice %432 {offsets = [0, 128], sizes = [8, 32], strides = [1, 1]} : vector<8x256xf32> to vector<8x32xf32>
    %445 = vector.extract_strided_slice %433 {offsets = [0, 192], sizes = [8, 32], strides = [1, 1]} : vector<8x256xf32> to vector<8x32xf32>
    %446 = arith.mulf %444, %445 : vector<8x32xf32>
    %447 = arith.addf %443, %446 : vector<8x32xf32>
    %448 = tpu.concatenate %440, %447 in 1 : vector<8x32xf32>, vector<8x32xf32> -> vector<8x64xf32>
    %449 = vector.extract_strided_slice %432 {offsets = [0, 96], sizes = [8, 32], strides = [1, 1]} : vector<8x256xf32> to vector<8x32xf32>
    %450 = vector.extract_strided_slice %432 {offsets = [0, 224], sizes = [8, 32], strides = [1, 1]} : vector<8x256xf32> to vector<8x32xf32>
    %451 = tpu.concatenate %449, %450 in 1 : vector<8x32xf32>, vector<8x32xf32> -> vector<8x64xf32>
    %452 = math.tanh %448 : vector<8x64xf32>
    %453 = arith.mulf %451, %452 : vector<8x64xf32>
    %454 = vector.extract_strided_slice %453 {offsets = [0, 0], sizes = [8, 32], strides = [1, 1]} : vector<8x64xf32> to vector<8x32xf32>
    %455 = arith.truncf %454 : vector<8x32xf32> to vector<8x32xbf16>
    %c16_131 = arith.constant 16 : index
    %c0_132 = arith.constant 0 : index
    %456 = vector.load %arg12[%c16_131, %c0_132] : memref<64x32xbf16, #tpu.memory_space<vmem>>, vector<8x32xbf16>
    tpu.vector_store %arg12[%c16_131, %c0_132], %455 {strides = array<i32>} : memref<64x32xbf16, #tpu.memory_space<vmem>>, vector<8x32xbf16>,
    %457 = vector.extract_strided_slice %453 {offsets = [0, 32], sizes = [8, 32], strides = [1, 1]} : vector<8x64xf32> to vector<8x32xf32>
    %458 = arith.truncf %457 : vector<8x32xf32> to vector<8x32xbf16>
    %c40_133 = arith.constant 40 : index
    %c0_134 = arith.constant 0 : index
    %459 = vector.load %arg13[%c40_133, %c0_134] : memref<64x32xbf16, #tpu.memory_space<vmem>>, vector<8x32xbf16>
    tpu.vector_store %arg13[%c40_133, %c0_134], %458 {strides = array<i32>} : memref<64x32xbf16, #tpu.memory_space<vmem>>, vector<8x32xbf16>,
    %460 = arith.truncf %453 : vector<8x64xf32> to vector<8x64xbf16>
    %cst_135 = arith.constant dense<0.000000e+00> : vector<8x256xf32>
    %461 = tpu.matmul %460, %341, %cst_135 {dimension_numbers = #tpu.dot_dimension_numbers<[1], [0], [0], [1], [0, 0, 1, 1], [], []>} : vector<8x64xbf16>, vector<64x256xbf16>, vector<8x256xf32> -> vector<8x256xf32>
    %c24_136 = arith.constant 24 : index
    %c0_137 = arith.constant 0 : index
    %462 = vector.load %arg11[%c24_136, %c0_137] : memref<64x256xbf16, #tpu.memory_space<vmem>>, vector<8x128xbf16>
    %c32_138 = arith.constant 32 : index
    %c128_139 = arith.constant 128 : index
    %463 = vector.load %arg11[%c32_138, %c128_139] : memref<64x256xbf16, #tpu.memory_space<vmem>>, vector<8x128xbf16>
    %464 = tpu.concatenate %462, %463 in 1 : vector<8x128xbf16>, vector<8x128xbf16> -> vector<8x256xbf16>
    %465 = arith.extf %464 : vector<8x256xbf16> to vector<8x256xf32>
    %466 = arith.addf %461, %465 : vector<8x256xf32>
    %467 = arith.negf %466 : vector<8x256xf32>
    %468 = math.exp %467 : vector<8x256xf32>
    %cst_140 = arith.constant 1.000000e+00 : f32
    %469 = vector.broadcast %cst_140 : f32 to vector<8x256xf32>
    %470 = arith.addf %469, %468 : vector<8x256xf32>
    %471 = arith.divf %469, %470 : vector<8x256xf32>
    %472 = math.tanh %466 : vector<8x256xf32>
    %473 = vector.extract_strided_slice %471 {offsets = [0, 32], sizes = [8, 32], strides = [1, 1]} : vector<8x256xf32> to vector<8x32xf32>
    %474 = vector.extract_strided_slice %448 {offsets = [0, 0], sizes = [8, 32], strides = [1, 1]} : vector<8x64xf32> to vector<8x32xf32>
    %475 = arith.mulf %473, %474 : vector<8x32xf32>
    %476 = vector.extract_strided_slice %471 {offsets = [0, 0], sizes = [8, 32], strides = [1, 1]} : vector<8x256xf32> to vector<8x32xf32>
    %477 = vector.extract_strided_slice %472 {offsets = [0, 64], sizes = [8, 32], strides = [1, 1]} : vector<8x256xf32> to vector<8x32xf32>
    %478 = arith.mulf %476, %477 : vector<8x32xf32>
    %479 = arith.addf %475, %478 : vector<8x32xf32>
    %480 = vector.extract_strided_slice %471 {offsets = [0, 160], sizes = [8, 32], strides = [1, 1]} : vector<8x256xf32> to vector<8x32xf32>
    %481 = vector.extract_strided_slice %448 {offsets = [0, 32], sizes = [8, 32], strides = [1, 1]} : vector<8x64xf32> to vector<8x32xf32>
    %482 = arith.mulf %480, %481 : vector<8x32xf32>
    %483 = vector.extract_strided_slice %471 {offsets = [0, 128], sizes = [8, 32], strides = [1, 1]} : vector<8x256xf32> to vector<8x32xf32>
    %484 = vector.extract_strided_slice %472 {offsets = [0, 192], sizes = [8, 32], strides = [1, 1]} : vector<8x256xf32> to vector<8x32xf32>
    %485 = arith.mulf %483, %484 : vector<8x32xf32>
    %486 = arith.addf %482, %485 : vector<8x32xf32>
    %487 = tpu.concatenate %479, %486 in 1 : vector<8x32xf32>, vector<8x32xf32> -> vector<8x64xf32>
    %488 = vector.extract_strided_slice %471 {offsets = [0, 96], sizes = [8, 32], strides = [1, 1]} : vector<8x256xf32> to vector<8x32xf32>
    %489 = vector.extract_strided_slice %471 {offsets = [0, 224], sizes = [8, 32], strides = [1, 1]} : vector<8x256xf32> to vector<8x32xf32>
    %490 = tpu.concatenate %488, %489 in 1 : vector<8x32xf32>, vector<8x32xf32> -> vector<8x64xf32>
    %491 = math.tanh %487 : vector<8x64xf32>
    %492 = arith.mulf %490, %491 : vector<8x64xf32>
    %493 = vector.extract_strided_slice %492 {offsets = [0, 0], sizes = [8, 32], strides = [1, 1]} : vector<8x64xf32> to vector<8x32xf32>
    %494 = arith.truncf %493 : vector<8x32xf32> to vector<8x32xbf16>
    %c24_141 = arith.constant 24 : index
    %c0_142 = arith.constant 0 : index
    %495 = vector.load %arg12[%c24_141, %c0_142] : memref<64x32xbf16, #tpu.memory_space<vmem>>, vector<8x32xbf16>
    tpu.vector_store %arg12[%c24_141, %c0_142], %494 {strides = array<i32>} : memref<64x32xbf16, #tpu.memory_space<vmem>>, vector<8x32xbf16>,
    %496 = vector.extract_strided_slice %492 {offsets = [0, 32], sizes = [8, 32], strides = [1, 1]} : vector<8x64xf32> to vector<8x32xf32>
    %497 = arith.truncf %496 : vector<8x32xf32> to vector<8x32xbf16>
    %c32_143 = arith.constant 32 : index
    %c0_144 = arith.constant 0 : index
    %498 = vector.load %arg13[%c32_143, %c0_144] : memref<64x32xbf16, #tpu.memory_space<vmem>>, vector<8x32xbf16>
    tpu.vector_store %arg13[%c32_143, %c0_144], %497 {strides = array<i32>} : memref<64x32xbf16, #tpu.memory_space<vmem>>, vector<8x32xbf16>,
    %499 = arith.truncf %492 : vector<8x64xf32> to vector<8x64xbf16>
    %cst_145 = arith.constant dense<0.000000e+00> : vector<8x256xf32>
    %500 = tpu.matmul %499, %341, %cst_145 {dimension_numbers = #tpu.dot_dimension_numbers<[1], [0], [0], [1], [0, 0, 1, 1], [], []>} : vector<8x64xbf16>, vector<64x256xbf16>, vector<8x256xf32> -> vector<8x256xf32>
    %c32_146 = arith.constant 32 : index
    %c0_147 = arith.constant 0 : index
    %501 = vector.load %arg11[%c32_146, %c0_147] : memref<64x256xbf16, #tpu.memory_space<vmem>>, vector<8x128xbf16>
    %c24_148 = arith.constant 24 : index
    %c128_149 = arith.constant 128 : index
    %502 = vector.load %arg11[%c24_148, %c128_149] : memref<64x256xbf16, #tpu.memory_space<vmem>>, vector<8x128xbf16>
    %503 = tpu.concatenate %501, %502 in 1 : vector<8x128xbf16>, vector<8x128xbf16> -> vector<8x256xbf16>
    %504 = arith.extf %503 : vector<8x256xbf16> to vector<8x256xf32>
    %505 = arith.addf %500, %504 : vector<8x256xf32>
    %506 = arith.negf %505 : vector<8x256xf32>
    %507 = math.exp %506 : vector<8x256xf32>
    %cst_150 = arith.constant 1.000000e+00 : f32
    %508 = vector.broadcast %cst_150 : f32 to vector<8x256xf32>
    %509 = arith.addf %508, %507 : vector<8x256xf32>
    %510 = arith.divf %508, %509 : vector<8x256xf32>
    %511 = math.tanh %505 : vector<8x256xf32>
    %512 = vector.extract_strided_slice %510 {offsets = [0, 32], sizes = [8, 32], strides = [1, 1]} : vector<8x256xf32> to vector<8x32xf32>
    %513 = vector.extract_strided_slice %487 {offsets = [0, 0], sizes = [8, 32], strides = [1, 1]} : vector<8x64xf32> to vector<8x32xf32>
    %514 = arith.mulf %512, %513 : vector<8x32xf32>
    %515 = vector.extract_strided_slice %510 {offsets = [0, 0], sizes = [8, 32], strides = [1, 1]} : vector<8x256xf32> to vector<8x32xf32>
    %516 = vector.extract_strided_slice %511 {offsets = [0, 64], sizes = [8, 32], strides = [1, 1]} : vector<8x256xf32> to vector<8x32xf32>
    %517 = arith.mulf %515, %516 : vector<8x32xf32>
    %518 = arith.addf %514, %517 : vector<8x32xf32>
    %519 = vector.extract_strided_slice %510 {offsets = [0, 160], sizes = [8, 32], strides = [1, 1]} : vector<8x256xf32> to vector<8x32xf32>
    %520 = vector.extract_strided_slice %487 {offsets = [0, 32], sizes = [8, 32], strides = [1, 1]} : vector<8x64xf32> to vector<8x32xf32>
    %521 = arith.mulf %519, %520 : vector<8x32xf32>
    %522 = vector.extract_strided_slice %510 {offsets = [0, 128], sizes = [8, 32], strides = [1, 1]} : vector<8x256xf32> to vector<8x32xf32>
    %523 = vector.extract_strided_slice %511 {offsets = [0, 192], sizes = [8, 32], strides = [1, 1]} : vector<8x256xf32> to vector<8x32xf32>
    %524 = arith.mulf %522, %523 : vector<8x32xf32>
    %525 = arith.addf %521, %524 : vector<8x32xf32>
    %526 = tpu.concatenate %518, %525 in 1 : vector<8x32xf32>, vector<8x32xf32> -> vector<8x64xf32>
    %527 = vector.extract_strided_slice %510 {offsets = [0, 96], sizes = [8, 32], strides = [1, 1]} : vector<8x256xf32> to vector<8x32xf32>
    %528 = vector.extract_strided_slice %510 {offsets = [0, 224], sizes = [8, 32], strides = [1, 1]} : vector<8x256xf32> to vector<8x32xf32>
    %529 = tpu.concatenate %527, %528 in 1 : vector<8x32xf32>, vector<8x32xf32> -> vector<8x64xf32>
    %530 = math.tanh %526 : vector<8x64xf32>
    %531 = arith.mulf %529, %530 : vector<8x64xf32>
    %532 = vector.extract_strided_slice %531 {offsets = [0, 0], sizes = [8, 32], strides = [1, 1]} : vector<8x64xf32> to vector<8x32xf32>
    %533 = arith.truncf %532 : vector<8x32xf32> to vector<8x32xbf16>
    %c32_151 = arith.constant 32 : index
    %c0_152 = arith.constant 0 : index
    %534 = vector.load %arg12[%c32_151, %c0_152] : memref<64x32xbf16, #tpu.memory_space<vmem>>, vector<8x32xbf16>
    tpu.vector_store %arg12[%c32_151, %c0_152], %533 {strides = array<i32>} : memref<64x32xbf16, #tpu.memory_space<vmem>>, vector<8x32xbf16>,
    %535 = vector.extract_strided_slice %531 {offsets = [0, 32], sizes = [8, 32], strides = [1, 1]} : vector<8x64xf32> to vector<8x32xf32>
    %536 = arith.truncf %535 : vector<8x32xf32> to vector<8x32xbf16>
    %c24_153 = arith.constant 24 : index
    %c0_154 = arith.constant 0 : index
    %537 = vector.load %arg13[%c24_153, %c0_154] : memref<64x32xbf16, #tpu.memory_space<vmem>>, vector<8x32xbf16>
    tpu.vector_store %arg13[%c24_153, %c0_154], %536 {strides = array<i32>} : memref<64x32xbf16, #tpu.memory_space<vmem>>, vector<8x32xbf16>,
    %538 = arith.truncf %531 : vector<8x64xf32> to vector<8x64xbf16>
    %cst_155 = arith.constant dense<0.000000e+00> : vector<8x256xf32>
    %539 = tpu.matmul %538, %341, %cst_155 {dimension_numbers = #tpu.dot_dimension_numbers<[1], [0], [0], [1], [0, 0, 1, 1], [], []>} : vector<8x64xbf16>, vector<64x256xbf16>, vector<8x256xf32> -> vector<8x256xf32>
    %c40_156 = arith.constant 40 : index
    %c0_157 = arith.constant 0 : index
    %540 = vector.load %arg11[%c40_156, %c0_157] : memref<64x256xbf16, #tpu.memory_space<vmem>>, vector<8x128xbf16>
    %c16_158 = arith.constant 16 : index
    %c128_159 = arith.constant 128 : index
    %541 = vector.load %arg11[%c16_158, %c128_159] : memref<64x256xbf16, #tpu.memory_space<vmem>>, vector<8x128xbf16>
    %542 = tpu.concatenate %540, %541 in 1 : vector<8x128xbf16>, vector<8x128xbf16> -> vector<8x256xbf16>
    %543 = arith.extf %542 : vector<8x256xbf16> to vector<8x256xf32>
    %544 = arith.addf %539, %543 : vector<8x256xf32>
    %545 = arith.negf %544 : vector<8x256xf32>
    %546 = math.exp %545 : vector<8x256xf32>
    %cst_160 = arith.constant 1.000000e+00 : f32
    %547 = vector.broadcast %cst_160 : f32 to vector<8x256xf32>
    %548 = arith.addf %547, %546 : vector<8x256xf32>
    %549 = arith.divf %547, %548 : vector<8x256xf32>
    %550 = math.tanh %544 : vector<8x256xf32>
    %551 = vector.extract_strided_slice %549 {offsets = [0, 32], sizes = [8, 32], strides = [1, 1]} : vector<8x256xf32> to vector<8x32xf32>
    %552 = vector.extract_strided_slice %526 {offsets = [0, 0], sizes = [8, 32], strides = [1, 1]} : vector<8x64xf32> to vector<8x32xf32>
    %553 = arith.mulf %551, %552 : vector<8x32xf32>
    %554 = vector.extract_strided_slice %549 {offsets = [0, 0], sizes = [8, 32], strides = [1, 1]} : vector<8x256xf32> to vector<8x32xf32>
    %555 = vector.extract_strided_slice %550 {offsets = [0, 64], sizes = [8, 32], strides = [1, 1]} : vector<8x256xf32> to vector<8x32xf32>
    %556 = arith.mulf %554, %555 : vector<8x32xf32>
    %557 = arith.addf %553, %556 : vector<8x32xf32>
    %558 = vector.extract_strided_slice %549 {offsets = [0, 160], sizes = [8, 32], strides = [1, 1]} : vector<8x256xf32> to vector<8x32xf32>
    %559 = vector.extract_strided_slice %526 {offsets = [0, 32], sizes = [8, 32], strides = [1, 1]} : vector<8x64xf32> to vector<8x32xf32>
    %560 = arith.mulf %558, %559 : vector<8x32xf32>
    %561 = vector.extract_strided_slice %549 {offsets = [0, 128], sizes = [8, 32], strides = [1, 1]} : vector<8x256xf32> to vector<8x32xf32>
    %562 = vector.extract_strided_slice %550 {offsets = [0, 192], sizes = [8, 32], strides = [1, 1]} : vector<8x256xf32> to vector<8x32xf32>
    %563 = arith.mulf %561, %562 : vector<8x32xf32>
    %564 = arith.addf %560, %563 : vector<8x32xf32>
    %565 = tpu.concatenate %557, %564 in 1 : vector<8x32xf32>, vector<8x32xf32> -> vector<8x64xf32>
    %566 = vector.extract_strided_slice %549 {offsets = [0, 96], sizes = [8, 32], strides = [1, 1]} : vector<8x256xf32> to vector<8x32xf32>
    %567 = vector.extract_strided_slice %549 {offsets = [0, 224], sizes = [8, 32], strides = [1, 1]} : vector<8x256xf32> to vector<8x32xf32>
    %568 = tpu.concatenate %566, %567 in 1 : vector<8x32xf32>, vector<8x32xf32> -> vector<8x64xf32>
    %569 = math.tanh %565 : vector<8x64xf32>
    %570 = arith.mulf %568, %569 : vector<8x64xf32>
    %571 = vector.extract_strided_slice %570 {offsets = [0, 0], sizes = [8, 32], strides = [1, 1]} : vector<8x64xf32> to vector<8x32xf32>
    %572 = arith.truncf %571 : vector<8x32xf32> to vector<8x32xbf16>
    %c40_161 = arith.constant 40 : index
    %c0_162 = arith.constant 0 : index
    %573 = vector.load %arg12[%c40_161, %c0_162] : memref<64x32xbf16, #tpu.memory_space<vmem>>, vector<8x32xbf16>
    tpu.vector_store %arg12[%c40_161, %c0_162], %572 {strides = array<i32>} : memref<64x32xbf16, #tpu.memory_space<vmem>>, vector<8x32xbf16>,
    %574 = vector.extract_strided_slice %570 {offsets = [0, 32], sizes = [8, 32], strides = [1, 1]} : vector<8x64xf32> to vector<8x32xf32>
    %575 = arith.truncf %574 : vector<8x32xf32> to vector<8x32xbf16>
    %c16_163 = arith.constant 16 : index
    %c0_164 = arith.constant 0 : index
    %576 = vector.load %arg13[%c16_163, %c0_164] : memref<64x32xbf16, #tpu.memory_space<vmem>>, vector<8x32xbf16>
    tpu.vector_store %arg13[%c16_163, %c0_164], %575 {strides = array<i32>} : memref<64x32xbf16, #tpu.memory_space<vmem>>, vector<8x32xbf16>,
    %577 = arith.truncf %570 : vector<8x64xf32> to vector<8x64xbf16>
    %cst_165 = arith.constant dense<0.000000e+00> : vector<8x256xf32>
    %578 = tpu.matmul %577, %341, %cst_165 {dimension_numbers = #tpu.dot_dimension_numbers<[1], [0], [0], [1], [0, 0, 1, 1], [], []>} : vector<8x64xbf16>, vector<64x256xbf16>, vector<8x256xf32> -> vector<8x256xf32>
    %c48_166 = arith.constant 48 : index
    %c0_167 = arith.constant 0 : index
    %579 = vector.load %arg11[%c48_166, %c0_167] : memref<64x256xbf16, #tpu.memory_space<vmem>>, vector<8x128xbf16>
    %c8_168 = arith.constant 8 : index
    %c128_169 = arith.constant 128 : index
    %580 = vector.load %arg11[%c8_168, %c128_169] : memref<64x256xbf16, #tpu.memory_space<vmem>>, vector<8x128xbf16>
    %581 = tpu.concatenate %579, %580 in 1 : vector<8x128xbf16>, vector<8x128xbf16> -> vector<8x256xbf16>
    %582 = arith.extf %581 : vector<8x256xbf16> to vector<8x256xf32>
    %583 = arith.addf %578, %582 : vector<8x256xf32>
    %584 = arith.negf %583 : vector<8x256xf32>
    %585 = math.exp %584 : vector<8x256xf32>
    %cst_170 = arith.constant 1.000000e+00 : f32
    %586 = vector.broadcast %cst_170 : f32 to vector<8x256xf32>
    %587 = arith.addf %586, %585 : vector<8x256xf32>
    %588 = arith.divf %586, %587 : vector<8x256xf32>
    %589 = math.tanh %583 : vector<8x256xf32>
    %590 = vector.extract_strided_slice %588 {offsets = [0, 32], sizes = [8, 32], strides = [1, 1]} : vector<8x256xf32> to vector<8x32xf32>
    %591 = vector.extract_strided_slice %565 {offsets = [0, 0], sizes = [8, 32], strides = [1, 1]} : vector<8x64xf32> to vector<8x32xf32>
    %592 = arith.mulf %590, %591 : vector<8x32xf32>
    %593 = vector.extract_strided_slice %588 {offsets = [0, 0], sizes = [8, 32], strides = [1, 1]} : vector<8x256xf32> to vector<8x32xf32>
    %594 = vector.extract_strided_slice %589 {offsets = [0, 64], sizes = [8, 32], strides = [1, 1]} : vector<8x256xf32> to vector<8x32xf32>
    %595 = arith.mulf %593, %594 : vector<8x32xf32>
    %596 = arith.addf %592, %595 : vector<8x32xf32>
    %597 = vector.extract_strided_slice %588 {offsets = [0, 160], sizes = [8, 32], strides = [1, 1]} : vector<8x256xf32> to vector<8x32xf32>
    %598 = vector.extract_strided_slice %565 {offsets = [0, 32], sizes = [8, 32], strides = [1, 1]} : vector<8x64xf32> to vector<8x32xf32>
    %599 = arith.mulf %597, %598 : vector<8x32xf32>
    %600 = vector.extract_strided_slice %588 {offsets = [0, 128], sizes = [8, 32], strides = [1, 1]} : vector<8x256xf32> to vector<8x32xf32>
    %601 = vector.extract_strided_slice %589 {offsets = [0, 192], sizes = [8, 32], strides = [1, 1]} : vector<8x256xf32> to vector<8x32xf32>
    %602 = arith.mulf %600, %601 : vector<8x32xf32>
    %603 = arith.addf %599, %602 : vector<8x32xf32>
    %604 = tpu.concatenate %596, %603 in 1 : vector<8x32xf32>, vector<8x32xf32> -> vector<8x64xf32>
    %605 = vector.extract_strided_slice %588 {offsets = [0, 96], sizes = [8, 32], strides = [1, 1]} : vector<8x256xf32> to vector<8x32xf32>
    %606 = vector.extract_strided_slice %588 {offsets = [0, 224], sizes = [8, 32], strides = [1, 1]} : vector<8x256xf32> to vector<8x32xf32>
    %607 = tpu.concatenate %605, %606 in 1 : vector<8x32xf32>, vector<8x32xf32> -> vector<8x64xf32>
    %608 = math.tanh %604 : vector<8x64xf32>
    %609 = arith.mulf %607, %608 : vector<8x64xf32>
    %610 = vector.extract_strided_slice %609 {offsets = [0, 0], sizes = [8, 32], strides = [1, 1]} : vector<8x64xf32> to vector<8x32xf32>
    %611 = arith.truncf %610 : vector<8x32xf32> to vector<8x32xbf16>
    %c48_171 = arith.constant 48 : index
    %c0_172 = arith.constant 0 : index
    %612 = vector.load %arg12[%c48_171, %c0_172] : memref<64x32xbf16, #tpu.memory_space<vmem>>, vector<8x32xbf16>
    tpu.vector_store %arg12[%c48_171, %c0_172], %611 {strides = array<i32>} : memref<64x32xbf16, #tpu.memory_space<vmem>>, vector<8x32xbf16>,
    %613 = vector.extract_strided_slice %609 {offsets = [0, 32], sizes = [8, 32], strides = [1, 1]} : vector<8x64xf32> to vector<8x32xf32>
    %614 = arith.truncf %613 : vector<8x32xf32> to vector<8x32xbf16>
    %c8_173 = arith.constant 8 : index
    %c0_174 = arith.constant 0 : index
    %615 = vector.load %arg13[%c8_173, %c0_174] : memref<64x32xbf16, #tpu.memory_space<vmem>>, vector<8x32xbf16>
    tpu.vector_store %arg13[%c8_173, %c0_174], %614 {strides = array<i32>} : memref<64x32xbf16, #tpu.memory_space<vmem>>, vector<8x32xbf16>,
    %616 = arith.truncf %609 : vector<8x64xf32> to vector<8x64xbf16>
    %cst_175 = arith.constant dense<0.000000e+00> : vector<8x256xf32>
    %617 = tpu.matmul %616, %341, %cst_175 {dimension_numbers = #tpu.dot_dimension_numbers<[1], [0], [0], [1], [0, 0, 1, 1], [], []>} : vector<8x64xbf16>, vector<64x256xbf16>, vector<8x256xf32> -> vector<8x256xf32>
    %c56_176 = arith.constant 56 : index
    %c0_177 = arith.constant 0 : index
    %618 = vector.load %arg11[%c56_176, %c0_177] : memref<64x256xbf16, #tpu.memory_space<vmem>>, vector<8x128xbf16>
    %c0_178 = arith.constant 0 : index
    %c128_179 = arith.constant 128 : index
    %619 = vector.load %arg11[%c0_178, %c128_179] : memref<64x256xbf16, #tpu.memory_space<vmem>>, vector<8x128xbf16>
    %620 = tpu.concatenate %618, %619 in 1 : vector<8x128xbf16>, vector<8x128xbf16> -> vector<8x256xbf16>
    %621 = arith.extf %620 : vector<8x256xbf16> to vector<8x256xf32>
    %622 = arith.addf %617, %621 : vector<8x256xf32>
    %623 = arith.negf %622 : vector<8x256xf32>
    %624 = math.exp %623 : vector<8x256xf32>
    %cst_180 = arith.constant 1.000000e+00 : f32
    %625 = vector.broadcast %cst_180 : f32 to vector<8x256xf32>
    %626 = arith.addf %625, %624 : vector<8x256xf32>
    %627 = arith.divf %625, %626 : vector<8x256xf32>
    %628 = math.tanh %622 : vector<8x256xf32>
    %629 = vector.extract_strided_slice %627 {offsets = [0, 32], sizes = [8, 32], strides = [1, 1]} : vector<8x256xf32> to vector<8x32xf32>
    %630 = vector.extract_strided_slice %604 {offsets = [0, 0], sizes = [8, 32], strides = [1, 1]} : vector<8x64xf32> to vector<8x32xf32>
    %631 = arith.mulf %629, %630 : vector<8x32xf32>
    %632 = vector.extract_strided_slice %627 {offsets = [0, 0], sizes = [8, 32], strides = [1, 1]} : vector<8x256xf32> to vector<8x32xf32>
    %633 = vector.extract_strided_slice %628 {offsets = [0, 64], sizes = [8, 32], strides = [1, 1]} : vector<8x256xf32> to vector<8x32xf32>
    %634 = arith.mulf %632, %633 : vector<8x32xf32>
    %635 = arith.addf %631, %634 : vector<8x32xf32>
    %636 = vector.extract_strided_slice %627 {offsets = [0, 160], sizes = [8, 32], strides = [1, 1]} : vector<8x256xf32> to vector<8x32xf32>
    %637 = vector.extract_strided_slice %604 {offsets = [0, 32], sizes = [8, 32], strides = [1, 1]} : vector<8x64xf32> to vector<8x32xf32>
    %638 = arith.mulf %636, %637 : vector<8x32xf32>
    %639 = vector.extract_strided_slice %627 {offsets = [0, 128], sizes = [8, 32], strides = [1, 1]} : vector<8x256xf32> to vector<8x32xf32>
    %640 = vector.extract_strided_slice %628 {offsets = [0, 192], sizes = [8, 32], strides = [1, 1]} : vector<8x256xf32> to vector<8x32xf32>
    %641 = arith.mulf %639, %640 : vector<8x32xf32>
    %642 = arith.addf %638, %641 : vector<8x32xf32>
    %643 = tpu.concatenate %635, %642 in 1 : vector<8x32xf32>, vector<8x32xf32> -> vector<8x64xf32>
    %644 = vector.extract_strided_slice %627 {offsets = [0, 96], sizes = [8, 32], strides = [1, 1]} : vector<8x256xf32> to vector<8x32xf32>
    %645 = vector.extract_strided_slice %627 {offsets = [0, 224], sizes = [8, 32], strides = [1, 1]} : vector<8x256xf32> to vector<8x32xf32>
    %646 = tpu.concatenate %644, %645 in 1 : vector<8x32xf32>, vector<8x32xf32> -> vector<8x64xf32>
    %647 = math.tanh %643 : vector<8x64xf32>
    %648 = arith.mulf %646, %647 : vector<8x64xf32>
    %649 = vector.extract_strided_slice %648 {offsets = [0, 0], sizes = [8, 32], strides = [1, 1]} : vector<8x64xf32> to vector<8x32xf32>
    %650 = arith.truncf %649 : vector<8x32xf32> to vector<8x32xbf16>
    %c56_181 = arith.constant 56 : index
    %c0_182 = arith.constant 0 : index
    %651 = vector.load %arg12[%c56_181, %c0_182] : memref<64x32xbf16, #tpu.memory_space<vmem>>, vector<8x32xbf16>
    tpu.vector_store %arg12[%c56_181, %c0_182], %650 {strides = array<i32>} : memref<64x32xbf16, #tpu.memory_space<vmem>>, vector<8x32xbf16>,
    %652 = vector.extract_strided_slice %648 {offsets = [0, 32], sizes = [8, 32], strides = [1, 1]} : vector<8x64xf32> to vector<8x32xf32>
    %653 = arith.truncf %652 : vector<8x32xf32> to vector<8x32xbf16>
    %c0_183 = arith.constant 0 : index
    %c0_184 = arith.constant 0 : index
    %654 = vector.load %arg13[%c0_183, %c0_184] : memref<64x32xbf16, #tpu.memory_space<vmem>>, vector<8x32xbf16>
    tpu.vector_store %arg13[%c0_183, %c0_184], %653 {strides = array<i32>} : memref<64x32xbf16, #tpu.memory_space<vmem>>, vector<8x32xbf16>,
    %c1_185 = arith.constant 1 : index
    %c0_186 = arith.constant 0 : index
    %c0_187 = arith.constant 0 : index
    %655 = vector.load %arg4[%c1_185, %c0_186, %c0_187] : memref<2x32x256xbf16, #tpu.memory_space<vmem>>, vector<1x32x256xbf16>
    %656 = vector.shape_cast %655 : vector<1x32x256xbf16> to vector<32x256xbf16>
    %c1_188 = arith.constant 1 : index
    %c0_189 = arith.constant 0 : index
    %c0_190 = arith.constant 0 : index
    %657 = vector.load %arg5[%c1_188, %c0_189, %c0_190] : memref<2x32x256xbf16, #tpu.memory_space<vmem>>, vector<1x32x256xbf16>
    %658 = vector.shape_cast %657 : vector<1x32x256xbf16> to vector<32x256xbf16>
    %c1_191 = arith.constant 1 : index
    %c0_192 = arith.constant 0 : index
    %c0_193 = arith.constant 0 : index
    %659 = vector.load %arg6[%c1_191, %c0_192, %c0_193] : memref<2x1x256xf32, #tpu.memory_space<vmem>>, vector<1x1x256xf32>
    %660 = vector.shape_cast %659 : vector<1x1x256xf32> to vector<1x256xf32>
    %c0_194 = arith.constant 0 : index
    %c0_195 = arith.constant 0 : index
    %661 = vector.load %arg12[%c0_194, %c0_195] : memref<64x32xbf16, #tpu.memory_space<vmem>>, vector<64x32xbf16>
    %cst_196 = arith.constant dense<0.000000e+00> : vector<64x256xf32>
    %662 = tpu.matmul %661, %656, %cst_196 {dimension_numbers = #tpu.dot_dimension_numbers<[1], [0], [0], [1], [0, 0, 1, 1], [], []>} : vector<64x32xbf16>, vector<32x256xbf16>, vector<64x256xf32> -> vector<64x256xf32>
    %c0_197 = arith.constant 0 : index
    %c0_198 = arith.constant 0 : index
    %663 = vector.load %arg13[%c0_197, %c0_198] : memref<64x32xbf16, #tpu.memory_space<vmem>>, vector<64x32xbf16>
    %cst_199 = arith.constant dense<0.000000e+00> : vector<64x256xf32>
    %664 = tpu.matmul %663, %658, %cst_199 {dimension_numbers = #tpu.dot_dimension_numbers<[1], [0], [0], [1], [0, 0, 1, 1], [], []>} : vector<64x32xbf16>, vector<32x256xbf16>, vector<64x256xf32> -> vector<64x256xf32>
    %665 = arith.addf %662, %664 : vector<64x256xf32>
    %666 = vector.broadcast %660 : vector<1x256xf32> to vector<64x256xf32>
    %667 = arith.addf %665, %666 : vector<64x256xf32>
    %668 = arith.truncf %667 : vector<64x256xf32> to vector<64x256xbf16>
    %c0_200 = arith.constant 0 : index
    %c0_201 = arith.constant 0 : index
    %669 = vector.load %arg11[%c0_200, %c0_201] : memref<64x256xbf16, #tpu.memory_space<vmem>>, vector<64x256xbf16>
    tpu.vector_store %arg11[%c0_200, %c0_201], %668 {strides = array<i32>} : memref<64x256xbf16, #tpu.memory_space<vmem>>, vector<64x256xbf16>,
    %c2 = arith.constant 2 : index
    %c0_202 = arith.constant 0 : index
    %c0_203 = arith.constant 0 : index
    %670 = vector.load %arg7[%c2, %c0_202, %c0_203] : memref<3x64x256xbf16, #tpu.memory_space<vmem>>, vector<1x64x256xbf16>
    %671 = vector.shape_cast %670 : vector<1x64x256xbf16> to vector<64x256xbf16>
    %cst_204 = arith.constant 0.000000e+00 : f32
    %672 = vector.broadcast %cst_204 : f32 to vector<8x64xf32>
    %673 = arith.truncf %672 : vector<8x64xf32> to vector<8x64xbf16>
    %cst_205 = arith.constant dense<0.000000e+00> : vector<8x256xf32>
    %674 = tpu.matmul %673, %671, %cst_205 {dimension_numbers = #tpu.dot_dimension_numbers<[1], [0], [0], [1], [0, 0, 1, 1], [], []>} : vector<8x64xbf16>, vector<64x256xbf16>, vector<8x256xf32> -> vector<8x256xf32>
    %c0_206 = arith.constant 0 : index
    %c0_207 = arith.constant 0 : index
    %675 = vector.load %arg11[%c0_206, %c0_207] : memref<64x256xbf16, #tpu.memory_space<vmem>>, vector<8x128xbf16>
    %c56_208 = arith.constant 56 : index
    %c128_209 = arith.constant 128 : index
    %676 = vector.load %arg11[%c56_208, %c128_209] : memref<64x256xbf16, #tpu.memory_space<vmem>>, vector<8x128xbf16>
    %677 = tpu.concatenate %675, %676 in 1 : vector<8x128xbf16>, vector<8x128xbf16> -> vector<8x256xbf16>
    %678 = arith.extf %677 : vector<8x256xbf16> to vector<8x256xf32>
    %679 = arith.addf %674, %678 : vector<8x256xf32>
    %680 = arith.negf %679 : vector<8x256xf32>
    %681 = math.exp %680 : vector<8x256xf32>
    %cst_210 = arith.constant 1.000000e+00 : f32
    %682 = vector.broadcast %cst_210 : f32 to vector<8x256xf32>
    %683 = arith.addf %682, %681 : vector<8x256xf32>
    %684 = arith.divf %682, %683 : vector<8x256xf32>
    %685 = math.tanh %679 : vector<8x256xf32>
    %686 = vector.extract_strided_slice %684 {offsets = [0, 32], sizes = [8, 32], strides = [1, 1]} : vector<8x256xf32> to vector<8x32xf32>
    %687 = vector.extract_strided_slice %672 {offsets = [0, 0], sizes = [8, 32], strides = [1, 1]} : vector<8x64xf32> to vector<8x32xf32>
    %688 = arith.mulf %686, %687 : vector<8x32xf32>
    %689 = vector.extract_strided_slice %684 {offsets = [0, 0], sizes = [8, 32], strides = [1, 1]} : vector<8x256xf32> to vector<8x32xf32>
    %690 = vector.extract_strided_slice %685 {offsets = [0, 64], sizes = [8, 32], strides = [1, 1]} : vector<8x256xf32> to vector<8x32xf32>
    %691 = arith.mulf %689, %690 : vector<8x32xf32>
    %692 = arith.addf %688, %691 : vector<8x32xf32>
    %693 = vector.extract_strided_slice %684 {offsets = [0, 160], sizes = [8, 32], strides = [1, 1]} : vector<8x256xf32> to vector<8x32xf32>
    %694 = vector.extract_strided_slice %672 {offsets = [0, 32], sizes = [8, 32], strides = [1, 1]} : vector<8x64xf32> to vector<8x32xf32>
    %695 = arith.mulf %693, %694 : vector<8x32xf32>
    %696 = vector.extract_strided_slice %684 {offsets = [0, 128], sizes = [8, 32], strides = [1, 1]} : vector<8x256xf32> to vector<8x32xf32>
    %697 = vector.extract_strided_slice %685 {offsets = [0, 192], sizes = [8, 32], strides = [1, 1]} : vector<8x256xf32> to vector<8x32xf32>
    %698 = arith.mulf %696, %697 : vector<8x32xf32>
    %699 = arith.addf %695, %698 : vector<8x32xf32>
    %700 = tpu.concatenate %692, %699 in 1 : vector<8x32xf32>, vector<8x32xf32> -> vector<8x64xf32>
    %701 = vector.extract_strided_slice %684 {offsets = [0, 96], sizes = [8, 32], strides = [1, 1]} : vector<8x256xf32> to vector<8x32xf32>
    %702 = vector.extract_strided_slice %684 {offsets = [0, 224], sizes = [8, 32], strides = [1, 1]} : vector<8x256xf32> to vector<8x32xf32>
    %703 = tpu.concatenate %701, %702 in 1 : vector<8x32xf32>, vector<8x32xf32> -> vector<8x64xf32>
    %704 = math.tanh %700 : vector<8x64xf32>
    %705 = arith.mulf %703, %704 : vector<8x64xf32>
    %c32_i32 = arith.constant 32 : i32
    %706 = vector.broadcast %c32_i32 : i32 to vector<8x64xi32>
    %707 = arith.cmpi slt, %1, %706 : vector<8x64xi32>
    %c0_i32 = arith.constant 0 : i32
    %c7_i32 = arith.constant 7 : i32
    %708 = vector.broadcast %c0_i32 : i32 to vector<8x64xi32>
    %709 = vector.broadcast %c7_i32 : i32 to vector<8x64xi32>
    %710 = arith.select %707, %708, %709 : vector<8x64xi1>, vector<8x64xi32>
    %711 = vector.broadcast %0 : vector<8x1xi32> to vector<8x64xi32>
    %712 = arith.cmpi eq, %711, %710 : vector<8x64xi32>
    %713 = arith.select %712, %705, %672 : vector<8x64xi1>, vector<8x64xf32>
    %714 = arith.truncf %705 : vector<8x64xf32> to vector<8x64xbf16>
    %cst_211 = arith.constant dense<0.000000e+00> : vector<8x256xf32>
    %715 = tpu.matmul %714, %671, %cst_211 {dimension_numbers = #tpu.dot_dimension_numbers<[1], [0], [0], [1], [0, 0, 1, 1], [], []>} : vector<8x64xbf16>, vector<64x256xbf16>, vector<8x256xf32> -> vector<8x256xf32>
    %c8_212 = arith.constant 8 : index
    %c0_213 = arith.constant 0 : index
    %716 = vector.load %arg11[%c8_212, %c0_213] : memref<64x256xbf16, #tpu.memory_space<vmem>>, vector<8x128xbf16>
    %c48_214 = arith.constant 48 : index
    %c128_215 = arith.constant 128 : index
    %717 = vector.load %arg11[%c48_214, %c128_215] : memref<64x256xbf16, #tpu.memory_space<vmem>>, vector<8x128xbf16>
    %718 = tpu.concatenate %716, %717 in 1 : vector<8x128xbf16>, vector<8x128xbf16> -> vector<8x256xbf16>
    %719 = arith.extf %718 : vector<8x256xbf16> to vector<8x256xf32>
    %720 = arith.addf %715, %719 : vector<8x256xf32>
    %721 = arith.negf %720 : vector<8x256xf32>
    %722 = math.exp %721 : vector<8x256xf32>
    %cst_216 = arith.constant 1.000000e+00 : f32
    %723 = vector.broadcast %cst_216 : f32 to vector<8x256xf32>
    %724 = arith.addf %723, %722 : vector<8x256xf32>
    %725 = arith.divf %723, %724 : vector<8x256xf32>
    %726 = math.tanh %720 : vector<8x256xf32>
    %727 = vector.extract_strided_slice %725 {offsets = [0, 32], sizes = [8, 32], strides = [1, 1]} : vector<8x256xf32> to vector<8x32xf32>
    %728 = vector.extract_strided_slice %700 {offsets = [0, 0], sizes = [8, 32], strides = [1, 1]} : vector<8x64xf32> to vector<8x32xf32>
    %729 = arith.mulf %727, %728 : vector<8x32xf32>
    %730 = vector.extract_strided_slice %725 {offsets = [0, 0], sizes = [8, 32], strides = [1, 1]} : vector<8x256xf32> to vector<8x32xf32>
    %731 = vector.extract_strided_slice %726 {offsets = [0, 64], sizes = [8, 32], strides = [1, 1]} : vector<8x256xf32> to vector<8x32xf32>
    %732 = arith.mulf %730, %731 : vector<8x32xf32>
    %733 = arith.addf %729, %732 : vector<8x32xf32>
    %734 = vector.extract_strided_slice %725 {offsets = [0, 160], sizes = [8, 32], strides = [1, 1]} : vector<8x256xf32> to vector<8x32xf32>
    %735 = vector.extract_strided_slice %700 {offsets = [0, 32], sizes = [8, 32], strides = [1, 1]} : vector<8x64xf32> to vector<8x32xf32>
    %736 = arith.mulf %734, %735 : vector<8x32xf32>
    %737 = vector.extract_strided_slice %725 {offsets = [0, 128], sizes = [8, 32], strides = [1, 1]} : vector<8x256xf32> to vector<8x32xf32>
    %738 = vector.extract_strided_slice %726 {offsets = [0, 192], sizes = [8, 32], strides = [1, 1]} : vector<8x256xf32> to vector<8x32xf32>
    %739 = arith.mulf %737, %738 : vector<8x32xf32>
    %740 = arith.addf %736, %739 : vector<8x32xf32>
    %741 = tpu.concatenate %733, %740 in 1 : vector<8x32xf32>, vector<8x32xf32> -> vector<8x64xf32>
    %742 = vector.extract_strided_slice %725 {offsets = [0, 96], sizes = [8, 32], strides = [1, 1]} : vector<8x256xf32> to vector<8x32xf32>
    %743 = vector.extract_strided_slice %725 {offsets = [0, 224], sizes = [8, 32], strides = [1, 1]} : vector<8x256xf32> to vector<8x32xf32>
    %744 = tpu.concatenate %742, %743 in 1 : vector<8x32xf32>, vector<8x32xf32> -> vector<8x64xf32>
    %745 = math.tanh %741 : vector<8x64xf32>
    %746 = arith.mulf %744, %745 : vector<8x64xf32>
    %c32_i32_217 = arith.constant 32 : i32
    %747 = vector.broadcast %c32_i32_217 : i32 to vector<8x64xi32>
    %748 = arith.cmpi slt, %1, %747 : vector<8x64xi32>
    %c1_i32 = arith.constant 1 : i32
    %c6_i32 = arith.constant 6 : i32
    %749 = vector.broadcast %c1_i32 : i32 to vector<8x64xi32>
    %750 = vector.broadcast %c6_i32 : i32 to vector<8x64xi32>
    %751 = arith.select %748, %749, %750 : vector<8x64xi1>, vector<8x64xi32>
    %752 = vector.broadcast %0 : vector<8x1xi32> to vector<8x64xi32>
    %753 = arith.cmpi eq, %752, %751 : vector<8x64xi32>
    %754 = arith.select %753, %746, %713 : vector<8x64xi1>, vector<8x64xf32>
    %755 = arith.truncf %746 : vector<8x64xf32> to vector<8x64xbf16>
    %cst_218 = arith.constant dense<0.000000e+00> : vector<8x256xf32>
    %756 = tpu.matmul %755, %671, %cst_218 {dimension_numbers = #tpu.dot_dimension_numbers<[1], [0], [0], [1], [0, 0, 1, 1], [], []>} : vector<8x64xbf16>, vector<64x256xbf16>, vector<8x256xf32> -> vector<8x256xf32>
    %c16_219 = arith.constant 16 : index
    %c0_220 = arith.constant 0 : index
    %757 = vector.load %arg11[%c16_219, %c0_220] : memref<64x256xbf16, #tpu.memory_space<vmem>>, vector<8x128xbf16>
    %c40_221 = arith.constant 40 : index
    %c128_222 = arith.constant 128 : index
    %758 = vector.load %arg11[%c40_221, %c128_222] : memref<64x256xbf16, #tpu.memory_space<vmem>>, vector<8x128xbf16>
    %759 = tpu.concatenate %757, %758 in 1 : vector<8x128xbf16>, vector<8x128xbf16> -> vector<8x256xbf16>
    %760 = arith.extf %759 : vector<8x256xbf16> to vector<8x256xf32>
    %761 = arith.addf %756, %760 : vector<8x256xf32>
    %762 = arith.negf %761 : vector<8x256xf32>
    %763 = math.exp %762 : vector<8x256xf32>
    %cst_223 = arith.constant 1.000000e+00 : f32
    %764 = vector.broadcast %cst_223 : f32 to vector<8x256xf32>
    %765 = arith.addf %764, %763 : vector<8x256xf32>
    %766 = arith.divf %764, %765 : vector<8x256xf32>
    %767 = math.tanh %761 : vector<8x256xf32>
    %768 = vector.extract_strided_slice %766 {offsets = [0, 32], sizes = [8, 32], strides = [1, 1]} : vector<8x256xf32> to vector<8x32xf32>
    %769 = vector.extract_strided_slice %741 {offsets = [0, 0], sizes = [8, 32], strides = [1, 1]} : vector<8x64xf32> to vector<8x32xf32>
    %770 = arith.mulf %768, %769 : vector<8x32xf32>
    %771 = vector.extract_strided_slice %766 {offsets = [0, 0], sizes = [8, 32], strides = [1, 1]} : vector<8x256xf32> to vector<8x32xf32>
    %772 = vector.extract_strided_slice %767 {offsets = [0, 64], sizes = [8, 32], strides = [1, 1]} : vector<8x256xf32> to vector<8x32xf32>
    %773 = arith.mulf %771, %772 : vector<8x32xf32>
    %774 = arith.addf %770, %773 : vector<8x32xf32>
    %775 = vector.extract_strided_slice %766 {offsets = [0, 160], sizes = [8, 32], strides = [1, 1]} : vector<8x256xf32> to vector<8x32xf32>
    %776 = vector.extract_strided_slice %741 {offsets = [0, 32], sizes = [8, 32], strides = [1, 1]} : vector<8x64xf32> to vector<8x32xf32>
    %777 = arith.mulf %775, %776 : vector<8x32xf32>
    %778 = vector.extract_strided_slice %766 {offsets = [0, 128], sizes = [8, 32], strides = [1, 1]} : vector<8x256xf32> to vector<8x32xf32>
    %779 = vector.extract_strided_slice %767 {offsets = [0, 192], sizes = [8, 32], strides = [1, 1]} : vector<8x256xf32> to vector<8x32xf32>
    %780 = arith.mulf %778, %779 : vector<8x32xf32>
    %781 = arith.addf %777, %780 : vector<8x32xf32>
    %782 = tpu.concatenate %774, %781 in 1 : vector<8x32xf32>, vector<8x32xf32> -> vector<8x64xf32>
    %783 = vector.extract_strided_slice %766 {offsets = [0, 96], sizes = [8, 32], strides = [1, 1]} : vector<8x256xf32> to vector<8x32xf32>
    %784 = vector.extract_strided_slice %766 {offsets = [0, 224], sizes = [8, 32], strides = [1, 1]} : vector<8x256xf32> to vector<8x32xf32>
    %785 = tpu.concatenate %783, %784 in 1 : vector<8x32xf32>, vector<8x32xf32> -> vector<8x64xf32>
    %786 = math.tanh %782 : vector<8x64xf32>
    %787 = arith.mulf %785, %786 : vector<8x64xf32>
    %c32_i32_224 = arith.constant 32 : i32
    %788 = vector.broadcast %c32_i32_224 : i32 to vector<8x64xi32>
    %789 = arith.cmpi slt, %1, %788 : vector<8x64xi32>
    %c2_i32 = arith.constant 2 : i32
    %c5_i32 = arith.constant 5 : i32
    %790 = vector.broadcast %c2_i32 : i32 to vector<8x64xi32>
    %791 = vector.broadcast %c5_i32 : i32 to vector<8x64xi32>
    %792 = arith.select %789, %790, %791 : vector<8x64xi1>, vector<8x64xi32>
    %793 = vector.broadcast %0 : vector<8x1xi32> to vector<8x64xi32>
    %794 = arith.cmpi eq, %793, %792 : vector<8x64xi32>
    %795 = arith.select %794, %787, %754 : vector<8x64xi1>, vector<8x64xf32>
    %796 = arith.truncf %787 : vector<8x64xf32> to vector<8x64xbf16>
    %cst_225 = arith.constant dense<0.000000e+00> : vector<8x256xf32>
    %797 = tpu.matmul %796, %671, %cst_225 {dimension_numbers = #tpu.dot_dimension_numbers<[1], [0], [0], [1], [0, 0, 1, 1], [], []>} : vector<8x64xbf16>, vector<64x256xbf16>, vector<8x256xf32> -> vector<8x256xf32>
    %c24_226 = arith.constant 24 : index
    %c0_227 = arith.constant 0 : index
    %798 = vector.load %arg11[%c24_226, %c0_227] : memref<64x256xbf16, #tpu.memory_space<vmem>>, vector<8x128xbf16>
    %c32_228 = arith.constant 32 : index
    %c128_229 = arith.constant 128 : index
    %799 = vector.load %arg11[%c32_228, %c128_229] : memref<64x256xbf16, #tpu.memory_space<vmem>>, vector<8x128xbf16>
    %800 = tpu.concatenate %798, %799 in 1 : vector<8x128xbf16>, vector<8x128xbf16> -> vector<8x256xbf16>
    %801 = arith.extf %800 : vector<8x256xbf16> to vector<8x256xf32>
    %802 = arith.addf %797, %801 : vector<8x256xf32>
    %803 = arith.negf %802 : vector<8x256xf32>
    %804 = math.exp %803 : vector<8x256xf32>
    %cst_230 = arith.constant 1.000000e+00 : f32
    %805 = vector.broadcast %cst_230 : f32 to vector<8x256xf32>
    %806 = arith.addf %805, %804 : vector<8x256xf32>
    %807 = arith.divf %805, %806 : vector<8x256xf32>
    %808 = math.tanh %802 : vector<8x256xf32>
    %809 = vector.extract_strided_slice %807 {offsets = [0, 32], sizes = [8, 32], strides = [1, 1]} : vector<8x256xf32> to vector<8x32xf32>
    %810 = vector.extract_strided_slice %782 {offsets = [0, 0], sizes = [8, 32], strides = [1, 1]} : vector<8x64xf32> to vector<8x32xf32>
    %811 = arith.mulf %809, %810 : vector<8x32xf32>
    %812 = vector.extract_strided_slice %807 {offsets = [0, 0], sizes = [8, 32], strides = [1, 1]} : vector<8x256xf32> to vector<8x32xf32>
    %813 = vector.extract_strided_slice %808 {offsets = [0, 64], sizes = [8, 32], strides = [1, 1]} : vector<8x256xf32> to vector<8x32xf32>
    %814 = arith.mulf %812, %813 : vector<8x32xf32>
    %815 = arith.addf %811, %814 : vector<8x32xf32>
    %816 = vector.extract_strided_slice %807 {offsets = [0, 160], sizes = [8, 32], strides = [1, 1]} : vector<8x256xf32> to vector<8x32xf32>
    %817 = vector.extract_strided_slice %782 {offsets = [0, 32], sizes = [8, 32], strides = [1, 1]} : vector<8x64xf32> to vector<8x32xf32>
    %818 = arith.mulf %816, %817 : vector<8x32xf32>
    %819 = vector.extract_strided_slice %807 {offsets = [0, 128], sizes = [8, 32], strides = [1, 1]} : vector<8x256xf32> to vector<8x32xf32>
    %820 = vector.extract_strided_slice %808 {offsets = [0, 192], sizes = [8, 32], strides = [1, 1]} : vector<8x256xf32> to vector<8x32xf32>
    %821 = arith.mulf %819, %820 : vector<8x32xf32>
    %822 = arith.addf %818, %821 : vector<8x32xf32>
    %823 = tpu.concatenate %815, %822 in 1 : vector<8x32xf32>, vector<8x32xf32> -> vector<8x64xf32>
    %824 = vector.extract_strided_slice %807 {offsets = [0, 96], sizes = [8, 32], strides = [1, 1]} : vector<8x256xf32> to vector<8x32xf32>
    %825 = vector.extract_strided_slice %807 {offsets = [0, 224], sizes = [8, 32], strides = [1, 1]} : vector<8x256xf32> to vector<8x32xf32>
    %826 = tpu.concatenate %824, %825 in 1 : vector<8x32xf32>, vector<8x32xf32> -> vector<8x64xf32>
    %827 = math.tanh %823 : vector<8x64xf32>
    %828 = arith.mulf %826, %827 : vector<8x64xf32>
    %c32_i32_231 = arith.constant 32 : i32
    %829 = vector.broadcast %c32_i32_231 : i32 to vector<8x64xi32>
    %830 = arith.cmpi slt, %1, %829 : vector<8x64xi32>
    %c3_i32 = arith.constant 3 : i32
    %c4_i32 = arith.constant 4 : i32
    %831 = vector.broadcast %c3_i32 : i32 to vector<8x64xi32>
    %832 = vector.broadcast %c4_i32 : i32 to vector<8x64xi32>
    %833 = arith.select %830, %831, %832 : vector<8x64xi1>, vector<8x64xi32>
    %834 = vector.broadcast %0 : vector<8x1xi32> to vector<8x64xi32>
    %835 = arith.cmpi eq, %834, %833 : vector<8x64xi32>
    %836 = arith.select %835, %828, %795 : vector<8x64xi1>, vector<8x64xf32>
    %837 = arith.truncf %828 : vector<8x64xf32> to vector<8x64xbf16>
    %cst_232 = arith.constant dense<0.000000e+00> : vector<8x256xf32>
    %838 = tpu.matmul %837, %671, %cst_232 {dimension_numbers = #tpu.dot_dimension_numbers<[1], [0], [0], [1], [0, 0, 1, 1], [], []>} : vector<8x64xbf16>, vector<64x256xbf16>, vector<8x256xf32> -> vector<8x256xf32>
    %c32_233 = arith.constant 32 : index
    %c0_234 = arith.constant 0 : index
    %839 = vector.load %arg11[%c32_233, %c0_234] : memref<64x256xbf16, #tpu.memory_space<vmem>>, vector<8x128xbf16>
    %c24_235 = arith.constant 24 : index
    %c128_236 = arith.constant 128 : index
    %840 = vector.load %arg11[%c24_235, %c128_236] : memref<64x256xbf16, #tpu.memory_space<vmem>>, vector<8x128xbf16>
    %841 = tpu.concatenate %839, %840 in 1 : vector<8x128xbf16>, vector<8x128xbf16> -> vector<8x256xbf16>
    %842 = arith.extf %841 : vector<8x256xbf16> to vector<8x256xf32>
    %843 = arith.addf %838, %842 : vector<8x256xf32>
    %844 = arith.negf %843 : vector<8x256xf32>
    %845 = math.exp %844 : vector<8x256xf32>
    %cst_237 = arith.constant 1.000000e+00 : f32
    %846 = vector.broadcast %cst_237 : f32 to vector<8x256xf32>
    %847 = arith.addf %846, %845 : vector<8x256xf32>
    %848 = arith.divf %846, %847 : vector<8x256xf32>
    %849 = math.tanh %843 : vector<8x256xf32>
    %850 = vector.extract_strided_slice %848 {offsets = [0, 32], sizes = [8, 32], strides = [1, 1]} : vector<8x256xf32> to vector<8x32xf32>
    %851 = vector.extract_strided_slice %823 {offsets = [0, 0], sizes = [8, 32], strides = [1, 1]} : vector<8x64xf32> to vector<8x32xf32>
    %852 = arith.mulf %850, %851 : vector<8x32xf32>
    %853 = vector.extract_strided_slice %848 {offsets = [0, 0], sizes = [8, 32], strides = [1, 1]} : vector<8x256xf32> to vector<8x32xf32>
    %854 = vector.extract_strided_slice %849 {offsets = [0, 64], sizes = [8, 32], strides = [1, 1]} : vector<8x256xf32> to vector<8x32xf32>
    %855 = arith.mulf %853, %854 : vector<8x32xf32>
    %856 = arith.addf %852, %855 : vector<8x32xf32>
    %857 = vector.extract_strided_slice %848 {offsets = [0, 160], sizes = [8, 32], strides = [1, 1]} : vector<8x256xf32> to vector<8x32xf32>
    %858 = vector.extract_strided_slice %823 {offsets = [0, 32], sizes = [8, 32], strides = [1, 1]} : vector<8x64xf32> to vector<8x32xf32>
    %859 = arith.mulf %857, %858 : vector<8x32xf32>
    %860 = vector.extract_strided_slice %848 {offsets = [0, 128], sizes = [8, 32], strides = [1, 1]} : vector<8x256xf32> to vector<8x32xf32>
    %861 = vector.extract_strided_slice %849 {offsets = [0, 192], sizes = [8, 32], strides = [1, 1]} : vector<8x256xf32> to vector<8x32xf32>
    %862 = arith.mulf %860, %861 : vector<8x32xf32>
    %863 = arith.addf %859, %862 : vector<8x32xf32>
    %864 = tpu.concatenate %856, %863 in 1 : vector<8x32xf32>, vector<8x32xf32> -> vector<8x64xf32>
    %865 = vector.extract_strided_slice %848 {offsets = [0, 96], sizes = [8, 32], strides = [1, 1]} : vector<8x256xf32> to vector<8x32xf32>
    %866 = vector.extract_strided_slice %848 {offsets = [0, 224], sizes = [8, 32], strides = [1, 1]} : vector<8x256xf32> to vector<8x32xf32>
    %867 = tpu.concatenate %865, %866 in 1 : vector<8x32xf32>, vector<8x32xf32> -> vector<8x64xf32>
    %868 = math.tanh %864 : vector<8x64xf32>
    %869 = arith.mulf %867, %868 : vector<8x64xf32>
    %c32_i32_238 = arith.constant 32 : i32
    %870 = vector.broadcast %c32_i32_238 : i32 to vector<8x64xi32>
    %871 = arith.cmpi slt, %1, %870 : vector<8x64xi32>
    %c4_i32_239 = arith.constant 4 : i32
    %c3_i32_240 = arith.constant 3 : i32
    %872 = vector.broadcast %c4_i32_239 : i32 to vector<8x64xi32>
    %873 = vector.broadcast %c3_i32_240 : i32 to vector<8x64xi32>
    %874 = arith.select %871, %872, %873 : vector<8x64xi1>, vector<8x64xi32>
    %875 = vector.broadcast %0 : vector<8x1xi32> to vector<8x64xi32>
    %876 = arith.cmpi eq, %875, %874 : vector<8x64xi32>
    %877 = arith.select %876, %869, %836 : vector<8x64xi1>, vector<8x64xf32>
    %878 = arith.truncf %869 : vector<8x64xf32> to vector<8x64xbf16>
    %cst_241 = arith.constant dense<0.000000e+00> : vector<8x256xf32>
    %879 = tpu.matmul %878, %671, %cst_241 {dimension_numbers = #tpu.dot_dimension_numbers<[1], [0], [0], [1], [0, 0, 1, 1], [], []>} : vector<8x64xbf16>, vector<64x256xbf16>, vector<8x256xf32> -> vector<8x256xf32>
    %c40_242 = arith.constant 40 : index
    %c0_243 = arith.constant 0 : index
    %880 = vector.load %arg11[%c40_242, %c0_243] : memref<64x256xbf16, #tpu.memory_space<vmem>>, vector<8x128xbf16>
    %c16_244 = arith.constant 16 : index
    %c128_245 = arith.constant 128 : index
    %881 = vector.load %arg11[%c16_244, %c128_245] : memref<64x256xbf16, #tpu.memory_space<vmem>>, vector<8x128xbf16>
    %882 = tpu.concatenate %880, %881 in 1 : vector<8x128xbf16>, vector<8x128xbf16> -> vector<8x256xbf16>
    %883 = arith.extf %882 : vector<8x256xbf16> to vector<8x256xf32>
    %884 = arith.addf %879, %883 : vector<8x256xf32>
    %885 = arith.negf %884 : vector<8x256xf32>
    %886 = math.exp %885 : vector<8x256xf32>
    %cst_246 = arith.constant 1.000000e+00 : f32
    %887 = vector.broadcast %cst_246 : f32 to vector<8x256xf32>
    %888 = arith.addf %887, %886 : vector<8x256xf32>
    %889 = arith.divf %887, %888 : vector<8x256xf32>
    %890 = math.tanh %884 : vector<8x256xf32>
    %891 = vector.extract_strided_slice %889 {offsets = [0, 32], sizes = [8, 32], strides = [1, 1]} : vector<8x256xf32> to vector<8x32xf32>
    %892 = vector.extract_strided_slice %864 {offsets = [0, 0], sizes = [8, 32], strides = [1, 1]} : vector<8x64xf32> to vector<8x32xf32>
    %893 = arith.mulf %891, %892 : vector<8x32xf32>
    %894 = vector.extract_strided_slice %889 {offsets = [0, 0], sizes = [8, 32], strides = [1, 1]} : vector<8x256xf32> to vector<8x32xf32>
    %895 = vector.extract_strided_slice %890 {offsets = [0, 64], sizes = [8, 32], strides = [1, 1]} : vector<8x256xf32> to vector<8x32xf32>
    %896 = arith.mulf %894, %895 : vector<8x32xf32>
    %897 = arith.addf %893, %896 : vector<8x32xf32>
    %898 = vector.extract_strided_slice %889 {offsets = [0, 160], sizes = [8, 32], strides = [1, 1]} : vector<8x256xf32> to vector<8x32xf32>
    %899 = vector.extract_strided_slice %864 {offsets = [0, 32], sizes = [8, 32], strides = [1, 1]} : vector<8x64xf32> to vector<8x32xf32>
    %900 = arith.mulf %898, %899 : vector<8x32xf32>
    %901 = vector.extract_strided_slice %889 {offsets = [0, 128], sizes = [8, 32], strides = [1, 1]} : vector<8x256xf32> to vector<8x32xf32>
    %902 = vector.extract_strided_slice %890 {offsets = [0, 192], sizes = [8, 32], strides = [1, 1]} : vector<8x256xf32> to vector<8x32xf32>
    %903 = arith.mulf %901, %902 : vector<8x32xf32>
    %904 = arith.addf %900, %903 : vector<8x32xf32>
    %905 = tpu.concatenate %897, %904 in 1 : vector<8x32xf32>, vector<8x32xf32> -> vector<8x64xf32>
    %906 = vector.extract_strided_slice %889 {offsets = [0, 96], sizes = [8, 32], strides = [1, 1]} : vector<8x256xf32> to vector<8x32xf32>
    %907 = vector.extract_strided_slice %889 {offsets = [0, 224], sizes = [8, 32], strides = [1, 1]} : vector<8x256xf32> to vector<8x32xf32>
    %908 = tpu.concatenate %906, %907 in 1 : vector<8x32xf32>, vector<8x32xf32> -> vector<8x64xf32>
    %909 = math.tanh %905 : vector<8x64xf32>
    %910 = arith.mulf %908, %909 : vector<8x64xf32>
    %c32_i32_247 = arith.constant 32 : i32
    %911 = vector.broadcast %c32_i32_247 : i32 to vector<8x64xi32>
    %912 = arith.cmpi slt, %1, %911 : vector<8x64xi32>
    %c5_i32_248 = arith.constant 5 : i32
    %c2_i32_249 = arith.constant 2 : i32
    %913 = vector.broadcast %c5_i32_248 : i32 to vector<8x64xi32>
    %914 = vector.broadcast %c2_i32_249 : i32 to vector<8x64xi32>
    %915 = arith.select %912, %913, %914 : vector<8x64xi1>, vector<8x64xi32>
    %916 = vector.broadcast %0 : vector<8x1xi32> to vector<8x64xi32>
    %917 = arith.cmpi eq, %916, %915 : vector<8x64xi32>
    %918 = arith.select %917, %910, %877 : vector<8x64xi1>, vector<8x64xf32>
    %919 = arith.truncf %910 : vector<8x64xf32> to vector<8x64xbf16>
    %cst_250 = arith.constant dense<0.000000e+00> : vector<8x256xf32>
    %920 = tpu.matmul %919, %671, %cst_250 {dimension_numbers = #tpu.dot_dimension_numbers<[1], [0], [0], [1], [0, 0, 1, 1], [], []>} : vector<8x64xbf16>, vector<64x256xbf16>, vector<8x256xf32> -> vector<8x256xf32>
    %c48_251 = arith.constant 48 : index
    %c0_252 = arith.constant 0 : index
    %921 = vector.load %arg11[%c48_251, %c0_252] : memref<64x256xbf16, #tpu.memory_space<vmem>>, vector<8x128xbf16>
    %c8_253 = arith.constant 8 : index
    %c128_254 = arith.constant 128 : index
    %922 = vector.load %arg11[%c8_253, %c128_254] : memref<64x256xbf16, #tpu.memory_space<vmem>>, vector<8x128xbf16>
    %923 = tpu.concatenate %921, %922 in 1 : vector<8x128xbf16>, vector<8x128xbf16> -> vector<8x256xbf16>
    %924 = arith.extf %923 : vector<8x256xbf16> to vector<8x256xf32>
    %925 = arith.addf %920, %924 : vector<8x256xf32>
    %926 = arith.negf %925 : vector<8x256xf32>
    %927 = math.exp %926 : vector<8x256xf32>
    %cst_255 = arith.constant 1.000000e+00 : f32
    %928 = vector.broadcast %cst_255 : f32 to vector<8x256xf32>
    %929 = arith.addf %928, %927 : vector<8x256xf32>
    %930 = arith.divf %928, %929 : vector<8x256xf32>
    %931 = math.tanh %925 : vector<8x256xf32>
    %932 = vector.extract_strided_slice %930 {offsets = [0, 32], sizes = [8, 32], strides = [1, 1]} : vector<8x256xf32> to vector<8x32xf32>
    %933 = vector.extract_strided_slice %905 {offsets = [0, 0], sizes = [8, 32], strides = [1, 1]} : vector<8x64xf32> to vector<8x32xf32>
    %934 = arith.mulf %932, %933 : vector<8x32xf32>
    %935 = vector.extract_strided_slice %930 {offsets = [0, 0], sizes = [8, 32], strides = [1, 1]} : vector<8x256xf32> to vector<8x32xf32>
    %936 = vector.extract_strided_slice %931 {offsets = [0, 64], sizes = [8, 32], strides = [1, 1]} : vector<8x256xf32> to vector<8x32xf32>
    %937 = arith.mulf %935, %936 : vector<8x32xf32>
    %938 = arith.addf %934, %937 : vector<8x32xf32>
    %939 = vector.extract_strided_slice %930 {offsets = [0, 160], sizes = [8, 32], strides = [1, 1]} : vector<8x256xf32> to vector<8x32xf32>
    %940 = vector.extract_strided_slice %905 {offsets = [0, 32], sizes = [8, 32], strides = [1, 1]} : vector<8x64xf32> to vector<8x32xf32>
    %941 = arith.mulf %939, %940 : vector<8x32xf32>
    %942 = vector.extract_strided_slice %930 {offsets = [0, 128], sizes = [8, 32], strides = [1, 1]} : vector<8x256xf32> to vector<8x32xf32>
    %943 = vector.extract_strided_slice %931 {offsets = [0, 192], sizes = [8, 32], strides = [1, 1]} : vector<8x256xf32> to vector<8x32xf32>
    %944 = arith.mulf %942, %943 : vector<8x32xf32>
    %945 = arith.addf %941, %944 : vector<8x32xf32>
    %946 = tpu.concatenate %938, %945 in 1 : vector<8x32xf32>, vector<8x32xf32> -> vector<8x64xf32>
    %947 = vector.extract_strided_slice %930 {offsets = [0, 96], sizes = [8, 32], strides = [1, 1]} : vector<8x256xf32> to vector<8x32xf32>
    %948 = vector.extract_strided_slice %930 {offsets = [0, 224], sizes = [8, 32], strides = [1, 1]} : vector<8x256xf32> to vector<8x32xf32>
    %949 = tpu.concatenate %947, %948 in 1 : vector<8x32xf32>, vector<8x32xf32> -> vector<8x64xf32>
    %950 = math.tanh %946 : vector<8x64xf32>
    %951 = arith.mulf %949, %950 : vector<8x64xf32>
    %c32_i32_256 = arith.constant 32 : i32
    %952 = vector.broadcast %c32_i32_256 : i32 to vector<8x64xi32>
    %953 = arith.cmpi slt, %1, %952 : vector<8x64xi32>
    %c6_i32_257 = arith.constant 6 : i32
    %c1_i32_258 = arith.constant 1 : i32
    %954 = vector.broadcast %c6_i32_257 : i32 to vector<8x64xi32>
    %955 = vector.broadcast %c1_i32_258 : i32 to vector<8x64xi32>
    %956 = arith.select %953, %954, %955 : vector<8x64xi1>, vector<8x64xi32>
    %957 = vector.broadcast %0 : vector<8x1xi32> to vector<8x64xi32>
    %958 = arith.cmpi eq, %957, %956 : vector<8x64xi32>
    %959 = arith.select %958, %951, %918 : vector<8x64xi1>, vector<8x64xf32>
    %960 = arith.truncf %951 : vector<8x64xf32> to vector<8x64xbf16>
    %cst_259 = arith.constant dense<0.000000e+00> : vector<8x256xf32>
    %961 = tpu.matmul %960, %671, %cst_259 {dimension_numbers = #tpu.dot_dimension_numbers<[1], [0], [0], [1], [0, 0, 1, 1], [], []>} : vector<8x64xbf16>, vector<64x256xbf16>, vector<8x256xf32> -> vector<8x256xf32>
    %c56_260 = arith.constant 56 : index
    %c0_261 = arith.constant 0 : index
    %962 = vector.load %arg11[%c56_260, %c0_261] : memref<64x256xbf16, #tpu.memory_space<vmem>>, vector<8x128xbf16>
    %c0_262 = arith.constant 0 : index
    %c128_263 = arith.constant 128 : index
    %963 = vector.load %arg11[%c0_262, %c128_263] : memref<64x256xbf16, #tpu.memory_space<vmem>>, vector<8x128xbf16>
    %964 = tpu.concatenate %962, %963 in 1 : vector<8x128xbf16>, vector<8x128xbf16> -> vector<8x256xbf16>
    %965 = arith.extf %964 : vector<8x256xbf16> to vector<8x256xf32>
    %966 = arith.addf %961, %965 : vector<8x256xf32>
    %967 = arith.negf %966 : vector<8x256xf32>
    %968 = math.exp %967 : vector<8x256xf32>
    %cst_264 = arith.constant 1.000000e+00 : f32
    %969 = vector.broadcast %cst_264 : f32 to vector<8x256xf32>
    %970 = arith.addf %969, %968 : vector<8x256xf32>
    %971 = arith.divf %969, %970 : vector<8x256xf32>
    %972 = math.tanh %966 : vector<8x256xf32>
    %973 = vector.extract_strided_slice %971 {offsets = [0, 32], sizes = [8, 32], strides = [1, 1]} : vector<8x256xf32> to vector<8x32xf32>
    %974 = vector.extract_strided_slice %946 {offsets = [0, 0], sizes = [8, 32], strides = [1, 1]} : vector<8x64xf32> to vector<8x32xf32>
    %975 = arith.mulf %973, %974 : vector<8x32xf32>
    %976 = vector.extract_strided_slice %971 {offsets = [0, 0], sizes = [8, 32], strides = [1, 1]} : vector<8x256xf32> to vector<8x32xf32>
    %977 = vector.extract_strided_slice %972 {offsets = [0, 64], sizes = [8, 32], strides = [1, 1]} : vector<8x256xf32> to vector<8x32xf32>
    %978 = arith.mulf %976, %977 : vector<8x32xf32>
    %979 = arith.addf %975, %978 : vector<8x32xf32>
    %980 = vector.extract_strided_slice %971 {offsets = [0, 160], sizes = [8, 32], strides = [1, 1]} : vector<8x256xf32> to vector<8x32xf32>
    %981 = vector.extract_strided_slice %946 {offsets = [0, 32], sizes = [8, 32], strides = [1, 1]} : vector<8x64xf32> to vector<8x32xf32>
    %982 = arith.mulf %980, %981 : vector<8x32xf32>
    %983 = vector.extract_strided_slice %971 {offsets = [0, 128], sizes = [8, 32], strides = [1, 1]} : vector<8x256xf32> to vector<8x32xf32>
    %984 = vector.extract_strided_slice %972 {offsets = [0, 192], sizes = [8, 32], strides = [1, 1]} : vector<8x256xf32> to vector<8x32xf32>
    %985 = arith.mulf %983, %984 : vector<8x32xf32>
    %986 = arith.addf %982, %985 : vector<8x32xf32>
    %987 = tpu.concatenate %979, %986 in 1 : vector<8x32xf32>, vector<8x32xf32> -> vector<8x64xf32>
    %988 = vector.extract_strided_slice %971 {offsets = [0, 96], sizes = [8, 32], strides = [1, 1]} : vector<8x256xf32> to vector<8x32xf32>
    %989 = vector.extract_strided_slice %971 {offsets = [0, 224], sizes = [8, 32], strides = [1, 1]} : vector<8x256xf32> to vector<8x32xf32>
    %990 = tpu.concatenate %988, %989 in 1 : vector<8x32xf32>, vector<8x32xf32> -> vector<8x64xf32>
    %991 = math.tanh %987 : vector<8x64xf32>
    %992 = arith.mulf %990, %991 : vector<8x64xf32>
    %c32_i32_265 = arith.constant 32 : i32
    %993 = vector.broadcast %c32_i32_265 : i32 to vector<8x64xi32>
    %994 = arith.cmpi slt, %1, %993 : vector<8x64xi32>
    %c7_i32_266 = arith.constant 7 : i32
    %c0_i32_267 = arith.constant 0 : i32
    %995 = vector.broadcast %c7_i32_266 : i32 to vector<8x64xi32>
    %996 = vector.broadcast %c0_i32_267 : i32 to vector<8x64xi32>
    %997 = arith.select %994, %995, %996 : vector<8x64xi1>, vector<8x64xi32>
    %998 = vector.broadcast %0 : vector<8x1xi32> to vector<8x64xi32>
    %999 = arith.cmpi eq, %998, %997 : vector<8x64xi32>
    %1000 = arith.select %999, %992, %959 : vector<8x64xi1>, vector<8x64xf32>
    %1001 = arith.truncf %1000 : vector<8x64xf32> to vector<8x64xbf16>
    %c0_268 = arith.constant 0 : index
    %c0_269 = arith.constant 0 : index
    %1002 = vector.load %arg8[%c0_268, %c0_269] : memref<64x2xbf16, #tpu.memory_space<vmem>>, vector<64x2xbf16>
    %cst_270 = arith.constant dense<0.000000e+00> : vector<8x2xf32>
    %1003 = tpu.matmul %1001, %1002, %cst_270 {dimension_numbers = #tpu.dot_dimension_numbers<[1], [0], [0], [1], [0, 0, 1, 1], [], []>} : vector<8x64xbf16>, vector<64x2xbf16>, vector<8x2xf32> -> vector<8x2xf32>
    %c0_271 = arith.constant 0 : index
    %c0_272 = arith.constant 0 : index
    %1004 = vector.load %arg9[%c0_271, %c0_272] : memref<1x2xf32, #tpu.memory_space<vmem>>, vector<1x2xf32>
    %1005 = vector.broadcast %1004 : vector<1x2xf32> to vector<8x2xf32>
    %1006 = arith.addf %1003, %1005 : vector<8x2xf32>
    %cst_273 = arith.constant dense<0xFF800000> : vector<8xf32>
    %1007 = vector.multi_reduction <maximumf>, %1006, %cst_273 [1] : vector<8x2xf32> to vector<8xf32>
    %1008 = vector.shape_cast %1007 : vector<8xf32> to vector<8x1xf32>
    %1009 = vector.broadcast %1008 : vector<8x1xf32> to vector<8x2xf32>
    %1010 = arith.subf %1006, %1009 : vector<8x2xf32>
    %1011 = math.exp %1010 : vector<8x2xf32>
    %cst_274 = arith.constant dense<0.000000e+00> : vector<8xf32>
    %1012 = vector.multi_reduction <add>, %1011, %cst_274 [1] : vector<8x2xf32> to vector<8xf32>
    %1013 = vector.shape_cast %1012 : vector<8xf32> to vector<8x1xf32>
    %1014 = math.log %1013 : vector<8x1xf32>
    %1015 = arith.addf %1008, %1014 : vector<8x1xf32>
    %1016 = vector.broadcast %1015 : vector<8x1xf32> to vector<8x2xf32>
    %1017 = arith.subf %1006, %1016 : vector<8x2xf32>
    %c0_275 = arith.constant 0 : index
    %c0_276 = arith.constant 0 : index
    %1018 = vector.load %arg10[%c0_275, %c0_276] : memref<8x2xf32, #tpu.memory_space<vmem>>, vector<8x2xf32>
    tpu.vector_store %arg10[%c0_275, %c0_276], %1017 {strides = array<i32>} : memref<8x2xf32, #tpu.memory_space<vmem>>, vector<8x2xf32>,
    return
  }
}

</mosaic_0001>

<llo_original>
// kernel: tpu_custom_call.1
$region0: #{tpu_custom_call.1}
  #allocation0 [shape = 'u32[]', space=smem, size = 0x4, offset = 0x4, fixed_abs, tag = 'smem constant byte address 0x4 - core index']
  #allocation1 [shape = 'u32[144,128]{1,0:T(1,128)}', space=vmem, size = 0x12000, scoped, tag = 'internal scratch']
  #allocation2 [shape = 'bf16[64,256]{1,0:T(16,128)(2,1)}', space=vmem, size = 0x8000, scoped, tag = 'scratch operand']
  #allocation3 [shape = 'bf16[64,32]{1,0:T(16,128)(2,1)}', space=vmem, size = 0x4000, scoped, tag = 'scratch operand']
  #allocation4 [shape = 'bf16[64,32]{1,0:T(16,128)(2,1)}', space=vmem, size = 0x4000, scoped, tag = 'scratch operand']
  %s0 = inlined_call_operand.vmem [shape: s32[8,1], index: 0, kind: input, shape index: {}]
  %s1 = inlined_call_operand.vmem [shape: bf16[64,32], index: 1, kind: input, shape index: {}]
  %s2 = inlined_call_operand.vmem [shape: bf16[32,256], index: 2, kind: input, shape index: {}]
  %s3 = inlined_call_operand.vmem [shape: f32[1,256], index: 3, kind: input, shape index: {}]
  %s4 = inlined_call_operand.vmem [shape: bf16[2,32,256], index: 4, kind: input, shape index: {}]
  %s5 = inlined_call_operand.hbm [shape: bf16[2,32,256], index: 5, kind: input, shape index: {}]
  %s6 = inlined_call_operand.vmem [shape: f32[2,1,256], index: 6, kind: input, shape index: {}]
  %s7 = inlined_call_operand.hbm [shape: bf16[3,64,256], index: 7, kind: input, shape index: {}]
  %s8 = inlined_call_operand.vmem [shape: bf16[64,2], index: 8, kind: input, shape index: {}]
  %s9 = inlined_call_operand.vmem [shape: f32[1,2], index: 9, kind: input, shape index: {}]
  %s10 = inlined_call_operand.vmem [shape: f32[8,2], index: 10, kind: output, shape index: {}]
  %s11 = sld [smem:[#allocation0]]
  $region58: #{tpu_custom_call.1} parent=0
    _
  %s13 = ssub.s32 1, %s11
  %s14 = scalar_select 0, %s13, %s11
  $region1: #{tpu_custom_call.1} parent=0
    #allocation5 [shape = 'u8[32768]{0}', space=vmem, size = 0x8000, scoped, tag = 'input window, operand 5, single buffered']
    #allocation6 [shape = 's32[1]{0}', space=sflag, size = 0x4, scoped, tag = 'scoped memory for tpu_custom_call.1']
    #allocation7 [shape = 'u8[98304]{0}', space=vmem, size = 0x18000, scoped, tag = 'input window, operand 7, single buffered']
    #allocation8 [shape = 's32[1]{0}', space=sflag, size = 0x4, scoped, tag = 'scoped memory for tpu_custom_call.1']
    %15 = vsyncpa [#allocation6], 0
    %16 = vsyncpa [#allocation8], 0
    // Predicated region
    $region2: #{tpu_custom_call.1} parent=1 // pred_check
      _
    $region3: #{tpu_custom_call.1} parent=1 // pred_check_branch
      %18 = sbr.rel (0) target = $region5
    $region4: #{tpu_custom_call.1} parent=1 // pred_region
      _
    $region5: #{tpu_custom_call.1} parent=1 // pred_fallthru
      _
    // Predicated region
    $region6: #{tpu_custom_call.1} parent=1 // pred_check
      _
    $region7: #{tpu_custom_call.1} parent=1 // pred_check_branch
      %20 = sbr.rel (0) target = $region9
    $region8: #{tpu_custom_call.1} parent=1 // pred_region
      _
    $region9: #{tpu_custom_call.1} parent=1 // pred_fallthru
      _
    // Predicated region
    $region10: #{tpu_custom_call.1} parent=1 // pred_check
      _
    $region11: #{tpu_custom_call.1} parent=1 // pred_check_branch
      %22 = sbr.rel (0) target = $region13
    $region12: #{tpu_custom_call.1} parent=1 // pred_region
      _
    $region13: #{tpu_custom_call.1} parent=1 // pred_fallthru
      _
    // Predicated region
    $region14: #{tpu_custom_call.1} parent=1 // pred_check
      _
    $region15: #{tpu_custom_call.1} parent=1 // pred_check_branch
      %24 = sbr.rel (0) target = $region17
    $region16: #{tpu_custom_call.1} parent=1 // pred_region
      _
    $region17: #{tpu_custom_call.1} parent=1 // pred_fallthru
      _
    // Predicated region
    $region18: #{tpu_custom_call.1} parent=1 // pred_check
      _
    $region19: #{tpu_custom_call.1} parent=1 // pred_check_branch
      %26 = sbr.rel (0) target = $region21
    $region20: #{tpu_custom_call.1} parent=1 // pred_region
      _
    $region21: #{tpu_custom_call.1} parent=1 // pred_fallthru
      _
    // Predicated region
    $region22: #{tpu_custom_call.1} parent=1 // pred_check
      _
    $region23: #{tpu_custom_call.1} parent=1 // pred_check_branch
      %28 = sbr.rel (0) target = $region25
    $region24: #{tpu_custom_call.1} parent=1 // pred_region
      %s30 = ssub.s32 1024, 1024
      %31 = vsyncadd [#allocation6], %s30
      %s32 = sshll.u32 [#allocation5], 4
      %s33 = int_to_ptr.vmem [resolvable:$true] %s32
      %38 = dma.hbm_to_vmem [thread:$0]  %s5, 1024, %s33, [#allocation6], 128, 128, 8
    $region25: #{tpu_custom_call.1} parent=1 // pred_fallthru
      _
    // Predicated region
    $region26: #{tpu_custom_call.1} parent=1 // pred_check
      _
    $region27: #{tpu_custom_call.1} parent=1 // pred_check_branch
      %40 = sbr.rel (0) target = $region29
    $region28: #{tpu_custom_call.1} parent=1 // pred_region
      _
    $region29: #{tpu_custom_call.1} parent=1 // pred_fallthru
      _
    // Predicated region
    $region30: #{tpu_custom_call.1} parent=1 // pred_check
      _
    $region31: #{tpu_custom_call.1} parent=1 // pred_check_branch
      %42 = sbr.rel (0) target = $region33
    $region32: #{tpu_custom_call.1} parent=1 // pred_region
      %s44 = ssub.s32 3072, 3072
      %45 = vsyncadd [#allocation8], %s44
      %s46 = sshll.u32 [#allocation7], 4
      %s47 = int_to_ptr.vmem [resolvable:$true] %s46
      %52 = dma.hbm_to_vmem [thread:$0]  %s7, 3072, %s47, [#allocation8], 128, 128, 8
    $region33: #{tpu_custom_call.1} parent=1 // pred_fallthru
      _
    // Predicated region
    $region34: #{tpu_custom_call.1} parent=1 // pred_check
      _
    $region35: #{tpu_custom_call.1} parent=1 // pred_check_branch
      %54 = sbr.rel (0) target = $region37
    $region36: #{tpu_custom_call.1} parent=1 // pred_region
      _
    $region37: #{tpu_custom_call.1} parent=1 // pred_fallthru
      _
    // Predicated region
    $region38: #{tpu_custom_call.1} parent=1 // pred_check
      _
    $region39: #{tpu_custom_call.1} parent=1 // pred_check_branch
      %56 = sbr.rel (0) target = $region41
    $region40: #{tpu_custom_call.1} parent=1 // pred_region
      _
    $region41: #{tpu_custom_call.1} parent=1 // pred_fallthru
      _
    // Predicated region
    $region42: #{tpu_custom_call.1} parent=1 // pred_check
      _
    $region43: #{tpu_custom_call.1} parent=1 // pred_check_branch
      %58 = sbr.rel (0) target = $region45
    $region44: #{tpu_custom_call.1} parent=1 // pred_region
      %59 = dma.done [#allocation6], 1024
    $region45: #{tpu_custom_call.1} parent=1 // pred_fallthru
      _
    // Predicated region
    $region46: #{tpu_custom_call.1} parent=1 // pred_check
      _
    $region47: #{tpu_custom_call.1} parent=1 // pred_check_branch
      %61 = sbr.rel (0) target = $region49
    $region48: #{tpu_custom_call.1} parent=1 // pred_region
      %62 = dma.done [#allocation8], 3072
    $region49: #{tpu_custom_call.1} parent=1 // pred_fallthru
      _
    %v64 = vld [vmem:[%s0] sm:$0xff]
    %v65 = vlaneseq
    %v66 = vand.u32 %v65, 127
    %v67 = vld [vmem:[%s1] sm:$0xf]
    %v68 = vld [vmem:[%s1 + $0x4] sm:$0xf]
    %v69 = vld [vmem:[%s1 + $0x8] sm:$0xf]
    %v70 = vld [vmem:[%s1 + $0xc] sm:$0xf]
    %v71 = vld [vmem:[%s1 + $0x10] sm:$0xf]
    %v72 = vld [vmem:[%s1 + $0x14] sm:$0xf]
    %v73 = vld [vmem:[%s1 + $0x18] sm:$0xf]
    %v74 = vld [vmem:[%s1 + $0x1c] sm:$0xf]
    %v75 = vld [vmem:[%s2] sm:$0xff]
    %v76 = vld [vmem:[%s2 + $0x8] sm:$0xff]
    %v77 = vld [vmem:[%s2 + $0x10] sm:$0xff]
    %v78 = vld [vmem:[%s2 + $0x18] sm:$0xff]
    %v79 = vld [vmem:[%s3] sm:$0x3]
    %v81 = vlaneseq
    %v82 = vshrl.u32 %v81, 7
    %v83 = vsub.s32 0, %v82
    %v84 = vrot.slane %v79, %v83
    %v85 = vlaneseq
    %v86 = vshrl.u32 %v85, 7
    %v87 = vsub.s32 1, %v86
    %v88 = vrot.slane %v79, %v87
    %v99 = vunpack.c.l.b16 %v67
    %v100 = vunpack.c.l.b16 %v68
    %v101 = vunpack.c.l.b16 %v69
    %v102 = vunpack.c.l.b16 %v70
    %v103 = vunpack.c.l.b16 %v71
    %v104 = vunpack.c.l.b16 %v72
    %v105 = vunpack.c.l.b16 %v73
    %v106 = vunpack.c.l.b16 %v74
    %v107 = vpack.c.b16 %v100, %v99
    %v108 = vpack.c.b16 %v102, %v101
    %v109 = vpack.c.b16 %v104, %v103
    %v110 = vpack.c.b16 %v106, %v105
    %v115 = vunpack.c.l.b16 %v75
    %v116 = vunpack.c.h.b16 %v75
    %v117 = vunpack.c.l.b16 %v76
    %v118 = vunpack.c.h.b16 %v76
    %v119 = vunpack.c.l.b16 %v77
    %v120 = vunpack.c.h.b16 %v77
    %v121 = vunpack.c.l.b16 %v78
    %v122 = vunpack.c.h.b16 %v78
    %v123 = vpack.c.b16 %v117, %v115
    %v124 = vpack.c.b16 %v118, %v116
    %v125 = vpack.c.b16 %v121, %v119
    %v126 = vpack.c.b16 %v122, %v120
    %vm131 = vcmask 261120
    %v133 = vsel %vm131, %v107, 0
    %v136 = vsel %vm131, %v108, 0
    %v139 = vsel %vm131, %v109, 0
    %v142 = vsel %vm131, %v110, 0
    %144 = vmatprep.subr.bf16.mxu0 %v124
    %145 = vmatpush1.bf16.msra.mxu0 %v123
    %146 = vmatprep.subr.bf16.mxu0 %v126
    %147 = vmatpush1.bf16.msra.mxu0 %v125
    %148 = vmatprep.subr.bf16.mxu0 0
    %149 = vmatpush1.bf16.msra.mxu0 0
    %150 = vmatprep.subr.bf16.mxu0 0
    %151 = vmatpush1.bf16.msra.mxu0 0
    %152 = vmatprep.subr.bf16.mxu0 0
    %153 = vmatpush1.bf16.msra.mxu0 0
    %154 = vmatprep.subr.bf16.mxu0 0
    %155 = vmatpush1.bf16.msra.mxu0 0
    %156 = vmatprep.subr.bf16.mxu0 0
    %157 = vmatpush1.bf16.msra.mxu0 0
    %158 = vmatprep.subr.bf16.mxu0 0
    %159 = vmatpush1.bf16.msra.mxu0 0
    %160 = vmatprep.subr.bf16.mxu0 0
    %161 = vmatpush1.bf16.msra.mxu0 0
    %162 = vmatprep.subr.bf16.mxu0 0
    %163 = vmatpush1.bf16.msra.mxu0 0
    %164 = vmatprep.subr.bf16.mxu0 0
    %165 = vmatpush1.bf16.msra.mxu0 0
    %166 = vmatprep.subr.bf16.mxu0 0
    %167 = vmatpush1.bf16.msra.mxu0 0
    %168 = vmatprep.subr.bf16.mxu0 0
    %169 = vmatpush1.bf16.msra.mxu0 0
    %170 = vmatprep.subr.bf16.mxu0 0
    %171 = vmatpush1.bf16.msra.mxu0 0
    %172 = vmatprep.subr.bf16.mxu0 0
    %173 = vmatpush1.bf16.msra.mxu0 0
    %174 = vmatprep.subr.bf16.mxu0 0
    %175 = vmatpush1.bf16.msra.mxu0 0
    %176 = vmatprep.mubr.bf16.mxu0 0
    %177 = vmatmul.mubr.bf16.gmra.mrb[0].mxu0 %v133
    %v178 = vpop.f32.mrb[0].mxu0
    %v179 = vadd.f32 %v84, %v178
    %v180 = vpop.f32.mrb[0].mxu0
    %v181 = vadd.f32 %v88, %v180
    %v182 = vpop.f32.mrb[0].mxu0
    %v183 = vadd.f32 %v84, %v182
    %v184 = vpop.f32.mrb[0].mxu0
    %v185 = vadd.f32 %v88, %v184
    %186 = vmatprep.mubr.bf16.mxu0 0
    %187 = vmatmul.mubr.bf16.gmra.mrb[0].mxu0 %v136
    %v188 = vpop.f32.mrb[0].mxu0
    %v189 = vadd.f32 %v84, %v188
    %v190 = vpop.f32.mrb[0].mxu0
    %v191 = vadd.f32 %v88, %v190
    %v192 = vpop.f32.mrb[0].mxu0
    %v193 = vadd.f32 %v84, %v192
    %v194 = vpop.f32.mrb[0].mxu0
    %v195 = vadd.f32 %v88, %v194
    %196 = vmatprep.mubr.bf16.mxu0 0
    %197 = vmatmul.mubr.bf16.gmra.mrb[0].mxu0 %v139
    %v198 = vpop.f32.mrb[0].mxu0
    %v199 = vadd.f32 %v84, %v198
    %v200 = vpop.f32.mrb[0].mxu0
    %v201 = vadd.f32 %v88, %v200
    %v202 = vpop.f32.mrb[0].mxu0
    %v203 = vadd.f32 %v84, %v202
    %v204 = vpop.f32.mrb[0].mxu0
    %v205 = vadd.f32 %v88, %v204
    %206 = vmatprep.mubr.bf16.mxu0 0
    %207 = vmatmul.mubr.bf16.gmra.mrb[0].mxu0 %v142
    %v208 = vpop.f32.mrb[0].mxu0
    %v209 = vadd.f32 %v84, %v208
    %v210 = vpop.f32.mrb[0].mxu0
    %v211 = vadd.f32 %v88, %v210
    %v212 = vpop.f32.mrb[0].mxu0
    %v213 = vadd.f32 %v84, %v212
    %v214 = vpop.f32.mrb[0].mxu0
    %v215 = vadd.f32 %v88, %v214
    %216 = vdwg.mxu0
    %v217 = vpack.c.bf16 %v183, %v179
    %v218 = vpack.c.bf16 %v185, %v181
    %v219 = vpack.c.bf16 %v193, %v189
    %v220 = vpack.c.bf16 %v195, %v191
    %v221 = vpack.c.bf16 %v203, %v199
    %v222 = vpack.c.bf16 %v205, %v201
    %v223 = vpack.c.bf16 %v213, %v209
    %v224 = vpack.c.bf16 %v215, %v211
    %225 = vst [vmem:[#allocation2] sm:$0xff] %v217
    %226 = vst [vmem:[#allocation2 + $0x8] sm:$0xff] %v218
    %227 = vst [vmem:[#allocation2 + $0x10] sm:$0xff] %v219
    %228 = vst [vmem:[#allocation2 + $0x18] sm:$0xff] %v220
    %229 = vst [vmem:[#allocation2 + $0x20] sm:$0xff] %v221
    %230 = vst [vmem:[#allocation2 + $0x28] sm:$0xff] %v222
    %231 = vst [vmem:[#allocation2 + $0x30] sm:$0xff] %v223
    %232 = vst [vmem:[#allocation2 + $0x38] sm:$0xff] %v224
    %v233 = vld [vmem:[#allocation7] sm:$0xff]
    %v234 = vld [vmem:[#allocation7 + $0x8] sm:$0xff]
    %v235 = vld [vmem:[#allocation7 + $0x10] sm:$0xff]
    %v236 = vld [vmem:[#allocation7 + $0x18] sm:$0xff]
    %v237 = vld [vmem:[#allocation7 + $0x20] sm:$0xff]
    %v238 = vld [vmem:[#allocation7 + $0x28] sm:$0xff]
    %v239 = vld [vmem:[#allocation7 + $0x30] sm:$0xff]
    %v240 = vld [vmem:[#allocation7 + $0x38] sm:$0xff]
    %v241 = vld [vmem:[#allocation2] sm:$0xf]
    %v242 = vld [vmem:[#allocation2 + $0x38] sm:$0xf0]
    %v244 = vrot.slane %v242, 4
    %v246 = vunpack.c.l.bf16 %v241
    %v247 = vunpack.c.l.bf16 %v244
    %v256 = vunpack.c.l.b16 %v233
    %v257 = vunpack.c.h.b16 %v233
    %v258 = vunpack.c.l.b16 %v234
    %v259 = vunpack.c.h.b16 %v234
    %v260 = vunpack.c.l.b16 %v235
    %v261 = vunpack.c.h.b16 %v235
    %v262 = vunpack.c.l.b16 %v236
    %v263 = vunpack.c.h.b16 %v236
    %v264 = vunpack.c.l.b16 %v237
    %v265 = vunpack.c.h.b16 %v237
    %v266 = vunpack.c.l.b16 %v238
    %v267 = vunpack.c.h.b16 %v238
    %v268 = vunpack.c.l.b16 %v239
    %v269 = vunpack.c.h.b16 %v239
    %v270 = vunpack.c.l.b16 %v240
    %v271 = vunpack.c.h.b16 %v240
    %v272 = vpack.c.b16 %v258, %v256
    %v273 = vpack.c.b16 %v259, %v257
    %v274 = vpack.c.b16 %v262, %v260
    %v275 = vpack.c.b16 %v263, %v261
    %v276 = vpack.c.b16 %v266, %v264
    %v277 = vpack.c.b16 %v267, %v265
    %v278 = vpack.c.b16 %v270, %v268
    %v279 = vpack.c.b16 %v271, %v269
    %vm288 = vcmask 523264
    %v290 = vsel %vm288, 0, 0
    %292 = vmatprep.subr.bf16.mxu0 %v273
    %293 = vmatpush1.bf16.msra.mxu0 %v272
    %294 = vmatprep.subr.bf16.mxu0 %v275
    %295 = vmatpush1.bf16.msra.mxu0 %v274
    %296 = vmatprep.subr.bf16.mxu0 %v277
    %297 = vmatpush1.bf16.msra.mxu0 %v276
    %298 = vmatprep.subr.bf16.mxu0 %v279
    %299 = vmatpush1.bf16.msra.mxu0 %v278
    %300 = vmatprep.subr.bf16.mxu0 0
    %301 = vmatpush1.bf16.msra.mxu0 0
    %302 = vmatprep.subr.bf16.mxu0 0
    %303 = vmatpush1.bf16.msra.mxu0 0
    %304 = vmatprep.subr.bf16.mxu0 0
    %305 = vmatpush1.bf16.msra.mxu0 0
    %306 = vmatprep.subr.bf16.mxu0 0
    %307 = vmatpush1.bf16.msra.mxu0 0
    %308 = vmatprep.subr.bf16.mxu0 0
    %309 = vmatpush1.bf16.msra.mxu0 0
    %310 = vmatprep.subr.bf16.mxu0 0
    %311 = vmatpush1.bf16.msra.mxu0 0
    %312 = vmatprep.subr.bf16.mxu0 0
    %313 = vmatpush1.bf16.msra.mxu0 0
    %314 = vmatprep.subr.bf16.mxu0 0
    %315 = vmatpush1.bf16.msra.mxu0 0
    %316 = vmatprep.subr.bf16.mxu0 0
    %317 = vmatpush1.bf16.msra.mxu0 0
    %318 = vmatprep.subr.bf16.mxu0 0
    %319 = vmatpush1.bf16.msra.mxu0 0
    %320 = vmatprep.subr.bf16.mxu0 0
    %321 = vmatpush1.bf16.msra.mxu0 0
    %322 = vmatprep.subr.bf16.mxu0 0
    %323 = vmatpush1.bf16.msra.mxu0 0
    %324 = vmatprep.mubr.bf16.mxu0 0
    %325 = vmatmul.mubr.bf16.gmra.mrb[0].mxu0 %v290
    %v326 = vpop.f32.mrb[0].mxu0
    %v327 = vadd.f32 %v246, %v326
    %v328 = vpop.f32.mrb[0].mxu0
    %v329 = vadd.f32 %v247, %v328
    %v330 = vpop.f32.mrb[0].mxu0
    %v331 = vpop.f32.mrb[0].mxu0
    %332 = vdwg.mxu0
    %v333 = vxor.u32 %v327, 2147483648
    %v334 = vxor.u32 %v329, 2147483648
    %v335 = vmul.f32 %v333, 1.442695
    %v336 = vpow.pop %v335
    %v337 = vmul.f32 %v334, 1.442695
    %v338 = vpow.pop %v337
    %v339 = vadd.f32 %v336, 1.0
    %v340 = vadd.f32 %v338, 1.0
    %v341 = vrcp.pop %v339
    %v342 = vmul.f32 1.0, %v341
    %v343 = vrcp.pop %v340
    %v344 = vmul.f32 1.0, %v343
    %v345 = vtanh.pop %v327
    %v346 = vtanh.pop %v329
    %v347 = vmul.f32 %v342, 0.0
    %349 = vrot.lane.b32.xlu0 %v345, 64
    %v350 = vpop.permute.xlu0 %349
    %v352 = vmul.f32 %v342, %v350
    %354 = vrot.lane.b32.xlu0 %v352, 32
    %v355 = vpop.permute.xlu0 %354
    %v357 = vadd.f32 %v347, %v355
    %v358 = vmul.f32 %v344, 0.0
    %360 = vrot.lane.b32.xlu0 %v346, 64
    %v361 = vpop.permute.xlu0 %360
    %v363 = vmul.f32 %v344, %v361
    %365 = vrot.lane.b32.xlu0 %v363, 32
    %v366 = vpop.permute.xlu0 %365
    %v368 = vadd.f32 %v358, %v366
    %370 = vrot.lane.b32.xlu0 %v357, 96
    %v371 = vpop.permute.xlu0 %370
    %v373 = vsel %vm131, %v371, %v368
    %375 = vrot.lane.b32.xlu0 %v342, 32
    %v376 = vpop.permute.xlu0 %375
    %379 = vrot.lane.b32.xlu0 %v344, 64
    %v380 = vpop.permute.xlu0 %379
    %v382 = vsel %vm131, %v376, %v380
    %v383 = vtanh.pop %v373
    %v384 = vmul.f32 %v382, %v383
    %v385 = vpack.c.bf16 %v384, %v384
    %vm386 = vcmask 257024
    %387 = vst.msk [vmem:[#allocation3] sm:$0xf] %vm386, %v385
    %v389 = vrot.slane %v385, 4
    %390 = vrot.lane.b32.xlu0 %v389, 96
    %v391 = vpop.permute.xlu0 %390
    %vm393 = vcmask 261124
    %394 = vst.msk [vmem:[#allocation4 + $0x18] sm:$0xf0] %vm393, %v391
    %v395 = vld [vmem:[#allocation2] sm:$0xf0]
    %v396 = vld [vmem:[#allocation2 + $0x38] sm:$0xf]
    %v398 = vrot.slane %v396, 4
    %v400 = vrot.slane %v395, 4
    %v401 = vrot.slane %v398, 4
    %v404 = vunpack.c.l.bf16 %v400
    %v405 = vunpack.c.l.bf16 %v401
    %v407 = vsel %vm288, %v385, 0
    %409 = vmatprep.subr.bf16.mxu0 %v273
    %410 = vmatpush1.bf16.msra.mxu0 %v272
    %411 = vmatprep.subr.bf16.mxu0 %v275
    %412 = vmatpush1.bf16.msra.mxu0 %v274
    %413 = vmatprep.subr.bf16.mxu0 %v277
    %414 = vmatpush1.bf16.msra.mxu0 %v276
    %415 = vmatprep.subr.bf16.mxu0 %v279
    %416 = vmatpush1.bf16.msra.mxu0 %v278
    %417 = vmatprep.subr.bf16.mxu0 0
    %418 = vmatpush1.bf16.msra.mxu0 0
    %419 = vmatprep.subr.bf16.mxu0 0
    %420 = vmatpush1.bf16.msra.mxu0 0
    %421 = vmatprep.subr.bf16.mxu0 0
    %422 = vmatpush1.bf16.msra.mxu0 0
    %423 = vmatprep.subr.bf16.mxu0 0
    %424 = vmatpush1.bf16.msra.mxu0 0
    %425 = vmatprep.subr.bf16.mxu0 0
    %426 = vmatpush1.bf16.msra.mxu0 0
    %427 = vmatprep.subr.bf16.mxu0 0
    %428 = vmatpush1.bf16.msra.mxu0 0
    %429 = vmatprep.subr.bf16.mxu0 0
    %430 = vmatpush1.bf16.msra.mxu0 0
    %431 = vmatprep.subr.bf16.mxu0 0
    %432 = vmatpush1.bf16.msra.mxu0 0
    %433 = vmatprep.subr.bf16.mxu0 0
    %434 = vmatpush1.bf16.msra.mxu0 0
    %435 = vmatprep.subr.bf16.mxu0 0
    %436 = vmatpush1.bf16.msra.mxu0 0
    %437 = vmatprep.subr.bf16.mxu0 0
    %438 = vmatpush1.bf16.msra.mxu0 0
    %439 = vmatprep.subr.bf16.mxu0 0
    %440 = vmatpush1.bf16.msra.mxu0 0
    %441 = vmatprep.mubr.bf16.mxu0 0
    %442 = vmatmul.mubr.bf16.gmra.mrb[0].mxu0 %v407
    %v443 = vpop.f32.mrb[0].mxu0
    %v444 = vadd.f32 %v404, %v443
    %v445 = vpop.f32.mrb[0].mxu0
    %v446 = vadd.f32 %v405, %v445
    %v447 = vpop.f32.mrb[0].mxu0
    %v448 = vpop.f32.mrb[0].mxu0
    %449 = vdwg.mxu0
    %v450 = vxor.u32 %v444, 2147483648
    %v451 = vxor.u32 %v446, 2147483648
    %v452 = vmul.f32 %v450, 1.442695
    %v453 = vpow.pop %v452
    %v454 = vmul.f32 %v451, 1.442695
    %v455 = vpow.pop %v454
    %v456 = vadd.f32 %v453, 1.0
    %v457 = vadd.f32 %v455, 1.0
    %v458 = vrcp.pop %v456
    %v459 = vmul.f32 1.0, %v458
    %v460 = vrcp.pop %v457
    %v461 = vmul.f32 1.0, %v460
    %v462 = vtanh.pop %v444
    %v463 = vtanh.pop %v446
    %465 = vrot.lane.b32.xlu0 %v373, 32
    %v466 = vpop.permute.xlu0 %465
    %v468 = vmul.f32 %v459, %v466
    %470 = vrot.lane.b32.xlu0 %v462, 64
    %v471 = vpop.permute.xlu0 %470
    %v473 = vmul.f32 %v459, %v471
    %475 = vrot.lane.b32.xlu0 %v473, 32
    %v476 = vpop.permute.xlu0 %475
    %v478 = vadd.f32 %v468, %v476
    %v479 = vmul.f32 %v461, %v373
    %481 = vrot.lane.b32.xlu0 %v463, 64
    %v482 = vpop.permute.xlu0 %481
    %v484 = vmul.f32 %v461, %v482
    %486 = vrot.lane.b32.xlu0 %v484, 32
    %v487 = vpop.permute.xlu0 %486
    %v489 = vadd.f32 %v479, %v487
    %491 = vrot.lane.b32.xlu0 %v478, 96
    %v492 = vpop.permute.xlu0 %491
    %v494 = vsel %vm131, %v492, %v489
    %496 = vrot.lane.b32.xlu0 %v459, 32
    %v497 = vpop.permute.xlu0 %496
    %500 = vrot.lane.b32.xlu0 %v461, 64
    %v501 = vpop.permute.xlu0 %500
    %v503 = vsel %vm131, %v497, %v501
    %v504 = vtanh.pop %v494
    %v505 = vmul.f32 %v503, %v504
    %v506 = vpack.c.bf16 %v505, %v505
    %v508 = vrot.slane %v506, 4
    %510 = vst.msk [vmem:[#allocation3] sm:$0xf0] %vm393, %v508
    %511 = vrot.lane.b32.xlu0 %v506, 96
    %v512 = vpop.permute.xlu0 %511
    %514 = vst.msk [vmem:[#allocation4 + $0x18] sm:$0xf] %vm386, %v512
    %v515 = vld [vmem:[#allocation2 + $0x10] sm:$0xf]
    %v516 = vld [vmem:[#allocation2 + $0x28] sm:$0xf0]
    %v518 = vrot.slane %v516, 4
    %v520 = vunpack.c.l.bf16 %v515
    %v521 = vunpack.c.l.bf16 %v518
    %v523 = vsel %vm288, %v506, 0
    %525 = vmatprep.subr.bf16.mxu0 %v273
    %526 = vmatpush1.bf16.msra.mxu0 %v272
    %527 = vmatprep.subr.bf16.mxu0 %v275
    %528 = vmatpush1.bf16.msra.mxu0 %v274
    %529 = vmatprep.subr.bf16.mxu0 %v277
    %530 = vmatpush1.bf16.msra.mxu0 %v276
    %531 = vmatprep.subr.bf16.mxu0 %v279
    %532 = vmatpush1.bf16.msra.mxu0 %v278
    %533 = vmatprep.subr.bf16.mxu0 0
    %534 = vmatpush1.bf16.msra.mxu0 0
    %535 = vmatprep.subr.bf16.mxu0 0
    %536 = vmatpush1.bf16.msra.mxu0 0
    %537 = vmatprep.subr.bf16.mxu0 0
    %538 = vmatpush1.bf16.msra.mxu0 0
    %539 = vmatprep.subr.bf16.mxu0 0
    %540 = vmatpush1.bf16.msra.mxu0 0
    %541 = vmatprep.subr.bf16.mxu0 0
    %542 = vmatpush1.bf16.msra.mxu0 0
    %543 = vmatprep.subr.bf16.mxu0 0
    %544 = vmatpush1.bf16.msra.mxu0 0
    %545 = vmatprep.subr.bf16.mxu0 0
    %546 = vmatpush1.bf16.msra.mxu0 0
    %547 = vmatprep.subr.bf16.mxu0 0
    %548 = vmatpush1.bf16.msra.mxu0 0
    %549 = vmatprep.subr.bf16.mxu0 0
    %550 = vmatpush1.bf16.msra.mxu0 0
    %551 = vmatprep.subr.bf16.mxu0 0
    %552 = vmatpush1.bf16.msra.mxu0 0
    %553 = vmatprep.subr.bf16.mxu0 0
    %554 = vmatpush1.bf16.msra.mxu0 0
    %555 = vmatprep.subr.bf16.mxu0 0
    %556 = vmatpush1.bf16.msra.mxu0 0
    %557 = vmatprep.mubr.bf16.mxu0 0
    %558 = vmatmul.mubr.bf16.gmra.mrb[0].mxu0 %v523
    %v559 = vpop.f32.mrb[0].mxu0
    %v560 = vadd.f32 %v520, %v559
    %v561 = vpop.f32.mrb[0].mxu0
    %v562 = vadd.f32 %v521, %v561
    %v563 = vpop.f32.mrb[0].mxu0
    %v564 = vpop.f32.mrb[0].mxu0
    %565 = vdwg.mxu0
    %v566 = vxor.u32 %v560, 2147483648
    %v567 = vxor.u32 %v562, 2147483648
    %v568 = vmul.f32 %v566, 1.442695
    %v569 = vpow.pop %v568
    %v570 = vmul.f32 %v567, 1.442695
    %v571 = vpow.pop %v570
    %v572 = vadd.f32 %v569, 1.0
    %v573 = vadd.f32 %v571, 1.0
    %v574 = vrcp.pop %v572
    %v575 = vmul.f32 1.0, %v574
    %v576 = vrcp.pop %v573
    %v577 = vmul.f32 1.0, %v576
    %v578 = vtanh.pop %v560
    %v579 = vtanh.pop %v562
    %581 = vrot.lane.b32.xlu0 %v494, 32
    %v582 = vpop.permute.xlu0 %581
    %v584 = vmul.f32 %v575, %v582
    %586 = vrot.lane.b32.xlu0 %v578, 64
    %v587 = vpop.permute.xlu0 %586
    %v589 = vmul.f32 %v575, %v587
    %591 = vrot.lane.b32.xlu0 %v589, 32
    %v592 = vpop.permute.xlu0 %591
    %v594 = vadd.f32 %v584, %v592
    %v595 = vmul.f32 %v577, %v494
    %597 = vrot.lane.b32.xlu0 %v579, 64
    %v598 = vpop.permute.xlu0 %597
    %v600 = vmul.f32 %v577, %v598
    %602 = vrot.lane.b32.xlu0 %v600, 32
    %v603 = vpop.permute.xlu0 %602
    %v605 = vadd.f32 %v595, %v603
    %607 = vrot.lane.b32.xlu0 %v594, 96
    %v608 = vpop.permute.xlu0 %607
    %v610 = vsel %vm131, %v608, %v605
    %612 = vrot.lane.b32.xlu0 %v575, 32
    %v613 = vpop.permute.xlu0 %612
    %616 = vrot.lane.b32.xlu0 %v577, 64
    %v617 = vpop.permute.xlu0 %616
    %v619 = vsel %vm131, %v613, %v617
    %v620 = vtanh.pop %v610
    %v621 = vmul.f32 %v619, %v620
    %v622 = vpack.c.bf16 %v621, %v621
    %623 = vst.msk [vmem:[#allocation3 + $0x8] sm:$0xf] %vm386, %v622
    %v625 = vrot.slane %v622, 4
    %626 = vrot.lane.b32.xlu0 %v625, 96
    %v627 = vpop.permute.xlu0 %626
    %629 = vst.msk [vmem:[#allocation4 + $0x10] sm:$0xf0] %vm393, %v627
    %v630 = vld [vmem:[#allocation2 + $0x10] sm:$0xf0]
    %v631 = vld [vmem:[#allocation2 + $0x28] sm:$0xf]
    %v633 = vrot.slane %v631, 4
    %v635 = vrot.slane %v630, 4
    %v636 = vrot.slane %v633, 4
    %v639 = vunpack.c.l.bf16 %v635
    %v640 = vunpack.c.l.bf16 %v636
    %v642 = vsel %vm288, %v622, 0
    %644 = vmatprep.subr.bf16.mxu0 %v273
    %645 = vmatpush1.bf16.msra.mxu0 %v272
    %646 = vmatprep.subr.bf16.mxu0 %v275
    %647 = vmatpush1.bf16.msra.mxu0 %v274
    %648 = vmatprep.subr.bf16.mxu0 %v277
    %649 = vmatpush1.bf16.msra.mxu0 %v276
    %650 = vmatprep.subr.bf16.mxu0 %v279
    %651 = vmatpush1.bf16.msra.mxu0 %v278
    %652 = vmatprep.subr.bf16.mxu0 0
    %653 = vmatpush1.bf16.msra.mxu0 0
    %654 = vmatprep.subr.bf16.mxu0 0
    %655 = vmatpush1.bf16.msra.mxu0 0
    %656 = vmatprep.subr.bf16.mxu0 0
    %657 = vmatpush1.bf16.msra.mxu0 0
    %658 = vmatprep.subr.bf16.mxu0 0
    %659 = vmatpush1.bf16.msra.mxu0 0
    %660 = vmatprep.subr.bf16.mxu0 0
    %661 = vmatpush1.bf16.msra.mxu0 0
    %662 = vmatprep.subr.bf16.mxu0 0
    %663 = vmatpush1.bf16.msra.mxu0 0
    %664 = vmatprep.subr.bf16.mxu0 0
    %665 = vmatpush1.bf16.msra.mxu0 0
    %666 = vmatprep.subr.bf16.mxu0 0
    %667 = vmatpush1.bf16.msra.mxu0 0
    %668 = vmatprep.subr.bf16.mxu0 0
    %669 = vmatpush1.bf16.msra.mxu0 0
    %670 = vmatprep.subr.bf16.mxu0 0
    %671 = vmatpush1.bf16.msra.mxu0 0
    %672 = vmatprep.subr.bf16.mxu0 0
    %673 = vmatpush1.bf16.msra.mxu0 0
    %674 = vmatprep.subr.bf16.mxu0 0
    %675 = vmatpush1.bf16.msra.mxu0 0
    %676 = vmatprep.mubr.bf16.mxu0 0
    %677 = vmatmul.mubr.bf16.gmra.mrb[0].mxu0 %v642
    %v678 = vpop.f32.mrb[0].mxu0
    %v679 = vadd.f32 %v639, %v678
    %v680 = vpop.f32.mrb[0].mxu0
    %v681 = vadd.f32 %v640, %v680
    %v682 = vpop.f32.mrb[0].mxu0
    %v683 = vpop.f32.mrb[0].mxu0
    %684 = vdwg.mxu0
    %v685 = vxor.u32 %v679, 2147483648
    %v686 = vxor.u32 %v681, 2147483648
    %v687 = vmul.f32 %v685, 1.442695
    %v688 = vpow.pop %v687
    %v689 = vmul.f32 %v686, 1.442695
    %v690 = vpow.pop %v689
    %v691 = vadd.f32 %v688, 1.0
    %v692 = vadd.f32 %v690, 1.0
    %v693 = vrcp.pop %v691
    %v694 = vmul.f32 1.0, %v693
    %v695 = vrcp.pop %v692
    %v696 = vmul.f32 1.0, %v695
    %v697 = vtanh.pop %v679
    %v698 = vtanh.pop %v681
    %700 = vrot.lane.b32.xlu0 %v610, 32
    %v701 = vpop.permute.xlu0 %700
    %v703 = vmul.f32 %v694, %v701
    %705 = vrot.lane.b32.xlu0 %v697, 64
    %v706 = vpop.permute.xlu0 %705
    %v708 = vmul.f32 %v694, %v706
    %710 = vrot.lane.b32.xlu0 %v708, 32
    %v711 = vpop.permute.xlu0 %710
    %v713 = vadd.f32 %v703, %v711
    %v714 = vmul.f32 %v696, %v610
    %716 = vrot.lane.b32.xlu0 %v698, 64
    %v717 = vpop.permute.xlu0 %716
    %v719 = vmul.f32 %v696, %v717
    %721 = vrot.lane.b32.xlu0 %v719, 32
    %v722 = vpop.permute.xlu0 %721
    %v724 = vadd.f32 %v714, %v722
    %726 = vrot.lane.b32.xlu0 %v713, 96
    %v727 = vpop.permute.xlu0 %726
    %v729 = vsel %vm131, %v727, %v724
    %731 = vrot.lane.b32.xlu0 %v694, 32
    %v732 = vpop.permute.xlu0 %731
    %735 = vrot.lane.b32.xlu0 %v696, 64
    %v736 = vpop.permute.xlu0 %735
    %v738 = vsel %vm131, %v732, %v736
    %v739 = vtanh.pop %v729
    %v740 = vmul.f32 %v738, %v739
    %v741 = vpack.c.bf16 %v740, %v740
    %v743 = vrot.slane %v741, 4
    %745 = vst.msk [vmem:[#allocation3 + $0x8] sm:$0xf0] %vm393, %v743
    %746 = vrot.lane.b32.xlu0 %v741, 96
    %v747 = vpop.permute.xlu0 %746
    %749 = vst.msk [vmem:[#allocation4 + $0x10] sm:$0xf] %vm386, %v747
    %v750 = vld [vmem:[#allocation2 + $0x20] sm:$0xf]
    %v751 = vld [vmem:[#allocation2 + $0x18] sm:$0xf0]
    %v753 = vrot.slane %v751, 4
    %v755 = vunpack.c.l.bf16 %v750
    %v756 = vunpack.c.l.bf16 %v753
    %v758 = vsel %vm288, %v741, 0
    %760 = vmatprep.subr.bf16.mxu0 %v273
    %761 = vmatpush1.bf16.msra.mxu0 %v272
    %762 = vmatprep.subr.bf16.mxu0 %v275
    %763 = vmatpush1.bf16.msra.mxu0 %v274
    %764 = vmatprep.subr.bf16.mxu0 %v277
    %765 = vmatpush1.bf16.msra.mxu0 %v276
    %766 = vmatprep.subr.bf16.mxu0 %v279
    %767 = vmatpush1.bf16.msra.mxu0 %v278
    %768 = vmatprep.subr.bf16.mxu0 0
    %769 = vmatpush1.bf16.msra.mxu0 0
    %770 = vmatprep.subr.bf16.mxu0 0
    %771 = vmatpush1.bf16.msra.mxu0 0
    %772 = vmatprep.subr.bf16.mxu0 0
    %773 = vmatpush1.bf16.msra.mxu0 0
    %774 = vmatprep.subr.bf16.mxu0 0
    %775 = vmatpush1.bf16.msra.mxu0 0
    %776 = vmatprep.subr.bf16.mxu0 0
    %777 = vmatpush1.bf16.msra.mxu0 0
    %778 = vmatprep.subr.bf16.mxu0 0
    %779 = vmatpush1.bf16.msra.mxu0 0
    %780 = vmatprep.subr.bf16.mxu0 0
    %781 = vmatpush1.bf16.msra.mxu0 0
    %782 = vmatprep.subr.bf16.mxu0 0
    %783 = vmatpush1.bf16.msra.mxu0 0
    %784 = vmatprep.subr.bf16.mxu0 0
    %785 = vmatpush1.bf16.msra.mxu0 0
    %786 = vmatprep.subr.bf16.mxu0 0
    %787 = vmatpush1.bf16.msra.mxu0 0
    %788 = vmatprep.subr.bf16.mxu0 0
    %789 = vmatpush1.bf16.msra.mxu0 0
    %790 = vmatprep.subr.bf16.mxu0 0
    %791 = vmatpush1.bf16.msra.mxu0 0
    %792 = vmatprep.mubr.bf16.mxu0 0
    %793 = vmatmul.mubr.bf16.gmra.mrb[0].mxu0 %v758
    %v794 = vpop.f32.mrb[0].mxu0
    %v795 = vadd.f32 %v755, %v794
    %v796 = vpop.f32.mrb[0].mxu0
    %v797 = vadd.f32 %v756, %v796
    %v798 = vpop.f32.mrb[0].mxu0
    %v799 = vpop.f32.mrb[0].mxu0
    %800 = vdwg.mxu0
    %v801 = vxor.u32 %v795, 2147483648
    %v802 = vxor.u32 %v797, 2147483648
    %v803 = vmul.f32 %v801, 1.442695
    %v804 = vpow.pop %v803
    %v805 = vmul.f32 %v802, 1.442695
    %v806 = vpow.pop %v805
    %v807 = vadd.f32 %v804, 1.0
    %v808 = vadd.f32 %v806, 1.0
    %v809 = vrcp.pop %v807
    %v810 = vmul.f32 1.0, %v809
    %v811 = vrcp.pop %v808
    %v812 = vmul.f32 1.0, %v811
    %v813 = vtanh.pop %v795
    %v814 = vtanh.pop %v797
    %816 = vrot.lane.b32.xlu0 %v729, 32
    %v817 = vpop.permute.xlu0 %816
    %v819 = vmul.f32 %v810, %v817
    %821 = vrot.lane.b32.xlu0 %v813, 64
    %v822 = vpop.permute.xlu0 %821
    %v824 = vmul.f32 %v810, %v822
    %826 = vrot.lane.b32.xlu0 %v824, 32
    %v827 = vpop.permute.xlu0 %826
    %v829 = vadd.f32 %v819, %v827
    %v830 = vmul.f32 %v812, %v729
    %832 = vrot.lane.b32.xlu0 %v814, 64
    %v833 = vpop.permute.xlu0 %832
    %v835 = vmul.f32 %v812, %v833
    %837 = vrot.lane.b32.xlu0 %v835, 32
    %v838 = vpop.permute.xlu0 %837
    %v840 = vadd.f32 %v830, %v838
    %842 = vrot.lane.b32.xlu0 %v829, 96
    %v843 = vpop.permute.xlu0 %842
    %v845 = vsel %vm131, %v843, %v840
    %847 = vrot.lane.b32.xlu0 %v810, 32
    %v848 = vpop.permute.xlu0 %847
    %851 = vrot.lane.b32.xlu0 %v812, 64
    %v852 = vpop.permute.xlu0 %851
    %v854 = vsel %vm131, %v848, %v852
    %v855 = vtanh.pop %v845
    %v856 = vmul.f32 %v854, %v855
    %v857 = vpack.c.bf16 %v856, %v856
    %858 = vst.msk [vmem:[#allocation3 + $0x10] sm:$0xf] %vm386, %v857
    %v860 = vrot.slane %v857, 4
    %861 = vrot.lane.b32.xlu0 %v860, 96
    %v862 = vpop.permute.xlu0 %861
    %864 = vst.msk [vmem:[#allocation4 + $0x8] sm:$0xf0] %vm393, %v862
    %v865 = vld [vmem:[#allocation2 + $0x20] sm:$0xf0]
    %v866 = vld [vmem:[#allocation2 + $0x18] sm:$0xf]
    %v868 = vrot.slane %v866, 4
    %v870 = vrot.slane %v865, 4
    %v871 = vrot.slane %v868, 4
    %v874 = vunpack.c.l.bf16 %v870
    %v875 = vunpack.c.l.bf16 %v871
    %v877 = vsel %vm288, %v857, 0
    %879 = vmatprep.subr.bf16.mxu0 %v273
    %880 = vmatpush1.bf16.msra.mxu0 %v272
    %881 = vmatprep.subr.bf16.mxu0 %v275
    %882 = vmatpush1.bf16.msra.mxu0 %v274
    %883 = vmatprep.subr.bf16.mxu0 %v277
    %884 = vmatpush1.bf16.msra.mxu0 %v276
    %885 = vmatprep.subr.bf16.mxu0 %v279
    %886 = vmatpush1.bf16.msra.mxu0 %v278
    %887 = vmatprep.subr.bf16.mxu0 0
    %888 = vmatpush1.bf16.msra.mxu0 0
    %889 = vmatprep.subr.bf16.mxu0 0
    %890 = vmatpush1.bf16.msra.mxu0 0
    %891 = vmatprep.subr.bf16.mxu0 0
    %892 = vmatpush1.bf16.msra.mxu0 0
    %893 = vmatprep.subr.bf16.mxu0 0
    %894 = vmatpush1.bf16.msra.mxu0 0
    %895 = vmatprep.subr.bf16.mxu0 0
    %896 = vmatpush1.bf16.msra.mxu0 0
    %897 = vmatprep.subr.bf16.mxu0 0
    %898 = vmatpush1.bf16.msra.mxu0 0
    %899 = vmatprep.subr.bf16.mxu0 0
    %900 = vmatpush1.bf16.msra.mxu0 0
    %901 = vmatprep.subr.bf16.mxu0 0
    %902 = vmatpush1.bf16.msra.mxu0 0
    %903 = vmatprep.subr.bf16.mxu0 0
    %904 = vmatpush1.bf16.msra.mxu0 0
    %905 = vmatprep.subr.bf16.mxu0 0
    %906 = vmatpush1.bf16.msra.mxu0 0
    %907 = vmatprep.subr.bf16.mxu0 0
    %908 = vmatpush1.bf16.msra.mxu0 0
    %909 = vmatprep.subr.bf16.mxu0 0
    %910 = vmatpush1.bf16.msra.mxu0 0
    %911 = vmatprep.mubr.bf16.mxu0 0
    %912 = vmatmul.mubr.bf16.gmra.mrb[0].mxu0 %v877
    %v913 = vpop.f32.mrb[0].mxu0
    %v914 = vadd.f32 %v874, %v913
    %v915 = vpop.f32.mrb[0].mxu0
    %v916 = vadd.f32 %v875, %v915
    %v917 = vpop.f32.mrb[0].mxu0
    %v918 = vpop.f32.mrb[0].mxu0
    %919 = vdwg.mxu0
    %v920 = vxor.u32 %v914, 2147483648
    %v921 = vxor.u32 %v916, 2147483648
    %v922 = vmul.f32 %v920, 1.442695
    %v923 = vpow.pop %v922
    %v924 = vmul.f32 %v921, 1.442695
    %v925 = vpow.pop %v924
    %v926 = vadd.f32 %v923, 1.0
    %v927 = vadd.f32 %v925, 1.0
    %v928 = vrcp.pop %v926
    %v929 = vmul.f32 1.0, %v928
    %v930 = vrcp.pop %v927
    %v931 = vmul.f32 1.0, %v930
    %v932 = vtanh.pop %v914
    %v933 = vtanh.pop %v916
    %935 = vrot.lane.b32.xlu0 %v845, 32
    %v936 = vpop.permute.xlu0 %935
    %v938 = vmul.f32 %v929, %v936
    %940 = vrot.lane.b32.xlu0 %v932, 64
    %v941 = vpop.permute.xlu0 %940
    %v943 = vmul.f32 %v929, %v941
    %945 = vrot.lane.b32.xlu0 %v943, 32
    %v946 = vpop.permute.xlu0 %945
    %v948 = vadd.f32 %v938, %v946
    %v949 = vmul.f32 %v931, %v845
    %951 = vrot.lane.b32.xlu0 %v933, 64
    %v952 = vpop.permute.xlu0 %951
    %v954 = vmul.f32 %v931, %v952
    %956 = vrot.lane.b32.xlu0 %v954, 32
    %v957 = vpop.permute.xlu0 %956
    %v959 = vadd.f32 %v949, %v957
    %961 = vrot.lane.b32.xlu0 %v948, 96
    %v962 = vpop.permute.xlu0 %961
    %v964 = vsel %vm131, %v962, %v959
    %966 = vrot.lane.b32.xlu0 %v929, 32
    %v967 = vpop.permute.xlu0 %966
    %970 = vrot.lane.b32.xlu0 %v931, 64
    %v971 = vpop.permute.xlu0 %970
    %v973 = vsel %vm131, %v967, %v971
    %v974 = vtanh.pop %v964
    %v975 = vmul.f32 %v973, %v974
    %v976 = vpack.c.bf16 %v975, %v975
    %v978 = vrot.slane %v976, 4
    %980 = vst.msk [vmem:[#allocation3 + $0x10] sm:$0xf0] %vm393, %v978
    %981 = vrot.lane.b32.xlu0 %v976, 96
    %v982 = vpop.permute.xlu0 %981
    %984 = vst.msk [vmem:[#allocation4 + $0x8] sm:$0xf] %vm386, %v982
    %v985 = vld [vmem:[#allocation2 + $0x30] sm:$0xf]
    %v986 = vld [vmem:[#allocation2 + $0x8] sm:$0xf0]
    %v988 = vrot.slane %v986, 4
    %v990 = vunpack.c.l.bf16 %v985
    %v991 = vunpack.c.l.bf16 %v988
    %v993 = vsel %vm288, %v976, 0
    %995 = vmatprep.subr.bf16.mxu0 %v273
    %996 = vmatpush1.bf16.msra.mxu0 %v272
    %997 = vmatprep.subr.bf16.mxu0 %v275
    %998 = vmatpush1.bf16.msra.mxu0 %v274
    %999 = vmatprep.subr.bf16.mxu0 %v277
    %1000 = vmatpush1.bf16.msra.mxu0 %v276
    %1001 = vmatprep.subr.bf16.mxu0 %v279
    %1002 = vmatpush1.bf16.msra.mxu0 %v278
    %1003 = vmatprep.subr.bf16.mxu0 0
    %1004 = vmatpush1.bf16.msra.mxu0 0
    %1005 = vmatprep.subr.bf16.mxu0 0
    %1006 = vmatpush1.bf16.msra.mxu0 0
    %1007 = vmatprep.subr.bf16.mxu0 0
    %1008 = vmatpush1.bf16.msra.mxu0 0
    %1009 = vmatprep.subr.bf16.mxu0 0
    %1010 = vmatpush1.bf16.msra.mxu0 0
    %1011 = vmatprep.subr.bf16.mxu0 0
    %1012 = vmatpush1.bf16.msra.mxu0 0
    %1013 = vmatprep.subr.bf16.mxu0 0
    %1014 = vmatpush1.bf16.msra.mxu0 0
    %1015 = vmatprep.subr.bf16.mxu0 0
    %1016 = vmatpush1.bf16.msra.mxu0 0
    %1017 = vmatprep.subr.bf16.mxu0 0
    %1018 = vmatpush1.bf16.msra.mxu0 0
    %1019 = vmatprep.subr.bf16.mxu0 0
    %1020 = vmatpush1.bf16.msra.mxu0 0
    %1021 = vmatprep.subr.bf16.mxu0 0
    %1022 = vmatpush1.bf16.msra.mxu0 0
    %1023 = vmatprep.subr.bf16.mxu0 0
    %1024 = vmatpush1.bf16.msra.mxu0 0
    %1025 = vmatprep.subr.bf16.mxu0 0
    %1026 = vmatpush1.bf16.msra.mxu0 0
    %1027 = vmatprep.mubr.bf16.mxu0 0
    %1028 = vmatmul.mubr.bf16.gmra.mrb[0].mxu0 %v993
    %v1029 = vpop.f32.mrb[0].mxu0
    %v1030 = vadd.f32 %v990, %v1029
    %v1031 = vpop.f32.mrb[0].mxu0
    %v1032 = vadd.f32 %v991, %v1031
    %v1033 = vpop.f32.mrb[0].mxu0
    %v1034 = vpop.f32.mrb[0].mxu0
    %1035 = vdwg.mxu0
    %v1036 = vxor.u32 %v1030, 2147483648
    %v1037 = vxor.u32 %v1032, 2147483648
    %v1038 = vmul.f32 %v1036, 1.442695
    %v1039 = vpow.pop %v1038
    %v1040 = vmul.f32 %v1037, 1.442695
    %v1041 = vpow.pop %v1040
    %v1042 = vadd.f32 %v1039, 1.0
    %v1043 = vadd.f32 %v1041, 1.0
    %v1044 = vrcp.pop %v1042
    %v1045 = vmul.f32 1.0, %v1044
    %v1046 = vrcp.pop %v1043
    %v1047 = vmul.f32 1.0, %v1046
    %v1048 = vtanh.pop %v1030
    %v1049 = vtanh.pop %v1032
    %1051 = vrot.lane.b32.xlu0 %v964, 32
    %v1052 = vpop.permute.xlu0 %1051
    %v1054 = vmul.f32 %v1045, %v1052
    %1056 = vrot.lane.b32.xlu0 %v1048, 64
    %v1057 = vpop.permute.xlu0 %1056
    %v1059 = vmul.f32 %v1045, %v1057
    %1061 = vrot.lane.b32.xlu0 %v1059, 32
    %v1062 = vpop.permute.xlu0 %1061
    %v1064 = vadd.f32 %v1054, %v1062
    %v1065 = vmul.f32 %v1047, %v964
    %1067 = vrot.lane.b32.xlu0 %v1049, 64
    %v1068 = vpop.permute.xlu0 %1067
    %v1070 = vmul.f32 %v1047, %v1068
    %1072 = vrot.lane.b32.xlu0 %v1070, 32
    %v1073 = vpop.permute.xlu0 %1072
    %v1075 = vadd.f32 %v1065, %v1073
    %1077 = vrot.lane.b32.xlu0 %v1064, 96
    %v1078 = vpop.permute.xlu0 %1077
    %v1080 = vsel %vm131, %v1078, %v1075
    %1082 = vrot.lane.b32.xlu0 %v1045, 32
    %v1083 = vpop.permute.xlu0 %1082
    %1086 = vrot.lane.b32.xlu0 %v1047, 64
    %v1087 = vpop.permute.xlu0 %1086
    %v1089 = vsel %vm131, %v1083, %v1087
    %v1090 = vtanh.pop %v1080
    %v1091 = vmul.f32 %v1089, %v1090
    %v1092 = vpack.c.bf16 %v1091, %v1091
    %1093 = vst.msk [vmem:[#allocation3 + $0x18] sm:$0xf] %vm386, %v1092
    %v1095 = vrot.slane %v1092, 4
    %1096 = vrot.lane.b32.xlu0 %v1095, 96
    %v1097 = vpop.permute.xlu0 %1096
    %1099 = vst.msk [vmem:[#allocation4] sm:$0xf0] %vm393, %v1097
    %v1100 = vld [vmem:[#allocation2 + $0x30] sm:$0xf0]
    %v1101 = vld [vmem:[#allocation2 + $0x8] sm:$0xf]
    %v1103 = vrot.slane %v1101, 4
    %v1105 = vrot.slane %v1100, 4
    %v1106 = vrot.slane %v1103, 4
    %v1109 = vunpack.c.l.bf16 %v1105
    %v1110 = vunpack.c.l.bf16 %v1106
    %v1112 = vsel %vm288, %v1092, 0
    %1114 = vmatprep.subr.bf16.mxu0 %v273
    %1115 = vmatpush1.bf16.msra.mxu0 %v272
    %1116 = vmatprep.subr.bf16.mxu0 %v275
    %1117 = vmatpush1.bf16.msra.mxu0 %v274
    %1118 = vmatprep.subr.bf16.mxu0 %v277
    %1119 = vmatpush1.bf16.msra.mxu0 %v276
    %1120 = vmatprep.subr.bf16.mxu0 %v279
    %1121 = vmatpush1.bf16.msra.mxu0 %v278
    %1122 = vmatprep.subr.bf16.mxu0 0
    %1123 = vmatpush1.bf16.msra.mxu0 0
    %1124 = vmatprep.subr.bf16.mxu0 0
    %1125 = vmatpush1.bf16.msra.mxu0 0
    %1126 = vmatprep.subr.bf16.mxu0 0
    %1127 = vmatpush1.bf16.msra.mxu0 0
    %1128 = vmatprep.subr.bf16.mxu0 0
    %1129 = vmatpush1.bf16.msra.mxu0 0
    %1130 = vmatprep.subr.bf16.mxu0 0
    %1131 = vmatpush1.bf16.msra.mxu0 0
    %1132 = vmatprep.subr.bf16.mxu0 0
    %1133 = vmatpush1.bf16.msra.mxu0 0
    %1134 = vmatprep.subr.bf16.mxu0 0
    %1135 = vmatpush1.bf16.msra.mxu0 0
    %1136 = vmatprep.subr.bf16.mxu0 0
    %1137 = vmatpush1.bf16.msra.mxu0 0
    %1138 = vmatprep.subr.bf16.mxu0 0
    %1139 = vmatpush1.bf16.msra.mxu0 0
    %1140 = vmatprep.subr.bf16.mxu0 0
    %1141 = vmatpush1.bf16.msra.mxu0 0
    %1142 = vmatprep.subr.bf16.mxu0 0
    %1143 = vmatpush1.bf16.msra.mxu0 0
    %1144 = vmatprep.subr.bf16.mxu0 0
    %1145 = vmatpush1.bf16.msra.mxu0 0
    %1146 = vmatprep.mubr.bf16.mxu0 0
    %1147 = vmatmul.mubr.bf16.gmra.mrb[0].mxu0 %v1112
    %v1148 = vpop.f32.mrb[0].mxu0
    %v1149 = vadd.f32 %v1109, %v1148
    %v1150 = vpop.f32.mrb[0].mxu0
    %v1151 = vadd.f32 %v1110, %v1150
    %v1152 = vpop.f32.mrb[0].mxu0
    %v1153 = vpop.f32.mrb[0].mxu0
    %1154 = vdwg.mxu0
    %v1155 = vxor.u32 %v1149, 2147483648
    %v1156 = vxor.u32 %v1151, 2147483648
    %v1157 = vmul.f32 %v1155, 1.442695
    %v1158 = vpow.pop %v1157
    %v1159 = vmul.f32 %v1156, 1.442695
    %v1160 = vpow.pop %v1159
    %v1161 = vadd.f32 %v1158, 1.0
    %v1162 = vadd.f32 %v1160, 1.0
    %v1163 = vrcp.pop %v1161
    %v1164 = vmul.f32 1.0, %v1163
    %v1165 = vrcp.pop %v1162
    %v1166 = vmul.f32 1.0, %v1165
    %v1167 = vtanh.pop %v1149
    %v1168 = vtanh.pop %v1151
    %1170 = vrot.lane.b32.xlu0 %v1080, 32
    %v1171 = vpop.permute.xlu0 %1170
    %v1173 = vmul.f32 %v1164, %v1171
    %1175 = vrot.lane.b32.xlu0 %v1167, 64
    %v1176 = vpop.permute.xlu0 %1175
    %v1178 = vmul.f32 %v1164, %v1176
    %1180 = vrot.lane.b32.xlu0 %v1178, 32
    %v1181 = vpop.permute.xlu0 %1180
    %v1183 = vadd.f32 %v1173, %v1181
    %v1184 = vmul.f32 %v1166, %v1080
    %1186 = vrot.lane.b32.xlu0 %v1168, 64
    %v1187 = vpop.permute.xlu0 %1186
    %v1189 = vmul.f32 %v1166, %v1187
    %1191 = vrot.lane.b32.xlu0 %v1189, 32
    %v1192 = vpop.permute.xlu0 %1191
    %v1194 = vadd.f32 %v1184, %v1192
    %1196 = vrot.lane.b32.xlu0 %v1183, 96
    %v1197 = vpop.permute.xlu0 %1196
    %v1199 = vsel %vm131, %v1197, %v1194
    %1201 = vrot.lane.b32.xlu0 %v1164, 32
    %v1202 = vpop.permute.xlu0 %1201
    %1205 = vrot.lane.b32.xlu0 %v1166, 64
    %v1206 = vpop.permute.xlu0 %1205
    %v1208 = vsel %vm131, %v1202, %v1206
    %v1209 = vtanh.pop %v1199
    %v1210 = vmul.f32 %v1208, %v1209
    %v1211 = vpack.c.bf16 %v1210, %v1210
    %v1213 = vrot.slane %v1211, 4
    %1215 = vst.msk [vmem:[#allocation3 + $0x18] sm:$0xf0] %vm393, %v1213
    %1216 = vrot.lane.b32.xlu0 %v1211, 96
    %v1217 = vpop.permute.xlu0 %1216
    %1219 = vst.msk [vmem:[#allocation4] sm:$0xf] %vm386, %v1217
    %v1220 = vld [vmem:[%s4] sm:$0xff]
    %v1221 = vld [vmem:[%s4 + $0x8] sm:$0xff]
    %v1222 = vld [vmem:[%s4 + $0x10] sm:$0xff]
    %v1223 = vld [vmem:[%s4 + $0x18] sm:$0xff]
    %v1224 = vld [vmem:[#allocation5] sm:$0xff]
    %v1225 = vld [vmem:[#allocation5 + $0x8] sm:$0xff]
    %v1226 = vld [vmem:[#allocation5 + $0x10] sm:$0xff]
    %v1227 = vld [vmem:[#allocation5 + $0x18] sm:$0xff]
    %v1228 = vld [vmem:[%s6] sm:$0x3]
    %v1229 = vld [vmem:[#allocation3] sm:$0xff]
    %v1230 = vld [vmem:[#allocation3 + $0x8] sm:$0xff]
    %v1231 = vld [vmem:[#allocation3 + $0x10] sm:$0xff]
    %v1232 = vld [vmem:[#allocation3 + $0x18] sm:$0xff]
    %v1233 = vld [vmem:[#allocation4] sm:$0xff]
    %v1234 = vld [vmem:[#allocation4 + $0x8] sm:$0xff]
    %v1235 = vld [vmem:[#allocation4 + $0x10] sm:$0xff]
    %v1236 = vld [vmem:[#allocation4 + $0x18] sm:$0xff]
    %v1241 = vunpack.c.l.b16 %v1224
    %v1242 = vunpack.c.h.b16 %v1224
    %v1243 = vunpack.c.l.b16 %v1225
    %v1244 = vunpack.c.h.b16 %v1225
    %v1245 = vunpack.c.l.b16 %v1226
    %v1246 = vunpack.c.h.b16 %v1226
    %v1247 = vunpack.c.l.b16 %v1227
    %v1248 = vunpack.c.h.b16 %v1227
    %v1249 = vpack.c.b16 %v1243, %v1241
    %v1250 = vpack.c.b16 %v1244, %v1242
    %v1251 = vpack.c.b16 %v1247, %v1245
    %v1252 = vpack.c.b16 %v1248, %v1246
    %v1258 = vsel %vm131, %v1233, 0
    %v1261 = vsel %vm131, %v1234, 0
    %v1264 = vsel %vm131, %v1235, 0
    %v1267 = vsel %vm131, %v1236, 0
    %1269 = vmatprep.subr.bf16.mxu0 %v1250
    %1270 = vmatpush1.bf16.msra.mxu0 %v1249
    %1271 = vmatprep.subr.bf16.mxu0 %v1252
    %1272 = vmatpush1.bf16.msra.mxu0 %v1251
    %1273 = vmatprep.subr.bf16.mxu0 0
    %1274 = vmatpush1.bf16.msra.mxu0 0
    %1275 = vmatprep.subr.bf16.mxu0 0
    %1276 = vmatpush1.bf16.msra.mxu0 0
    %1277 = vmatprep.subr.bf16.mxu0 0
    %1278 = vmatpush1.bf16.msra.mxu0 0
    %1279 = vmatprep.subr.bf16.mxu0 0
    %1280 = vmatpush1.bf16.msra.mxu0 0
    %1281 = vmatprep.subr.bf16.mxu0 0
    %1282 = vmatpush1.bf16.msra.mxu0 0
    %1283 = vmatprep.subr.bf16.mxu0 0
    %1284 = vmatpush1.bf16.msra.mxu0 0
    %1285 = vmatprep.subr.bf16.mxu0 0
    %1286 = vmatpush1.bf16.msra.mxu0 0
    %1287 = vmatprep.subr.bf16.mxu0 0
    %1288 = vmatpush1.bf16.msra.mxu0 0
    %1289 = vmatprep.subr.bf16.mxu0 0
    %1290 = vmatpush1.bf16.msra.mxu0 0
    %1291 = vmatprep.subr.bf16.mxu0 0
    %1292 = vmatpush1.bf16.msra.mxu0 0
    %1293 = vmatprep.subr.bf16.mxu0 0
    %1294 = vmatpush1.bf16.msra.mxu0 0
    %1295 = vmatprep.subr.bf16.mxu0 0
    %1296 = vmatpush1.bf16.msra.mxu0 0
    %1297 = vmatprep.subr.bf16.mxu0 0
    %1298 = vmatpush1.bf16.msra.mxu0 0
    %1299 = vmatprep.subr.bf16.mxu0 0
    %1300 = vmatpush1.bf16.msra.mxu0 0
    %1301 = vmatprep.mubr.bf16.mxu0 0
    %1302 = vmatmul.mubr.bf16.gmra.mrb[0].mxu0 %v1258
    %v1303 = vpop.f32.mrb[0].mxu0
    %v1304 = vadd.f32 0.0, %v1303
    %v1305 = vpop.f32.mrb[0].mxu0
    %v1306 = vadd.f32 0.0, %v1305
    %v1307 = vpop.f32.mrb[0].mxu0
    %v1308 = vadd.f32 0.0, %v1307
    %v1309 = vpop.f32.mrb[0].mxu0
    %v1310 = vadd.f32 0.0, %v1309
    %1311 = vmatprep.mubr.bf16.mxu0 0
    %1312 = vmatmul.mubr.bf16.gmra.mrb[0].mxu0 %v1261
    %v1313 = vpop.f32.mrb[0].mxu0
    %v1314 = vadd.f32 0.0, %v1313
    %v1315 = vpop.f32.mrb[0].mxu0
    %v1316 = vadd.f32 0.0, %v1315
    %v1317 = vpop.f32.mrb[0].mxu0
    %v1318 = vadd.f32 0.0, %v1317
    %v1319 = vpop.f32.mrb[0].mxu0
    %v1320 = vadd.f32 0.0, %v1319
    %1321 = vmatprep.mubr.bf16.mxu0 0
    %1322 = vmatmul.mubr.bf16.gmra.mrb[0].mxu0 %v1264
    %v1323 = vpop.f32.mrb[0].mxu0
    %v1324 = vadd.f32 0.0, %v1323
    %v1325 = vpop.f32.mrb[0].mxu0
    %v1326 = vadd.f32 0.0, %v1325
    %v1327 = vpop.f32.mrb[0].mxu0
    %v1328 = vadd.f32 0.0, %v1327
    %v1329 = vpop.f32.mrb[0].mxu0
    %v1330 = vadd.f32 0.0, %v1329
    %1331 = vmatprep.mubr.bf16.mxu0 0
    %1332 = vmatmul.mubr.bf16.gmra.mrb[0].mxu0 %v1267
    %v1333 = vpop.f32.mrb[0].mxu0
    %v1334 = vadd.f32 0.0, %v1333
    %v1335 = vpop.f32.mrb[0].mxu0
    %v1336 = vadd.f32 0.0, %v1335
    %v1337 = vpop.f32.mrb[0].mxu0
    %v1338 = vadd.f32 0.0, %v1337
    %v1339 = vpop.f32.mrb[0].mxu0
    %v1340 = vadd.f32 0.0, %v1339
    %1341 = vdwg.mxu0
    %v1346 = vunpack.c.l.b16 %v1220
    %v1347 = vunpack.c.h.b16 %v1220
    %v1348 = vunpack.c.l.b16 %v1221
    %v1349 = vunpack.c.h.b16 %v1221
    %v1350 = vunpack.c.l.b16 %v1222
    %v1351 = vunpack.c.h.b16 %v1222
    %v1352 = vunpack.c.l.b16 %v1223
    %v1353 = vunpack.c.h.b16 %v1223
    %v1354 = vpack.c.b16 %v1348, %v1346
    %v1355 = vpack.c.b16 %v1349, %v1347
    %v1356 = vpack.c.b16 %v1352, %v1350
    %v1357 = vpack.c.b16 %v1353, %v1351
    %v1363 = vsel %vm131, %v1229, 0
    %v1366 = vsel %vm131, %v1230, 0
    %v1369 = vsel %vm131, %v1231, 0
    %v1372 = vsel %vm131, %v1232, 0
    %1374 = vmatprep.subr.bf16.mxu0 %v1355
    %1375 = vmatpush1.bf16.msra.mxu0 %v1354
    %1376 = vmatprep.subr.bf16.mxu0 %v1357
    %1377 = vmatpush1.bf16.msra.mxu0 %v1356
    %1378 = vmatprep.subr.bf16.mxu0 0
    %1379 = vmatpush1.bf16.msra.mxu0 0
    %1380 = vmatprep.subr.bf16.mxu0 0
    %1381 = vmatpush1.bf16.msra.mxu0 0
    %1382 = vmatprep.subr.bf16.mxu0 0
    %1383 = vmatpush1.bf16.msra.mxu0 0
    %1384 = vmatprep.subr.bf16.mxu0 0
    %1385 = vmatpush1.bf16.msra.mxu0 0
    %1386 = vmatprep.subr.bf16.mxu0 0
    %1387 = vmatpush1.bf16.msra.mxu0 0
    %1388 = vmatprep.subr.bf16.mxu0 0
    %1389 = vmatpush1.bf16.msra.mxu0 0
    %1390 = vmatprep.subr.bf16.mxu0 0
    %1391 = vmatpush1.bf16.msra.mxu0 0
    %1392 = vmatprep.subr.bf16.mxu0 0
    %1393 = vmatpush1.bf16.msra.mxu0 0
    %1394 = vmatprep.subr.bf16.mxu0 0
    %1395 = vmatpush1.bf16.msra.mxu0 0
    %1396 = vmatprep.subr.bf16.mxu0 0
    %1397 = vmatpush1.bf16.msra.mxu0 0
    %1398 = vmatprep.subr.bf16.mxu0 0
    %1399 = vmatpush1.bf16.msra.mxu0 0
    %1400 = vmatprep.subr.bf16.mxu0 0
    %1401 = vmatpush1.bf16.msra.mxu0 0
    %1402 = vmatprep.subr.bf16.mxu0 0
    %1403 = vmatpush1.bf16.msra.mxu0 0
    %1404 = vmatprep.subr.bf16.mxu0 0
    %1405 = vmatpush1.bf16.msra.mxu0 0
    %1406 = vmatprep.mubr.bf16.mxu0 0
    %1407 = vmatmul.mubr.bf16.gmra.mrb[0].mxu0 %v1363
    %v1408 = vpop.f32.mrb[0].mxu0
    %v1409 = vadd.f32 %v1304, %v1408
    %v1410 = vpop.f32.mrb[0].mxu0
    %v1411 = vadd.f32 %v1306, %v1410
    %v1412 = vpop.f32.mrb[0].mxu0
    %v1413 = vadd.f32 %v1308, %v1412
    %v1414 = vpop.f32.mrb[0].mxu0
    %v1415 = vadd.f32 %v1310, %v1414
    %1416 = vmatprep.mubr.bf16.mxu0 0
    %1417 = vmatmul.mubr.bf16.gmra.mrb[0].mxu0 %v1366
    %v1418 = vpop.f32.mrb[0].mxu0
    %v1419 = vadd.f32 %v1314, %v1418
    %v1420 = vpop.f32.mrb[0].mxu0
    %v1421 = vadd.f32 %v1316, %v1420
    %v1422 = vpop.f32.mrb[0].mxu0
    %v1423 = vadd.f32 %v1318, %v1422
    %v1424 = vpop.f32.mrb[0].mxu0
    %v1425 = vadd.f32 %v1320, %v1424
    %1426 = vmatprep.mubr.bf16.mxu0 0
    %1427 = vmatmul.mubr.bf16.gmra.mrb[0].mxu0 %v1369
    %v1428 = vpop.f32.mrb[0].mxu0
    %v1429 = vadd.f32 %v1324, %v1428
    %v1430 = vpop.f32.mrb[0].mxu0
    %v1431 = vadd.f32 %v1326, %v1430
    %v1432 = vpop.f32.mrb[0].mxu0
    %v1433 = vadd.f32 %v1328, %v1432
    %v1434 = vpop.f32.mrb[0].mxu0
    %v1435 = vadd.f32 %v1330, %v1434
    %1436 = vmatprep.mubr.bf16.mxu0 0
    %1437 = vmatmul.mubr.bf16.gmra.mrb[0].mxu0 %v1372
    %v1438 = vpop.f32.mrb[0].mxu0
    %v1439 = vadd.f32 %v1334, %v1438
    %v1440 = vpop.f32.mrb[0].mxu0
    %v1441 = vadd.f32 %v1336, %v1440
    %v1442 = vpop.f32.mrb[0].mxu0
    %v1443 = vadd.f32 %v1338, %v1442
    %v1444 = vpop.f32.mrb[0].mxu0
    %v1445 = vadd.f32 %v1340, %v1444
    %1446 = vdwg.mxu0
    %v1448 = vlaneseq
    %v1449 = vshrl.u32 %v1448, 7
    %v1450 = vsub.s32 0, %v1449
    %v1451 = vrot.slane %v1228, %v1450
    %v1452 = vlaneseq
    %v1453 = vshrl.u32 %v1452, 7
    %v1454 = vsub.s32 1, %v1453
    %v1455 = vrot.slane %v1228, %v1454
    %v1458 = vadd.f32 %v1409, %v1451
    %v1459 = vadd.f32 %v1411, %v1455
    %v1460 = vadd.f32 %v1413, %v1451
    %v1461 = vadd.f32 %v1415, %v1455
    %v1462 = vadd.f32 %v1419, %v1451
    %v1463 = vadd.f32 %v1421, %v1455
    %v1464 = vadd.f32 %v1423, %v1451
    %v1465 = vadd.f32 %v1425, %v1455
    %v1466 = vadd.f32 %v1429, %v1451
    %v1467 = vadd.f32 %v1431, %v1455
    %v1468 = vadd.f32 %v1433, %v1451
    %v1469 = vadd.f32 %v1435, %v1455
    %v1470 = vadd.f32 %v1439, %v1451
    %v1471 = vadd.f32 %v1441, %v1455
    %v1472 = vadd.f32 %v1443, %v1451
    %v1473 = vadd.f32 %v1445, %v1455
    %v1474 = vpack.c.bf16 %v1460, %v1458
    %v1475 = vpack.c.bf16 %v1461, %v1459
    %v1476 = vpack.c.bf16 %v1464, %v1462
    %v1477 = vpack.c.bf16 %v1465, %v1463
    %v1478 = vpack.c.bf16 %v1468, %v1466
    %v1479 = vpack.c.bf16 %v1469, %v1467
    %v1480 = vpack.c.bf16 %v1472, %v1470
    %v1481 = vpack.c.bf16 %v1473, %v1471
    %1482 = vst [vmem:[#allocation2] sm:$0xff] %v1474
    %1483 = vst [vmem:[#allocation2 + $0x8] sm:$0xff] %v1475
    %1484 = vst [vmem:[#allocation2 + $0x10] sm:$0xff] %v1476
    %1485 = vst [vmem:[#allocation2 + $0x18] sm:$0xff] %v1477
    %1486 = vst [vmem:[#allocation2 + $0x20] sm:$0xff] %v1478
    %1487 = vst [vmem:[#allocation2 + $0x28] sm:$0xff] %v1479
    %1488 = vst [vmem:[#allocation2 + $0x30] sm:$0xff] %v1480
    %1489 = vst [vmem:[#allocation2 + $0x38] sm:$0xff] %v1481
    %s1490 = scalar_lea.vmem [#allocation7], 64
    %v1491 = vld [vmem:[%s1490] sm:$0xff]
    %v1492 = vld [vmem:[%s1490 + $0x8] sm:$0xff]
    %v1493 = vld [vmem:[%s1490 + $0x10] sm:$0xff]
    %v1494 = vld [vmem:[%s1490 + $0x18] sm:$0xff]
    %v1495 = vld [vmem:[%s1490 + $0x20] sm:$0xff]
    %v1496 = vld [vmem:[%s1490 + $0x28] sm:$0xff]
    %v1497 = vld [vmem:[%s1490 + $0x30] sm:$0xff]
    %v1498 = vld [vmem:[%s1490 + $0x38] sm:$0xff]
    %v1499 = vld [vmem:[#allocation2] sm:$0xf]
    %v1500 = vld [vmem:[#allocation2 + $0x38] sm:$0xf0]
    %v1502 = vrot.slane %v1500, 4
    %v1504 = vunpack.c.l.bf16 %v1499
    %v1505 = vunpack.c.l.bf16 %v1502
    %v1514 = vunpack.c.l.b16 %v1491
    %v1515 = vunpack.c.h.b16 %v1491
    %v1516 = vunpack.c.l.b16 %v1492
    %v1517 = vunpack.c.h.b16 %v1492
    %v1518 = vunpack.c.l.b16 %v1493
    %v1519 = vunpack.c.h.b16 %v1493
    %v1520 = vunpack.c.l.b16 %v1494
    %v1521 = vunpack.c.h.b16 %v1494
    %v1522 = vunpack.c.l.b16 %v1495
    %v1523 = vunpack.c.h.b16 %v1495
    %v1524 = vunpack.c.l.b16 %v1496
    %v1525 = vunpack.c.h.b16 %v1496
    %v1526 = vunpack.c.l.b16 %v1497
    %v1527 = vunpack.c.h.b16 %v1497
    %v1528 = vunpack.c.l.b16 %v1498
    %v1529 = vunpack.c.h.b16 %v1498
    %v1530 = vpack.c.b16 %v1516, %v1514
    %v1531 = vpack.c.b16 %v1517, %v1515
    %v1532 = vpack.c.b16 %v1520, %v1518
    %v1533 = vpack.c.b16 %v1521, %v1519
    %v1534 = vpack.c.b16 %v1524, %v1522
    %v1535 = vpack.c.b16 %v1525, %v1523
    %v1536 = vpack.c.b16 %v1528, %v1526
    %v1537 = vpack.c.b16 %v1529, %v1527
    %1546 = vmatprep.subr.bf16.mxu0 %v1531
    %1547 = vmatpush1.bf16.msra.mxu0 %v1530
    %1548 = vmatprep.subr.bf16.mxu0 %v1533
    %1549 = vmatpush1.bf16.msra.mxu0 %v1532
    %1550 = vmatprep.subr.bf16.mxu0 %v1535
    %1551 = vmatpush1.bf16.msra.mxu0 %v1534
    %1552 = vmatprep.subr.bf16.mxu0 %v1537
    %1553 = vmatpush1.bf16.msra.mxu0 %v1536
    %1554 = vmatprep.subr.bf16.mxu0 0
    %1555 = vmatpush1.bf16.msra.mxu0 0
    %1556 = vmatprep.subr.bf16.mxu0 0
    %1557 = vmatpush1.bf16.msra.mxu0 0
    %1558 = vmatprep.subr.bf16.mxu0 0
    %1559 = vmatpush1.bf16.msra.mxu0 0
    %1560 = vmatprep.subr.bf16.mxu0 0
    %1561 = vmatpush1.bf16.msra.mxu0 0
    %1562 = vmatprep.subr.bf16.mxu0 0
    %1563 = vmatpush1.bf16.msra.mxu0 0
    %1564 = vmatprep.subr.bf16.mxu0 0
    %1565 = vmatpush1.bf16.msra.mxu0 0
    %1566 = vmatprep.subr.bf16.mxu0 0
    %1567 = vmatpush1.bf16.msra.mxu0 0
    %1568 = vmatprep.subr.bf16.mxu0 0
    %1569 = vmatpush1.bf16.msra.mxu0 0
    %1570 = vmatprep.subr.bf16.mxu0 0
    %1571 = vmatpush1.bf16.msra.mxu0 0
    %1572 = vmatprep.subr.bf16.mxu0 0
    %1573 = vmatpush1.bf16.msra.mxu0 0
    %1574 = vmatprep.subr.bf16.mxu0 0
    %1575 = vmatpush1.bf16.msra.mxu0 0
    %1576 = vmatprep.subr.bf16.mxu0 0
    %1577 = vmatpush1.bf16.msra.mxu0 0
    %1578 = vmatprep.mubr.bf16.mxu0 0
    %1579 = vmatmul.mubr.bf16.gmra.mrb[0].mxu0 %v290
    %v1580 = vpop.f32.mrb[0].mxu0
    %v1581 = vadd.f32 %v1504, %v1580
    %v1582 = vpop.f32.mrb[0].mxu0
    %v1583 = vadd.f32 %v1505, %v1582
    %v1584 = vpop.f32.mrb[0].mxu0
    %v1585 = vpop.f32.mrb[0].mxu0
    %1586 = vdwg.mxu0
    %v1587 = vxor.u32 %v1581, 2147483648
    %v1588 = vxor.u32 %v1583, 2147483648
    %v1589 = vmul.f32 %v1587, 1.442695
    %v1590 = vpow.pop %v1589
    %v1591 = vmul.f32 %v1588, 1.442695
    %v1592 = vpow.pop %v1591
    %v1593 = vadd.f32 %v1590, 1.0
    %v1594 = vadd.f32 %v1592, 1.0
    %v1595 = vrcp.pop %v1593
    %v1596 = vmul.f32 1.0, %v1595
    %v1597 = vrcp.pop %v1594
    %v1598 = vmul.f32 1.0, %v1597
    %v1599 = vtanh.pop %v1581
    %v1600 = vtanh.pop %v1583
    %v1601 = vmul.f32 %v1596, 0.0
    %1603 = vrot.lane.b32.xlu0 %v1599, 64
    %v1604 = vpop.permute.xlu0 %1603
    %v1606 = vmul.f32 %v1596, %v1604
    %1608 = vrot.lane.b32.xlu0 %v1606, 32
    %v1609 = vpop.permute.xlu0 %1608
    %v1611 = vadd.f32 %v1601, %v1609
    %v1612 = vmul.f32 %v1598, 0.0
    %1614 = vrot.lane.b32.xlu0 %v1600, 64
    %v1615 = vpop.permute.xlu0 %1614
    %v1617 = vmul.f32 %v1598, %v1615
    %1619 = vrot.lane.b32.xlu0 %v1617, 32
    %v1620 = vpop.permute.xlu0 %1619
    %v1622 = vadd.f32 %v1612, %v1620
    %1624 = vrot.lane.b32.xlu0 %v1611, 96
    %v1625 = vpop.permute.xlu0 %1624
    %v1627 = vsel %vm131, %v1625, %v1622
    %1629 = vrot.lane.b32.xlu0 %v1596, 32
    %v1630 = vpop.permute.xlu0 %1629
    %1633 = vrot.lane.b32.xlu0 %v1598, 64
    %v1634 = vpop.permute.xlu0 %1633
    %v1636 = vsel %vm131, %v1630, %v1634
    %v1637 = vtanh.pop %v1627
    %v1638 = vmul.f32 %v1636, %v1637
    %v1639 = vpack.c.bf16 %v1638, %v1638
    %1640 = vst.msk [vmem:[#allocation3] sm:$0xf] %vm386, %v1639
    %v1642 = vrot.slane %v1639, 4
    %1643 = vrot.lane.b32.xlu0 %v1642, 96
    %v1644 = vpop.permute.xlu0 %1643
    %1646 = vst.msk [vmem:[#allocation4 + $0x18] sm:$0xf0] %vm393, %v1644
    %v1647 = vld [vmem:[#allocation2] sm:$0xf0]
    %v1648 = vld [vmem:[#allocation2 + $0x38] sm:$0xf]
    %v1650 = vrot.slane %v1648, 4
    %v1652 = vrot.slane %v1647, 4
    %v1653 = vrot.slane %v1650, 4
    %v1656 = vunpack.c.l.bf16 %v1652
    %v1657 = vunpack.c.l.bf16 %v1653
    %v1659 = vsel %vm288, %v1639, 0
    %1661 = vmatprep.subr.bf16.mxu0 %v1531
    %1662 = vmatpush1.bf16.msra.mxu0 %v1530
    %1663 = vmatprep.subr.bf16.mxu0 %v1533
    %1664 = vmatpush1.bf16.msra.mxu0 %v1532
    %1665 = vmatprep.subr.bf16.mxu0 %v1535
    %1666 = vmatpush1.bf16.msra.mxu0 %v1534
    %1667 = vmatprep.subr.bf16.mxu0 %v1537
    %1668 = vmatpush1.bf16.msra.mxu0 %v1536
    %1669 = vmatprep.subr.bf16.mxu0 0
    %1670 = vmatpush1.bf16.msra.mxu0 0
    %1671 = vmatprep.subr.bf16.mxu0 0
    %1672 = vmatpush1.bf16.msra.mxu0 0
    %1673 = vmatprep.subr.bf16.mxu0 0
    %1674 = vmatpush1.bf16.msra.mxu0 0
    %1675 = vmatprep.subr.bf16.mxu0 0
    %1676 = vmatpush1.bf16.msra.mxu0 0
    %1677 = vmatprep.subr.bf16.mxu0 0
    %1678 = vmatpush1.bf16.msra.mxu0 0
    %1679 = vmatprep.subr.bf16.mxu0 0
    %1680 = vmatpush1.bf16.msra.mxu0 0
    %1681 = vmatprep.subr.bf16.mxu0 0
    %1682 = vmatpush1.bf16.msra.mxu0 0
    %1683 = vmatprep.subr.bf16.mxu0 0
    %1684 = vmatpush1.bf16.msra.mxu0 0
    %1685 = vmatprep.subr.bf16.mxu0 0
    %1686 = vmatpush1.bf16.msra.mxu0 0
    %1687 = vmatprep.subr.bf16.mxu0 0
    %1688 = vmatpush1.bf16.msra.mxu0 0
    %1689 = vmatprep.subr.bf16.mxu0 0
    %1690 = vmatpush1.bf16.msra.mxu0 0
    %1691 = vmatprep.subr.bf16.mxu0 0
    %1692 = vmatpush1.bf16.msra.mxu0 0
    %1693 = vmatprep.mubr.bf16.mxu0 0
    %1694 = vmatmul.mubr.bf16.gmra.mrb[0].mxu0 %v1659
    %v1695 = vpop.f32.mrb[0].mxu0
    %v1696 = vadd.f32 %v1656, %v1695
    %v1697 = vpop.f32.mrb[0].mxu0
    %v1698 = vadd.f32 %v1657, %v1697
    %v1699 = vpop.f32.mrb[0].mxu0
    %v1700 = vpop.f32.mrb[0].mxu0
    %1701 = vdwg.mxu0
    %v1702 = vxor.u32 %v1696, 2147483648
    %v1703 = vxor.u32 %v1698, 2147483648
    %v1704 = vmul.f32 %v1702, 1.442695
    %v1705 = vpow.pop %v1704
    %v1706 = vmul.f32 %v1703, 1.442695
    %v1707 = vpow.pop %v1706
    %v1708 = vadd.f32 %v1705, 1.0
    %v1709 = vadd.f32 %v1707, 1.0
    %v1710 = vrcp.pop %v1708
    %v1711 = vmul.f32 1.0, %v1710
    %v1712 = vrcp.pop %v1709
    %v1713 = vmul.f32 1.0, %v1712
    %v1714 = vtanh.pop %v1696
    %v1715 = vtanh.pop %v1698
    %1717 = vrot.lane.b32.xlu0 %v1627, 32
    %v1718 = vpop.permute.xlu0 %1717
    %v1720 = vmul.f32 %v1711, %v1718
    %1722 = vrot.lane.b32.xlu0 %v1714, 64
    %v1723 = vpop.permute.xlu0 %1722
    %v1725 = vmul.f32 %v1711, %v1723
    %1727 = vrot.lane.b32.xlu0 %v1725, 32
    %v1728 = vpop.permute.xlu0 %1727
    %v1730 = vadd.f32 %v1720, %v1728
    %v1731 = vmul.f32 %v1713, %v1627
    %1733 = vrot.lane.b32.xlu0 %v1715, 64
    %v1734 = vpop.permute.xlu0 %1733
    %v1736 = vmul.f32 %v1713, %v1734
    %1738 = vrot.lane.b32.xlu0 %v1736, 32
    %v1739 = vpop.permute.xlu0 %1738
    %v1741 = vadd.f32 %v1731, %v1739
    %1743 = vrot.lane.b32.xlu0 %v1730, 96
    %v1744 = vpop.permute.xlu0 %1743
    %v1746 = vsel %vm131, %v1744, %v1741
    %1748 = vrot.lane.b32.xlu0 %v1711, 32
    %v1749 = vpop.permute.xlu0 %1748
    %1752 = vrot.lane.b32.xlu0 %v1713, 64
    %v1753 = vpop.permute.xlu0 %1752
    %v1755 = vsel %vm131, %v1749, %v1753
    %v1756 = vtanh.pop %v1746
    %v1757 = vmul.f32 %v1755, %v1756
    %v1758 = vpack.c.bf16 %v1757, %v1757
    %v1760 = vrot.slane %v1758, 4
    %1762 = vst.msk [vmem:[#allocation3] sm:$0xf0] %vm393, %v1760
    %1763 = vrot.lane.b32.xlu0 %v1758, 96
    %v1764 = vpop.permute.xlu0 %1763
    %1766 = vst.msk [vmem:[#allocation4 + $0x18] sm:$0xf] %vm386, %v1764
    %v1767 = vld [vmem:[#allocation2 + $0x10] sm:$0xf]
    %v1768 = vld [vmem:[#allocation2 + $0x28] sm:$0xf0]
    %v1770 = vrot.slane %v1768, 4
    %v1772 = vunpack.c.l.bf16 %v1767
    %v1773 = vunpack.c.l.bf16 %v1770
    %v1775 = vsel %vm288, %v1758, 0
    %1777 = vmatprep.subr.bf16.mxu0 %v1531
    %1778 = vmatpush1.bf16.msra.mxu0 %v1530
    %1779 = vmatprep.subr.bf16.mxu0 %v1533
    %1780 = vmatpush1.bf16.msra.mxu0 %v1532
    %1781 = vmatprep.subr.bf16.mxu0 %v1535
    %1782 = vmatpush1.bf16.msra.mxu0 %v1534
    %1783 = vmatprep.subr.bf16.mxu0 %v1537
    %1784 = vmatpush1.bf16.msra.mxu0 %v1536
    %1785 = vmatprep.subr.bf16.mxu0 0
    %1786 = vmatpush1.bf16.msra.mxu0 0
    %1787 = vmatprep.subr.bf16.mxu0 0
    %1788 = vmatpush1.bf16.msra.mxu0 0
    %1789 = vmatprep.subr.bf16.mxu0 0
    %1790 = vmatpush1.bf16.msra.mxu0 0
    %1791 = vmatprep.subr.bf16.mxu0 0
    %1792 = vmatpush1.bf16.msra.mxu0 0
    %1793 = vmatprep.subr.bf16.mxu0 0
    %1794 = vmatpush1.bf16.msra.mxu0 0
    %1795 = vmatprep.subr.bf16.mxu0 0
    %1796 = vmatpush1.bf16.msra.mxu0 0
    %1797 = vmatprep.subr.bf16.mxu0 0
    %1798 = vmatpush1.bf16.msra.mxu0 0
    %1799 = vmatprep.subr.bf16.mxu0 0
    %1800 = vmatpush1.bf16.msra.mxu0 0
    %1801 = vmatprep.subr.bf16.mxu0 0
    %1802 = vmatpush1.bf16.msra.mxu0 0
    %1803 = vmatprep.subr.bf16.mxu0 0
    %1804 = vmatpush1.bf16.msra.mxu0 0
    %1805 = vmatprep.subr.bf16.mxu0 0
    %1806 = vmatpush1.bf16.msra.mxu0 0
    %1807 = vmatprep.subr.bf16.mxu0 0
    %1808 = vmatpush1.bf16.msra.mxu0 0
    %1809 = vmatprep.mubr.bf16.mxu0 0
    %1810 = vmatmul.mubr.bf16.gmra.mrb[0].mxu0 %v1775
    %v1811 = vpop.f32.mrb[0].mxu0
    %v1812 = vadd.f32 %v1772, %v1811
    %v1813 = vpop.f32.mrb[0].mxu0
    %v1814 = vadd.f32 %v1773, %v1813
    %v1815 = vpop.f32.mrb[0].mxu0
    %v1816 = vpop.f32.mrb[0].mxu0
    %1817 = vdwg.mxu0
    %v1818 = vxor.u32 %v1812, 2147483648
    %v1819 = vxor.u32 %v1814, 2147483648
    %v1820 = vmul.f32 %v1818, 1.442695
    %v1821 = vpow.pop %v1820
    %v1822 = vmul.f32 %v1819, 1.442695
    %v1823 = vpow.pop %v1822
    %v1824 = vadd.f32 %v1821, 1.0
    %v1825 = vadd.f32 %v1823, 1.0
    %v1826 = vrcp.pop %v1824
    %v1827 = vmul.f32 1.0, %v1826
    %v1828 = vrcp.pop %v1825
    %v1829 = vmul.f32 1.0, %v1828
    %v1830 = vtanh.pop %v1812
    %v1831 = vtanh.pop %v1814
    %1833 = vrot.lane.b32.xlu0 %v1746, 32
    %v1834 = vpop.permute.xlu0 %1833
    %v1836 = vmul.f32 %v1827, %v1834
    %1838 = vrot.lane.b32.xlu0 %v1830, 64
    %v1839 = vpop.permute.xlu0 %1838
    %v1841 = vmul.f32 %v1827, %v1839
    %1843 = vrot.lane.b32.xlu0 %v1841, 32
    %v1844 = vpop.permute.xlu0 %1843
    %v1846 = vadd.f32 %v1836, %v1844
    %v1847 = vmul.f32 %v1829, %v1746
    %1849 = vrot.lane.b32.xlu0 %v1831, 64
    %v1850 = vpop.permute.xlu0 %1849
    %v1852 = vmul.f32 %v1829, %v1850
    %1854 = vrot.lane.b32.xlu0 %v1852, 32
    %v1855 = vpop.permute.xlu0 %1854
    %v1857 = vadd.f32 %v1847, %v1855
    %1859 = vrot.lane.b32.xlu0 %v1846, 96
    %v1860 = vpop.permute.xlu0 %1859
    %v1862 = vsel %vm131, %v1860, %v1857
    %1864 = vrot.lane.b32.xlu0 %v1827, 32
    %v1865 = vpop.permute.xlu0 %1864
    %1868 = vrot.lane.b32.xlu0 %v1829, 64
    %v1869 = vpop.permute.xlu0 %1868
    %v1871 = vsel %vm131, %v1865, %v1869
    %v1872 = vtanh.pop %v1862
    %v1873 = vmul.f32 %v1871, %v1872
    %v1874 = vpack.c.bf16 %v1873, %v1873
    %1875 = vst.msk [vmem:[#allocation3 + $0x8] sm:$0xf] %vm386, %v1874
    %v1877 = vrot.slane %v1874, 4
    %1878 = vrot.lane.b32.xlu0 %v1877, 96
    %v1879 = vpop.permute.xlu0 %1878
    %1881 = vst.msk [vmem:[#allocation4 + $0x10] sm:$0xf0] %vm393, %v1879
    %v1882 = vld [vmem:[#allocation2 + $0x10] sm:$0xf0]
    %v1883 = vld [vmem:[#allocation2 + $0x28] sm:$0xf]
    %v1885 = vrot.slane %v1883, 4
    %v1887 = vrot.slane %v1882, 4
    %v1888 = vrot.slane %v1885, 4
    %v1891 = vunpack.c.l.bf16 %v1887
    %v1892 = vunpack.c.l.bf16 %v1888
    %v1894 = vsel %vm288, %v1874, 0
    %1896 = vmatprep.subr.bf16.mxu0 %v1531
    %1897 = vmatpush1.bf16.msra.mxu0 %v1530
    %1898 = vmatprep.subr.bf16.mxu0 %v1533
    %1899 = vmatpush1.bf16.msra.mxu0 %v1532
    %1900 = vmatprep.subr.bf16.mxu0 %v1535
    %1901 = vmatpush1.bf16.msra.mxu0 %v1534
    %1902 = vmatprep.subr.bf16.mxu0 %v1537
    %1903 = vmatpush1.bf16.msra.mxu0 %v1536
    %1904 = vmatprep.subr.bf16.mxu0 0
    %1905 = vmatpush1.bf16.msra.mxu0 0
    %1906 = vmatprep.subr.bf16.mxu0 0
    %1907 = vmatpush1.bf16.msra.mxu0 0
    %1908 = vmatprep.subr.bf16.mxu0 0
    %1909 = vmatpush1.bf16.msra.mxu0 0
    %1910 = vmatprep.subr.bf16.mxu0 0
    %1911 = vmatpush1.bf16.msra.mxu0 0
    %1912 = vmatprep.subr.bf16.mxu0 0
    %1913 = vmatpush1.bf16.msra.mxu0 0
    %1914 = vmatprep.subr.bf16.mxu0 0
    %1915 = vmatpush1.bf16.msra.mxu0 0
    %1916 = vmatprep.subr.bf16.mxu0 0
    %1917 = vmatpush1.bf16.msra.mxu0 0
    %1918 = vmatprep.subr.bf16.mxu0 0
    %1919 = vmatpush1.bf16.msra.mxu0 0
    %1920 = vmatprep.subr.bf16.mxu0 0
    %1921 = vmatpush1.bf16.msra.mxu0 0
    %1922 = vmatprep.subr.bf16.mxu0 0
    %1923 = vmatpush1.bf16.msra.mxu0 0
    %1924 = vmatprep.subr.bf16.mxu0 0
    %1925 = vmatpush1.bf16.msra.mxu0 0
    %1926 = vmatprep.subr.bf16.mxu0 0
    %1927 = vmatpush1.bf16.msra.mxu0 0
    %1928 = vmatprep.mubr.bf16.mxu0 0
    %1929 = vmatmul.mubr.bf16.gmra.mrb[0].mxu0 %v1894
    %v1930 = vpop.f32.mrb[0].mxu0
    %v1931 = vadd.f32 %v1891, %v1930
    %v1932 = vpop.f32.mrb[0].mxu0
    %v1933 = vadd.f32 %v1892, %v1932
    %v1934 = vpop.f32.mrb[0].mxu0
    %v1935 = vpop.f32.mrb[0].mxu0
    %1936 = vdwg.mxu0
    %v1937 = vxor.u32 %v1931, 2147483648
    %v1938 = vxor.u32 %v1933, 2147483648
    %v1939 = vmul.f32 %v1937, 1.442695
    %v1940 = vpow.pop %v1939
    %v1941 = vmul.f32 %v1938, 1.442695
    %v1942 = vpow.pop %v1941
    %v1943 = vadd.f32 %v1940, 1.0
    %v1944 = vadd.f32 %v1942, 1.0
    %v1945 = vrcp.pop %v1943
    %v1946 = vmul.f32 1.0, %v1945
    %v1947 = vrcp.pop %v1944
    %v1948 = vmul.f32 1.0, %v1947
    %v1949 = vtanh.pop %v1931
    %v1950 = vtanh.pop %v1933
    %1952 = vrot.lane.b32.xlu0 %v1862, 32
    %v1953 = vpop.permute.xlu0 %1952
    %v1955 = vmul.f32 %v1946, %v1953
    %1957 = vrot.lane.b32.xlu0 %v1949, 64
    %v1958 = vpop.permute.xlu0 %1957
    %v1960 = vmul.f32 %v1946, %v1958
    %1962 = vrot.lane.b32.xlu0 %v1960, 32
    %v1963 = vpop.permute.xlu0 %1962
    %v1965 = vadd.f32 %v1955, %v1963
    %v1966 = vmul.f32 %v1948, %v1862
    %1968 = vrot.lane.b32.xlu0 %v1950, 64
    %v1969 = vpop.permute.xlu0 %1968
    %v1971 = vmul.f32 %v1948, %v1969
    %1973 = vrot.lane.b32.xlu0 %v1971, 32
    %v1974 = vpop.permute.xlu0 %1973
    %v1976 = vadd.f32 %v1966, %v1974
    %1978 = vrot.lane.b32.xlu0 %v1965, 96
    %v1979 = vpop.permute.xlu0 %1978
    %v1981 = vsel %vm131, %v1979, %v1976
    %1983 = vrot.lane.b32.xlu0 %v1946, 32
    %v1984 = vpop.permute.xlu0 %1983
    %1987 = vrot.lane.b32.xlu0 %v1948, 64
    %v1988 = vpop.permute.xlu0 %1987
    %v1990 = vsel %vm131, %v1984, %v1988
    %v1991 = vtanh.pop %v1981
    %v1992 = vmul.f32 %v1990, %v1991
    %v1993 = vpack.c.bf16 %v1992, %v1992
    %v1995 = vrot.slane %v1993, 4
    %1997 = vst.msk [vmem:[#allocation3 + $0x8] sm:$0xf0] %vm393, %v1995
    %1998 = vrot.lane.b32.xlu0 %v1993, 96
    %v1999 = vpop.permute.xlu0 %1998
    %2001 = vst.msk [vmem:[#allocation4 + $0x10] sm:$0xf] %vm386, %v1999
    %v2002 = vld [vmem:[#allocation2 + $0x20] sm:$0xf]
    %v2003 = vld [vmem:[#allocation2 + $0x18] sm:$0xf0]
    %v2005 = vrot.slane %v2003, 4
    %v2007 = vunpack.c.l.bf16 %v2002
    %v2008 = vunpack.c.l.bf16 %v2005
    %v2010 = vsel %vm288, %v1993, 0
    %2012 = vmatprep.subr.bf16.mxu0 %v1531
    %2013 = vmatpush1.bf16.msra.mxu0 %v1530
    %2014 = vmatprep.subr.bf16.mxu0 %v1533
    %2015 = vmatpush1.bf16.msra.mxu0 %v1532
    %2016 = vmatprep.subr.bf16.mxu0 %v1535
    %2017 = vmatpush1.bf16.msra.mxu0 %v1534
    %2018 = vmatprep.subr.bf16.mxu0 %v1537
    %2019 = vmatpush1.bf16.msra.mxu0 %v1536
    %2020 = vmatprep.subr.bf16.mxu0 0
    %2021 = vmatpush1.bf16.msra.mxu0 0
    %2022 = vmatprep.subr.bf16.mxu0 0
    %2023 = vmatpush1.bf16.msra.mxu0 0
    %2024 = vmatprep.subr.bf16.mxu0 0
    %2025 = vmatpush1.bf16.msra.mxu0 0
    %2026 = vmatprep.subr.bf16.mxu0 0
    %2027 = vmatpush1.bf16.msra.mxu0 0
    %2028 = vmatprep.subr.bf16.mxu0 0
    %2029 = vmatpush1.bf16.msra.mxu0 0
    %2030 = vmatprep.subr.bf16.mxu0 0
    %2031 = vmatpush1.bf16.msra.mxu0 0
    %2032 = vmatprep.subr.bf16.mxu0 0
    %2033 = vmatpush1.bf16.msra.mxu0 0
    %2034 = vmatprep.subr.bf16.mxu0 0
    %2035 = vmatpush1.bf16.msra.mxu0 0
    %2036 = vmatprep.subr.bf16.mxu0 0
    %2037 = vmatpush1.bf16.msra.mxu0 0
    %2038 = vmatprep.subr.bf16.mxu0 0
    %2039 = vmatpush1.bf16.msra.mxu0 0
    %2040 = vmatprep.subr.bf16.mxu0 0
    %2041 = vmatpush1.bf16.msra.mxu0 0
    %2042 = vmatprep.subr.bf16.mxu0 0
    %2043 = vmatpush1.bf16.msra.mxu0 0
    %2044 = vmatprep.mubr.bf16.mxu0 0
    %2045 = vmatmul.mubr.bf16.gmra.mrb[0].mxu0 %v2010
    %v2046 = vpop.f32.mrb[0].mxu0
    %v2047 = vadd.f32 %v2007, %v2046
    %v2048 = vpop.f32.mrb[0].mxu0
    %v2049 = vadd.f32 %v2008, %v2048
    %v2050 = vpop.f32.mrb[0].mxu0
    %v2051 = vpop.f32.mrb[0].mxu0
    %2052 = vdwg.mxu0
    %v2053 = vxor.u32 %v2047, 2147483648
    %v2054 = vxor.u32 %v2049, 2147483648
    %v2055 = vmul.f32 %v2053, 1.442695
    %v2056 = vpow.pop %v2055
    %v2057 = vmul.f32 %v2054, 1.442695
    %v2058 = vpow.pop %v2057
    %v2059 = vadd.f32 %v2056, 1.0
    %v2060 = vadd.f32 %v2058, 1.0
    %v2061 = vrcp.pop %v2059
    %v2062 = vmul.f32 1.0, %v2061
    %v2063 = vrcp.pop %v2060
    %v2064 = vmul.f32 1.0, %v2063
    %v2065 = vtanh.pop %v2047
    %v2066 = vtanh.pop %v2049
    %2068 = vrot.lane.b32.xlu0 %v1981, 32
    %v2069 = vpop.permute.xlu0 %2068
    %v2071 = vmul.f32 %v2062, %v2069
    %2073 = vrot.lane.b32.xlu0 %v2065, 64
    %v2074 = vpop.permute.xlu0 %2073
    %v2076 = vmul.f32 %v2062, %v2074
    %2078 = vrot.lane.b32.xlu0 %v2076, 32
    %v2079 = vpop.permute.xlu0 %2078
    %v2081 = vadd.f32 %v2071, %v2079
    %v2082 = vmul.f32 %v2064, %v1981
    %2084 = vrot.lane.b32.xlu0 %v2066, 64
    %v2085 = vpop.permute.xlu0 %2084
    %v2087 = vmul.f32 %v2064, %v2085
    %2089 = vrot.lane.b32.xlu0 %v2087, 32
    %v2090 = vpop.permute.xlu0 %2089
    %v2092 = vadd.f32 %v2082, %v2090
    %2094 = vrot.lane.b32.xlu0 %v2081, 96
    %v2095 = vpop.permute.xlu0 %2094
    %v2097 = vsel %vm131, %v2095, %v2092
    %2099 = vrot.lane.b32.xlu0 %v2062, 32
    %v2100 = vpop.permute.xlu0 %2099
    %2103 = vrot.lane.b32.xlu0 %v2064, 64
    %v2104 = vpop.permute.xlu0 %2103
    %v2106 = vsel %vm131, %v2100, %v2104
    %v2107 = vtanh.pop %v2097
    %v2108 = vmul.f32 %v2106, %v2107
    %v2109 = vpack.c.bf16 %v2108, %v2108
    %2110 = vst.msk [vmem:[#allocation3 + $0x10] sm:$0xf] %vm386, %v2109
    %v2112 = vrot.slane %v2109, 4
    %2113 = vrot.lane.b32.xlu0 %v2112, 96
    %v2114 = vpop.permute.xlu0 %2113
    %2116 = vst.msk [vmem:[#allocation4 + $0x8] sm:$0xf0] %vm393, %v2114
    %v2117 = vld [vmem:[#allocation2 + $0x20] sm:$0xf0]
    %v2118 = vld [vmem:[#allocation2 + $0x18] sm:$0xf]
    %v2120 = vrot.slane %v2118, 4
    %v2122 = vrot.slane %v2117, 4
    %v2123 = vrot.slane %v2120, 4
    %v2126 = vunpack.c.l.bf16 %v2122
    %v2127 = vunpack.c.l.bf16 %v2123
    %v2129 = vsel %vm288, %v2109, 0
    %2131 = vmatprep.subr.bf16.mxu0 %v1531
    %2132 = vmatpush1.bf16.msra.mxu0 %v1530
    %2133 = vmatprep.subr.bf16.mxu0 %v1533
    %2134 = vmatpush1.bf16.msra.mxu0 %v1532
    %2135 = vmatprep.subr.bf16.mxu0 %v1535
    %2136 = vmatpush1.bf16.msra.mxu0 %v1534
    %2137 = vmatprep.subr.bf16.mxu0 %v1537
    %2138 = vmatpush1.bf16.msra.mxu0 %v1536
    %2139 = vmatprep.subr.bf16.mxu0 0
    %2140 = vmatpush1.bf16.msra.mxu0 0
    %2141 = vmatprep.subr.bf16.mxu0 0
    %2142 = vmatpush1.bf16.msra.mxu0 0
    %2143 = vmatprep.subr.bf16.mxu0 0
    %2144 = vmatpush1.bf16.msra.mxu0 0
    %2145 = vmatprep.subr.bf16.mxu0 0
    %2146 = vmatpush1.bf16.msra.mxu0 0
    %2147 = vmatprep.subr.bf16.mxu0 0
    %2148 = vmatpush1.bf16.msra.mxu0 0
    %2149 = vmatprep.subr.bf16.mxu0 0
    %2150 = vmatpush1.bf16.msra.mxu0 0
    %2151 = vmatprep.subr.bf16.mxu0 0
    %2152 = vmatpush1.bf16.msra.mxu0 0
    %2153 = vmatprep.subr.bf16.mxu0 0
    %2154 = vmatpush1.bf16.msra.mxu0 0
    %2155 = vmatprep.subr.bf16.mxu0 0
    %2156 = vmatpush1.bf16.msra.mxu0 0
    %2157 = vmatprep.subr.bf16.mxu0 0
    %2158 = vmatpush1.bf16.msra.mxu0 0
    %2159 = vmatprep.subr.bf16.mxu0 0
    %2160 = vmatpush1.bf16.msra.mxu0 0
    %2161 = vmatprep.subr.bf16.mxu0 0
    %2162 = vmatpush1.bf16.msra.mxu0 0
    %2163 = vmatprep.mubr.bf16.mxu0 0
    %2164 = vmatmul.mubr.bf16.gmra.mrb[0].mxu0 %v2129
    %v2165 = vpop.f32.mrb[0].mxu0
    %v2166 = vadd.f32 %v2126, %v2165
    %v2167 = vpop.f32.mrb[0].mxu0
    %v2168 = vadd.f32 %v2127, %v2167
    %v2169 = vpop.f32.mrb[0].mxu0
    %v2170 = vpop.f32.mrb[0].mxu0
    %2171 = vdwg.mxu0
    %v2172 = vxor.u32 %v2166, 2147483648
    %v2173 = vxor.u32 %v2168, 2147483648
    %v2174 = vmul.f32 %v2172, 1.442695
    %v2175 = vpow.pop %v2174
    %v2176 = vmul.f32 %v2173, 1.442695
    %v2177 = vpow.pop %v2176
    %v2178 = vadd.f32 %v2175, 1.0
    %v2179 = vadd.f32 %v2177, 1.0
    %v2180 = vrcp.pop %v2178
    %v2181 = vmul.f32 1.0, %v2180
    %v2182 = vrcp.pop %v2179
    %v2183 = vmul.f32 1.0, %v2182
    %v2184 = vtanh.pop %v2166
    %v2185 = vtanh.pop %v2168
    %2187 = vrot.lane.b32.xlu0 %v2097, 32
    %v2188 = vpop.permute.xlu0 %2187
    %v2190 = vmul.f32 %v2181, %v2188
    %2192 = vrot.lane.b32.xlu0 %v2184, 64
    %v2193 = vpop.permute.xlu0 %2192
    %v2195 = vmul.f32 %v2181, %v2193
    %2197 = vrot.lane.b32.xlu0 %v2195, 32
    %v2198 = vpop.permute.xlu0 %2197
    %v2200 = vadd.f32 %v2190, %v2198
    %v2201 = vmul.f32 %v2183, %v2097
    %2203 = vrot.lane.b32.xlu0 %v2185, 64
    %v2204 = vpop.permute.xlu0 %2203
    %v2206 = vmul.f32 %v2183, %v2204
    %2208 = vrot.lane.b32.xlu0 %v2206, 32
    %v2209 = vpop.permute.xlu0 %2208
    %v2211 = vadd.f32 %v2201, %v2209
    %2213 = vrot.lane.b32.xlu0 %v2200, 96
    %v2214 = vpop.permute.xlu0 %2213
    %v2216 = vsel %vm131, %v2214, %v2211
    %2218 = vrot.lane.b32.xlu0 %v2181, 32
    %v2219 = vpop.permute.xlu0 %2218
    %2222 = vrot.lane.b32.xlu0 %v2183, 64
    %v2223 = vpop.permute.xlu0 %2222
    %v2225 = vsel %vm131, %v2219, %v2223
    %v2226 = vtanh.pop %v2216
    %v2227 = vmul.f32 %v2225, %v2226
    %v2228 = vpack.c.bf16 %v2227, %v2227
    %v2230 = vrot.slane %v2228, 4
    %2232 = vst.msk [vmem:[#allocation3 + $0x10] sm:$0xf0] %vm393, %v2230
    %2233 = vrot.lane.b32.xlu0 %v2228, 96
    %v2234 = vpop.permute.xlu0 %2233
    %2236 = vst.msk [vmem:[#allocation4 + $0x8] sm:$0xf] %vm386, %v2234
    %v2237 = vld [vmem:[#allocation2 + $0x30] sm:$0xf]
    %v2238 = vld [vmem:[#allocation2 + $0x8] sm:$0xf0]
    %v2240 = vrot.slane %v2238, 4
    %v2242 = vunpack.c.l.bf16 %v2237
    %v2243 = vunpack.c.l.bf16 %v2240
    %v2245 = vsel %vm288, %v2228, 0
    %2247 = vmatprep.subr.bf16.mxu0 %v1531
    %2248 = vmatpush1.bf16.msra.mxu0 %v1530
    %2249 = vmatprep.subr.bf16.mxu0 %v1533
    %2250 = vmatpush1.bf16.msra.mxu0 %v1532
    %2251 = vmatprep.subr.bf16.mxu0 %v1535
    %2252 = vmatpush1.bf16.msra.mxu0 %v1534
    %2253 = vmatprep.subr.bf16.mxu0 %v1537
    %2254 = vmatpush1.bf16.msra.mxu0 %v1536
    %2255 = vmatprep.subr.bf16.mxu0 0
    %2256 = vmatpush1.bf16.msra.mxu0 0
    %2257 = vmatprep.subr.bf16.mxu0 0
    %2258 = vmatpush1.bf16.msra.mxu0 0
    %2259 = vmatprep.subr.bf16.mxu0 0
    %2260 = vmatpush1.bf16.msra.mxu0 0
    %2261 = vmatprep.subr.bf16.mxu0 0
    %2262 = vmatpush1.bf16.msra.mxu0 0
    %2263 = vmatprep.subr.bf16.mxu0 0
    %2264 = vmatpush1.bf16.msra.mxu0 0
    %2265 = vmatprep.subr.bf16.mxu0 0
    %2266 = vmatpush1.bf16.msra.mxu0 0
    %2267 = vmatprep.subr.bf16.mxu0 0
    %2268 = vmatpush1.bf16.msra.mxu0 0
    %2269 = vmatprep.subr.bf16.mxu0 0
    %2270 = vmatpush1.bf16.msra.mxu0 0
    %2271 = vmatprep.subr.bf16.mxu0 0
    %2272 = vmatpush1.bf16.msra.mxu0 0
    %2273 = vmatprep.subr.bf16.mxu0 0
    %2274 = vmatpush1.bf16.msra.mxu0 0
    %2275 = vmatprep.subr.bf16.mxu0 0
    %2276 = vmatpush1.bf16.msra.mxu0 0
    %2277 = vmatprep.subr.bf16.mxu0 0
    %2278 = vmatpush1.bf16.msra.mxu0 0
    %2279 = vmatprep.mubr.bf16.mxu0 0
    %2280 = vmatmul.mubr.bf16.gmra.mrb[0].mxu0 %v2245
    %v2281 = vpop.f32.mrb[0].mxu0
    %v2282 = vadd.f32 %v2242, %v2281
    %v2283 = vpop.f32.mrb[0].mxu0
    %v2284 = vadd.f32 %v2243, %v2283
    %v2285 = vpop.f32.mrb[0].mxu0
    %v2286 = vpop.f32.mrb[0].mxu0
    %2287 = vdwg.mxu0
    %v2288 = vxor.u32 %v2282, 2147483648
    %v2289 = vxor.u32 %v2284, 2147483648
    %v2290 = vmul.f32 %v2288, 1.442695
    %v2291 = vpow.pop %v2290
    %v2292 = vmul.f32 %v2289, 1.442695
    %v2293 = vpow.pop %v2292
    %v2294 = vadd.f32 %v2291, 1.0
    %v2295 = vadd.f32 %v2293, 1.0
    %v2296 = vrcp.pop %v2294
    %v2297 = vmul.f32 1.0, %v2296
    %v2298 = vrcp.pop %v2295
    %v2299 = vmul.f32 1.0, %v2298
    %v2300 = vtanh.pop %v2282
    %v2301 = vtanh.pop %v2284
    %2303 = vrot.lane.b32.xlu0 %v2216, 32
    %v2304 = vpop.permute.xlu0 %2303
    %v2306 = vmul.f32 %v2297, %v2304
    %2308 = vrot.lane.b32.xlu0 %v2300, 64
    %v2309 = vpop.permute.xlu0 %2308
    %v2311 = vmul.f32 %v2297, %v2309
    %2313 = vrot.lane.b32.xlu0 %v2311, 32
    %v2314 = vpop.permute.xlu0 %2313
    %v2316 = vadd.f32 %v2306, %v2314
    %v2317 = vmul.f32 %v2299, %v2216
    %2319 = vrot.lane.b32.xlu0 %v2301, 64
    %v2320 = vpop.permute.xlu0 %2319
    %v2322 = vmul.f32 %v2299, %v2320
    %2324 = vrot.lane.b32.xlu0 %v2322, 32
    %v2325 = vpop.permute.xlu0 %2324
    %v2327 = vadd.f32 %v2317, %v2325
    %2329 = vrot.lane.b32.xlu0 %v2316, 96
    %v2330 = vpop.permute.xlu0 %2329
    %v2332 = vsel %vm131, %v2330, %v2327
    %2334 = vrot.lane.b32.xlu0 %v2297, 32
    %v2335 = vpop.permute.xlu0 %2334
    %2338 = vrot.lane.b32.xlu0 %v2299, 64
    %v2339 = vpop.permute.xlu0 %2338
    %v2341 = vsel %vm131, %v2335, %v2339
    %v2342 = vtanh.pop %v2332
    %v2343 = vmul.f32 %v2341, %v2342
    %v2344 = vpack.c.bf16 %v2343, %v2343
    %2345 = vst.msk [vmem:[#allocation3 + $0x18] sm:$0xf] %vm386, %v2344
    %v2347 = vrot.slane %v2344, 4
    %2348 = vrot.lane.b32.xlu0 %v2347, 96
    %v2349 = vpop.permute.xlu0 %2348
    %2351 = vst.msk [vmem:[#allocation4] sm:$0xf0] %vm393, %v2349
    %v2352 = vld [vmem:[#allocation2 + $0x30] sm:$0xf0]
    %v2353 = vld [vmem:[#allocation2 + $0x8] sm:$0xf]
    %v2355 = vrot.slane %v2353, 4
    %v2357 = vrot.slane %v2352, 4
    %v2358 = vrot.slane %v2355, 4
    %v2361 = vunpack.c.l.bf16 %v2357
    %v2362 = vunpack.c.l.bf16 %v2358
    %v2364 = vsel %vm288, %v2344, 0
    %2366 = vmatprep.subr.bf16.mxu0 %v1531
    %2367 = vmatpush1.bf16.msra.mxu0 %v1530
    %2368 = vmatprep.subr.bf16.mxu0 %v1533
    %2369 = vmatpush1.bf16.msra.mxu0 %v1532
    %2370 = vmatprep.subr.bf16.mxu0 %v1535
    %2371 = vmatpush1.bf16.msra.mxu0 %v1534
    %2372 = vmatprep.subr.bf16.mxu0 %v1537
    %2373 = vmatpush1.bf16.msra.mxu0 %v1536
    %2374 = vmatprep.subr.bf16.mxu0 0
    %2375 = vmatpush1.bf16.msra.mxu0 0
    %2376 = vmatprep.subr.bf16.mxu0 0
    %2377 = vmatpush1.bf16.msra.mxu0 0
    %2378 = vmatprep.subr.bf16.mxu0 0
    %2379 = vmatpush1.bf16.msra.mxu0 0
    %2380 = vmatprep.subr.bf16.mxu0 0
    %2381 = vmatpush1.bf16.msra.mxu0 0
    %2382 = vmatprep.subr.bf16.mxu0 0
    %2383 = vmatpush1.bf16.msra.mxu0 0
    %2384 = vmatprep.subr.bf16.mxu0 0
    %2385 = vmatpush1.bf16.msra.mxu0 0
    %2386 = vmatprep.subr.bf16.mxu0 0
    %2387 = vmatpush1.bf16.msra.mxu0 0
    %2388 = vmatprep.subr.bf16.mxu0 0
    %2389 = vmatpush1.bf16.msra.mxu0 0
    %2390 = vmatprep.subr.bf16.mxu0 0
    %2391 = vmatpush1.bf16.msra.mxu0 0
    %2392 = vmatprep.subr.bf16.mxu0 0
    %2393 = vmatpush1.bf16.msra.mxu0 0
    %2394 = vmatprep.subr.bf16.mxu0 0
    %2395 = vmatpush1.bf16.msra.mxu0 0
    %2396 = vmatprep.subr.bf16.mxu0 0
    %2397 = vmatpush1.bf16.msra.mxu0 0
    %2398 = vmatprep.mubr.bf16.mxu0 0
    %2399 = vmatmul.mubr.bf16.gmra.mrb[0].mxu0 %v2364
    %v2400 = vpop.f32.mrb[0].mxu0
    %v2401 = vadd.f32 %v2361, %v2400
    %v2402 = vpop.f32.mrb[0].mxu0
    %v2403 = vadd.f32 %v2362, %v2402
    %v2404 = vpop.f32.mrb[0].mxu0
    %v2405 = vpop.f32.mrb[0].mxu0
    %2406 = vdwg.mxu0
    %v2407 = vxor.u32 %v2401, 2147483648
    %v2408 = vxor.u32 %v2403, 2147483648
    %v2409 = vmul.f32 %v2407, 1.442695
    %v2410 = vpow.pop %v2409
    %v2411 = vmul.f32 %v2408, 1.442695
    %v2412 = vpow.pop %v2411
    %v2413 = vadd.f32 %v2410, 1.0
    %v2414 = vadd.f32 %v2412, 1.0
    %v2415 = vrcp.pop %v2413
    %v2416 = vmul.f32 1.0, %v2415
    %v2417 = vrcp.pop %v2414
    %v2418 = vmul.f32 1.0, %v2417
    %v2419 = vtanh.pop %v2401
    %v2420 = vtanh.pop %v2403
    %2422 = vrot.lane.b32.xlu0 %v2332, 32
    %v2423 = vpop.permute.xlu0 %2422
    %v2425 = vmul.f32 %v2416, %v2423
    %2427 = vrot.lane.b32.xlu0 %v2419, 64
    %v2428 = vpop.permute.xlu0 %2427
    %v2430 = vmul.f32 %v2416, %v2428
    %2432 = vrot.lane.b32.xlu0 %v2430, 32
    %v2433 = vpop.permute.xlu0 %2432
    %v2435 = vadd.f32 %v2425, %v2433
    %v2436 = vmul.f32 %v2418, %v2332
    %2438 = vrot.lane.b32.xlu0 %v2420, 64
    %v2439 = vpop.permute.xlu0 %2438
    %v2441 = vmul.f32 %v2418, %v2439
    %2443 = vrot.lane.b32.xlu0 %v2441, 32
    %v2444 = vpop.permute.xlu0 %2443
    %v2446 = vadd.f32 %v2436, %v2444
    %2448 = vrot.lane.b32.xlu0 %v2435, 96
    %v2449 = vpop.permute.xlu0 %2448
    %v2451 = vsel %vm131, %v2449, %v2446
    %2453 = vrot.lane.b32.xlu0 %v2416, 32
    %v2454 = vpop.permute.xlu0 %2453
    %2457 = vrot.lane.b32.xlu0 %v2418, 64
    %v2458 = vpop.permute.xlu0 %2457
    %v2460 = vsel %vm131, %v2454, %v2458
    %v2461 = vtanh.pop %v2451
    %v2462 = vmul.f32 %v2460, %v2461
    %v2463 = vpack.c.bf16 %v2462, %v2462
    %v2465 = vrot.slane %v2463, 4
    %2467 = vst.msk [vmem:[#allocation3 + $0x18] sm:$0xf0] %vm393, %v2465
    %2468 = vrot.lane.b32.xlu0 %v2463, 96
    %v2469 = vpop.permute.xlu0 %2468
    %2471 = vst.msk [vmem:[#allocation4] sm:$0xf] %vm386, %v2469
    %s2472 = scalar_lea.vmem %s4, 32
    %v2473 = vld [vmem:[%s2472] sm:$0xff]
    %v2474 = vld [vmem:[%s2472 + $0x8] sm:$0xff]
    %v2475 = vld [vmem:[%s2472 + $0x10] sm:$0xff]
    %v2476 = vld [vmem:[%s2472 + $0x18] sm:$0xff]
    %s2477 = scalar_lea.vmem [#allocation5], 32
    %v2478 = vld [vmem:[%s2477] sm:$0xff]
    %v2479 = vld [vmem:[%s2477 + $0x8] sm:$0xff]
    %v2480 = vld [vmem:[%s2477 + $0x10] sm:$0xff]
    %v2481 = vld [vmem:[%s2477 + $0x18] sm:$0xff]
    %s2482 = scalar_lea.vmem %s6, 2
    %v2483 = vld [vmem:[%s2482] sm:$0x3]
    %v2484 = vld [vmem:[#allocation3] sm:$0xff]
    %v2485 = vld [vmem:[#allocation3 + $0x8] sm:$0xff]
    %v2486 = vld [vmem:[#allocation3 + $0x10] sm:$0xff]
    %v2487 = vld [vmem:[#allocation3 + $0x18] sm:$0xff]
    %v2488 = vld [vmem:[#allocation4] sm:$0xff]
    %v2489 = vld [vmem:[#allocation4 + $0x8] sm:$0xff]
    %v2490 = vld [vmem:[#allocation4 + $0x10] sm:$0xff]
    %v2491 = vld [vmem:[#allocation4 + $0x18] sm:$0xff]
    %v2496 = vunpack.c.l.b16 %v2478
    %v2497 = vunpack.c.h.b16 %v2478
    %v2498 = vunpack.c.l.b16 %v2479
    %v2499 = vunpack.c.h.b16 %v2479
    %v2500 = vunpack.c.l.b16 %v2480
    %v2501 = vunpack.c.h.b16 %v2480
    %v2502 = vunpack.c.l.b16 %v2481
    %v2503 = vunpack.c.h.b16 %v2481
    %v2504 = vpack.c.b16 %v2498, %v2496
    %v2505 = vpack.c.b16 %v2499, %v2497
    %v2506 = vpack.c.b16 %v2502, %v2500
    %v2507 = vpack.c.b16 %v2503, %v2501
    %v2513 = vsel %vm131, %v2488, 0
    %v2516 = vsel %vm131, %v2489, 0
    %v2519 = vsel %vm131, %v2490, 0
    %v2522 = vsel %vm131, %v2491, 0
    %2524 = vmatprep.subr.bf16.mxu0 %v2505
    %2525 = vmatpush1.bf16.msra.mxu0 %v2504
    %2526 = vmatprep.subr.bf16.mxu0 %v2507
    %2527 = vmatpush1.bf16.msra.mxu0 %v2506
    %2528 = vmatprep.subr.bf16.mxu0 0
    %2529 = vmatpush1.bf16.msra.mxu0 0
    %2530 = vmatprep.subr.bf16.mxu0 0
    %2531 = vmatpush1.bf16.msra.mxu0 0
    %2532 = vmatprep.subr.bf16.mxu0 0
    %2533 = vmatpush1.bf16.msra.mxu0 0
    %2534 = vmatprep.subr.bf16.mxu0 0
    %2535 = vmatpush1.bf16.msra.mxu0 0
    %2536 = vmatprep.subr.bf16.mxu0 0
    %2537 = vmatpush1.bf16.msra.mxu0 0
    %2538 = vmatprep.subr.bf16.mxu0 0
    %2539 = vmatpush1.bf16.msra.mxu0 0
    %2540 = vmatprep.subr.bf16.mxu0 0
    %2541 = vmatpush1.bf16.msra.mxu0 0
    %2542 = vmatprep.subr.bf16.mxu0 0
    %2543 = vmatpush1.bf16.msra.mxu0 0
    %2544 = vmatprep.subr.bf16.mxu0 0
    %2545 = vmatpush1.bf16.msra.mxu0 0
    %2546 = vmatprep.subr.bf16.mxu0 0
    %2547 = vmatpush1.bf16.msra.mxu0 0
    %2548 = vmatprep.subr.bf16.mxu0 0
    %2549 = vmatpush1.bf16.msra.mxu0 0
    %2550 = vmatprep.subr.bf16.mxu0 0
    %2551 = vmatpush1.bf16.msra.mxu0 0
    %2552 = vmatprep.subr.bf16.mxu0 0
    %2553 = vmatpush1.bf16.msra.mxu0 0
    %2554 = vmatprep.subr.bf16.mxu0 0
    %2555 = vmatpush1.bf16.msra.mxu0 0
    %2556 = vmatprep.mubr.bf16.mxu0 0
    %2557 = vmatmul.mubr.bf16.gmra.mrb[0].mxu0 %v2513
    %v2558 = vpop.f32.mrb[0].mxu0
    %v2559 = vadd.f32 0.0, %v2558
    %v2560 = vpop.f32.mrb[0].mxu0
    %v2561 = vadd.f32 0.0, %v2560
    %v2562 = vpop.f32.mrb[0].mxu0
    %v2563 = vadd.f32 0.0, %v2562
    %v2564 = vpop.f32.mrb[0].mxu0
    %v2565 = vadd.f32 0.0, %v2564
    %2566 = vmatprep.mubr.bf16.mxu0 0
    %2567 = vmatmul.mubr.bf16.gmra.mrb[0].mxu0 %v2516
    %v2568 = vpop.f32.mrb[0].mxu0
    %v2569 = vadd.f32 0.0, %v2568
    %v2570 = vpop.f32.mrb[0].mxu0
    %v2571 = vadd.f32 0.0, %v2570
    %v2572 = vpop.f32.mrb[0].mxu0
    %v2573 = vadd.f32 0.0, %v2572
    %v2574 = vpop.f32.mrb[0].mxu0
    %v2575 = vadd.f32 0.0, %v2574
    %2576 = vmatprep.mubr.bf16.mxu0 0
    %2577 = vmatmul.mubr.bf16.gmra.mrb[0].mxu0 %v2519
    %v2578 = vpop.f32.mrb[0].mxu0
    %v2579 = vadd.f32 0.0, %v2578
    %v2580 = vpop.f32.mrb[0].mxu0
    %v2581 = vadd.f32 0.0, %v2580
    %v2582 = vpop.f32.mrb[0].mxu0
    %v2583 = vadd.f32 0.0, %v2582
    %v2584 = vpop.f32.mrb[0].mxu0
    %v2585 = vadd.f32 0.0, %v2584
    %2586 = vmatprep.mubr.bf16.mxu0 0
    %2587 = vmatmul.mubr.bf16.gmra.mrb[0].mxu0 %v2522
    %v2588 = vpop.f32.mrb[0].mxu0
    %v2589 = vadd.f32 0.0, %v2588
    %v2590 = vpop.f32.mrb[0].mxu0
    %v2591 = vadd.f32 0.0, %v2590
    %v2592 = vpop.f32.mrb[0].mxu0
    %v2593 = vadd.f32 0.0, %v2592
    %v2594 = vpop.f32.mrb[0].mxu0
    %v2595 = vadd.f32 0.0, %v2594
    %2596 = vdwg.mxu0
    %v2601 = vunpack.c.l.b16 %v2473
    %v2602 = vunpack.c.h.b16 %v2473
    %v2603 = vunpack.c.l.b16 %v2474
    %v2604 = vunpack.c.h.b16 %v2474
    %v2605 = vunpack.c.l.b16 %v2475
    %v2606 = vunpack.c.h.b16 %v2475
    %v2607 = vunpack.c.l.b16 %v2476
    %v2608 = vunpack.c.h.b16 %v2476
    %v2609 = vpack.c.b16 %v2603, %v2601
    %v2610 = vpack.c.b16 %v2604, %v2602
    %v2611 = vpack.c.b16 %v2607, %v2605
    %v2612 = vpack.c.b16 %v2608, %v2606
    %v2618 = vsel %vm131, %v2484, 0
    %v2621 = vsel %vm131, %v2485, 0
    %v2624 = vsel %vm131, %v2486, 0
    %v2627 = vsel %vm131, %v2487, 0
    %2629 = vmatprep.subr.bf16.mxu0 %v2610
    %2630 = vmatpush1.bf16.msra.mxu0 %v2609
    %2631 = vmatprep.subr.bf16.mxu0 %v2612
    %2632 = vmatpush1.bf16.msra.mxu0 %v2611
    %2633 = vmatprep.subr.bf16.mxu0 0
    %2634 = vmatpush1.bf16.msra.mxu0 0
    %2635 = vmatprep.subr.bf16.mxu0 0
    %2636 = vmatpush1.bf16.msra.mxu0 0
    %2637 = vmatprep.subr.bf16.mxu0 0
    %2638 = vmatpush1.bf16.msra.mxu0 0
    %2639 = vmatprep.subr.bf16.mxu0 0
    %2640 = vmatpush1.bf16.msra.mxu0 0
    %2641 = vmatprep.subr.bf16.mxu0 0
    %2642 = vmatpush1.bf16.msra.mxu0 0
    %2643 = vmatprep.subr.bf16.mxu0 0
    %2644 = vmatpush1.bf16.msra.mxu0 0
    %2645 = vmatprep.subr.bf16.mxu0 0
    %2646 = vmatpush1.bf16.msra.mxu0 0
    %2647 = vmatprep.subr.bf16.mxu0 0
    %2648 = vmatpush1.bf16.msra.mxu0 0
    %2649 = vmatprep.subr.bf16.mxu0 0
    %2650 = vmatpush1.bf16.msra.mxu0 0
    %2651 = vmatprep.subr.bf16.mxu0 0
    %2652 = vmatpush1.bf16.msra.mxu0 0
    %2653 = vmatprep.subr.bf16.mxu0 0
    %2654 = vmatpush1.bf16.msra.mxu0 0
    %2655 = vmatprep.subr.bf16.mxu0 0
    %2656 = vmatpush1.bf16.msra.mxu0 0
    %2657 = vmatprep.subr.bf16.mxu0 0
    %2658 = vmatpush1.bf16.msra.mxu0 0
    %2659 = vmatprep.subr.bf16.mxu0 0
    %2660 = vmatpush1.bf16.msra.mxu0 0
    %2661 = vmatprep.mubr.bf16.mxu0 0
    %2662 = vmatmul.mubr.bf16.gmra.mrb[0].mxu0 %v2618
    %v2663 = vpop.f32.mrb[0].mxu0
    %v2664 = vadd.f32 %v2559, %v2663
    %v2665 = vpop.f32.mrb[0].mxu0
    %v2666 = vadd.f32 %v2561, %v2665
    %v2667 = vpop.f32.mrb[0].mxu0
    %v2668 = vadd.f32 %v2563, %v2667
    %v2669 = vpop.f32.mrb[0].mxu0
    %v2670 = vadd.f32 %v2565, %v2669
    %2671 = vmatprep.mubr.bf16.mxu0 0
    %2672 = vmatmul.mubr.bf16.gmra.mrb[0].mxu0 %v2621
    %v2673 = vpop.f32.mrb[0].mxu0
    %v2674 = vadd.f32 %v2569, %v2673
    %v2675 = vpop.f32.mrb[0].mxu0
    %v2676 = vadd.f32 %v2571, %v2675
    %v2677 = vpop.f32.mrb[0].mxu0
    %v2678 = vadd.f32 %v2573, %v2677
    %v2679 = vpop.f32.mrb[0].mxu0
    %v2680 = vadd.f32 %v2575, %v2679
    %2681 = vmatprep.mubr.bf16.mxu0 0
    %2682 = vmatmul.mubr.bf16.gmra.mrb[0].mxu0 %v2624
    %v2683 = vpop.f32.mrb[0].mxu0
    %v2684 = vadd.f32 %v2579, %v2683
    %v2685 = vpop.f32.mrb[0].mxu0
    %v2686 = vadd.f32 %v2581, %v2685
    %v2687 = vpop.f32.mrb[0].mxu0
    %v2688 = vadd.f32 %v2583, %v2687
    %v2689 = vpop.f32.mrb[0].mxu0
    %v2690 = vadd.f32 %v2585, %v2689
    %2691 = vmatprep.mubr.bf16.mxu0 0
    %2692 = vmatmul.mubr.bf16.gmra.mrb[0].mxu0 %v2627
    %v2693 = vpop.f32.mrb[0].mxu0
    %v2694 = vadd.f32 %v2589, %v2693
    %v2695 = vpop.f32.mrb[0].mxu0
    %v2696 = vadd.f32 %v2591, %v2695
    %v2697 = vpop.f32.mrb[0].mxu0
    %v2698 = vadd.f32 %v2593, %v2697
    %v2699 = vpop.f32.mrb[0].mxu0
    %v2700 = vadd.f32 %v2595, %v2699
    %2701 = vdwg.mxu0
    %v2703 = vlaneseq
    %v2704 = vshrl.u32 %v2703, 7
    %v2705 = vsub.s32 0, %v2704
    %v2706 = vrot.slane %v2483, %v2705
    %v2707 = vlaneseq
    %v2708 = vshrl.u32 %v2707, 7
    %v2709 = vsub.s32 1, %v2708
    %v2710 = vrot.slane %v2483, %v2709
    %v2713 = vadd.f32 %v2664, %v2706
    %v2714 = vadd.f32 %v2666, %v2710
    %v2715 = vadd.f32 %v2668, %v2706
    %v2716 = vadd.f32 %v2670, %v2710
    %v2717 = vadd.f32 %v2674, %v2706
    %v2718 = vadd.f32 %v2676, %v2710
    %v2719 = vadd.f32 %v2678, %v2706
    %v2720 = vadd.f32 %v2680, %v2710
    %v2721 = vadd.f32 %v2684, %v2706
    %v2722 = vadd.f32 %v2686, %v2710
    %v2723 = vadd.f32 %v2688, %v2706
    %v2724 = vadd.f32 %v2690, %v2710
    %v2725 = vadd.f32 %v2694, %v2706
    %v2726 = vadd.f32 %v2696, %v2710
    %v2727 = vadd.f32 %v2698, %v2706
    %v2728 = vadd.f32 %v2700, %v2710
    %v2729 = vpack.c.bf16 %v2715, %v2713
    %v2730 = vpack.c.bf16 %v2716, %v2714
    %v2731 = vpack.c.bf16 %v2719, %v2717
    %v2732 = vpack.c.bf16 %v2720, %v2718
    %v2733 = vpack.c.bf16 %v2723, %v2721
    %v2734 = vpack.c.bf16 %v2724, %v2722
    %v2735 = vpack.c.bf16 %v2727, %v2725
    %v2736 = vpack.c.bf16 %v2728, %v2726
    %2737 = vst [vmem:[#allocation2] sm:$0xff] %v2729
    %2738 = vst [vmem:[#allocation2 + $0x8] sm:$0xff] %v2730
    %2739 = vst [vmem:[#allocation2 + $0x10] sm:$0xff] %v2731
    %2740 = vst [vmem:[#allocation2 + $0x18] sm:$0xff] %v2732
    %2741 = vst [vmem:[#allocation2 + $0x20] sm:$0xff] %v2733
    %2742 = vst [vmem:[#allocation2 + $0x28] sm:$0xff] %v2734
    %2743 = vst [vmem:[#allocation2 + $0x30] sm:$0xff] %v2735
    %2744 = vst [vmem:[#allocation2 + $0x38] sm:$0xff] %v2736
    %s2745 = scalar_lea.vmem [#allocation7], 128
    %v2746 = vld [vmem:[%s2745] sm:$0xff]
    %v2747 = vld [vmem:[%s2745 + $0x8] sm:$0xff]
    %v2748 = vld [vmem:[%s2745 + $0x10] sm:$0xff]
    %v2749 = vld [vmem:[%s2745 + $0x18] sm:$0xff]
    %v2750 = vld [vmem:[%s2745 + $0x20] sm:$0xff]
    %v2751 = vld [vmem:[%s2745 + $0x28] sm:$0xff]
    %v2752 = vld [vmem:[%s2745 + $0x30] sm:$0xff]
    %v2753 = vld [vmem:[%s2745 + $0x38] sm:$0xff]
    %v2754 = vld [vmem:[#allocation2] sm:$0xf]
    %v2755 = vld [vmem:[#allocation2 + $0x38] sm:$0xf0]
    %v2757 = vrot.slane %v2755, 4
    %v2759 = vunpack.c.l.bf16 %v2754
    %v2760 = vunpack.c.l.bf16 %v2757
    %v2769 = vunpack.c.l.b16 %v2746
    %v2770 = vunpack.c.h.b16 %v2746
    %v2771 = vunpack.c.l.b16 %v2747
    %v2772 = vunpack.c.h.b16 %v2747
    %v2773 = vunpack.c.l.b16 %v2748
    %v2774 = vunpack.c.h.b16 %v2748
    %v2775 = vunpack.c.l.b16 %v2749
    %v2776 = vunpack.c.h.b16 %v2749
    %v2777 = vunpack.c.l.b16 %v2750
    %v2778 = vunpack.c.h.b16 %v2750
    %v2779 = vunpack.c.l.b16 %v2751
    %v2780 = vunpack.c.h.b16 %v2751
    %v2781 = vunpack.c.l.b16 %v2752
    %v2782 = vunpack.c.h.b16 %v2752
    %v2783 = vunpack.c.l.b16 %v2753
    %v2784 = vunpack.c.h.b16 %v2753
    %v2785 = vpack.c.b16 %v2771, %v2769
    %v2786 = vpack.c.b16 %v2772, %v2770
    %v2787 = vpack.c.b16 %v2775, %v2773
    %v2788 = vpack.c.b16 %v2776, %v2774
    %v2789 = vpack.c.b16 %v2779, %v2777
    %v2790 = vpack.c.b16 %v2780, %v2778
    %v2791 = vpack.c.b16 %v2783, %v2781
    %v2792 = vpack.c.b16 %v2784, %v2782
    %2801 = vmatprep.subr.bf16.mxu0 %v2786
    %2802 = vmatpush1.bf16.msra.mxu0 %v2785
    %2803 = vmatprep.subr.bf16.mxu0 %v2788
    %2804 = vmatpush1.bf16.msra.mxu0 %v2787
    %2805 = vmatprep.subr.bf16.mxu0 %v2790
    %2806 = vmatpush1.bf16.msra.mxu0 %v2789
    %2807 = vmatprep.subr.bf16.mxu0 %v2792
    %2808 = vmatpush1.bf16.msra.mxu0 %v2791
    %2809 = vmatprep.subr.bf16.mxu0 0
    %2810 = vmatpush1.bf16.msra.mxu0 0
    %2811 = vmatprep.subr.bf16.mxu0 0
    %2812 = vmatpush1.bf16.msra.mxu0 0
    %2813 = vmatprep.subr.bf16.mxu0 0
    %2814 = vmatpush1.bf16.msra.mxu0 0
    %2815 = vmatprep.subr.bf16.mxu0 0
    %2816 = vmatpush1.bf16.msra.mxu0 0
    %2817 = vmatprep.subr.bf16.mxu0 0
    %2818 = vmatpush1.bf16.msra.mxu0 0
    %2819 = vmatprep.subr.bf16.mxu0 0
    %2820 = vmatpush1.bf16.msra.mxu0 0
    %2821 = vmatprep.subr.bf16.mxu0 0
    %2822 = vmatpush1.bf16.msra.mxu0 0
    %2823 = vmatprep.subr.bf16.mxu0 0
    %2824 = vmatpush1.bf16.msra.mxu0 0
    %2825 = vmatprep.subr.bf16.mxu0 0
    %2826 = vmatpush1.bf16.msra.mxu0 0
    %2827 = vmatprep.subr.bf16.mxu0 0
    %2828 = vmatpush1.bf16.msra.mxu0 0
    %2829 = vmatprep.subr.bf16.mxu0 0
    %2830 = vmatpush1.bf16.msra.mxu0 0
    %2831 = vmatprep.subr.bf16.mxu0 0
    %2832 = vmatpush1.bf16.msra.mxu0 0
    %2833 = vmatprep.mubr.bf16.mxu0 0
    %2834 = vmatmul.mubr.bf16.gmra.mrb[0].mxu0 %v290
    %v2835 = vpop.f32.mrb[0].mxu0
    %v2836 = vadd.f32 %v2759, %v2835
    %v2837 = vpop.f32.mrb[0].mxu0
    %v2838 = vadd.f32 %v2760, %v2837
    %v2839 = vpop.f32.mrb[0].mxu0
    %v2840 = vpop.f32.mrb[0].mxu0
    %2841 = vdwg.mxu0
    %v2842 = vxor.u32 %v2836, 2147483648
    %v2843 = vxor.u32 %v2838, 2147483648
    %v2844 = vmul.f32 %v2842, 1.442695
    %v2845 = vpow.pop %v2844
    %v2846 = vmul.f32 %v2843, 1.442695
    %v2847 = vpow.pop %v2846
    %v2848 = vadd.f32 %v2845, 1.0
    %v2849 = vadd.f32 %v2847, 1.0
    %v2850 = vrcp.pop %v2848
    %v2851 = vmul.f32 1.0, %v2850
    %v2852 = vrcp.pop %v2849
    %v2853 = vmul.f32 1.0, %v2852
    %v2854 = vtanh.pop %v2836
    %v2855 = vtanh.pop %v2838
    %v2856 = vmul.f32 %v2851, 0.0
    %2858 = vrot.lane.b32.xlu0 %v2854, 64
    %v2859 = vpop.permute.xlu0 %2858
    %v2861 = vmul.f32 %v2851, %v2859
    %2863 = vrot.lane.b32.xlu0 %v2861, 32
    %v2864 = vpop.permute.xlu0 %2863
    %v2866 = vadd.f32 %v2856, %v2864
    %v2867 = vmul.f32 %v2853, 0.0
    %2869 = vrot.lane.b32.xlu0 %v2855, 64
    %v2870 = vpop.permute.xlu0 %2869
    %v2872 = vmul.f32 %v2853, %v2870
    %2874 = vrot.lane.b32.xlu0 %v2872, 32
    %v2875 = vpop.permute.xlu0 %2874
    %v2877 = vadd.f32 %v2867, %v2875
    %2879 = vrot.lane.b32.xlu0 %v2866, 96
    %v2880 = vpop.permute.xlu0 %2879
    %v2882 = vsel %vm131, %v2880, %v2877
    %2884 = vrot.lane.b32.xlu0 %v2851, 32
    %v2885 = vpop.permute.xlu0 %2884
    %2888 = vrot.lane.b32.xlu0 %v2853, 64
    %v2889 = vpop.permute.xlu0 %2888
    %v2891 = vsel %vm131, %v2885, %v2889
    %v2892 = vtanh.pop %v2882
    %v2893 = vmul.f32 %v2891, %v2892
    %vm2894 = vcmp.lt.s32.totalorder %v66, 32
    %v2895 = vsel %vm2894, 0, 7
    %2896 = vset.pattern.permute.xlu0 0
    %2897 = vperm.xlu0 %2896, %v64
    %v2898 = vpop.permute.xlu0 %2897
    %vm2899 = vcmp.eq.s32.totalorder %v2898, %v2895
    %v2900 = vsel %vm2899, %v2893, 0.0
    %v2901 = vpack.c.bf16 %v2893, %v2893
    %v2902 = vld [vmem:[#allocation2] sm:$0xf0]
    %v2903 = vld [vmem:[#allocation2 + $0x38] sm:$0xf]
    %v2905 = vrot.slane %v2903, 4
    %v2907 = vrot.slane %v2902, 4
    %v2908 = vrot.slane %v2905, 4
    %v2911 = vunpack.c.l.bf16 %v2907
    %v2912 = vunpack.c.l.bf16 %v2908
    %v2914 = vsel %vm288, %v2901, 0
    %2916 = vmatprep.subr.bf16.mxu0 %v2786
    %2917 = vmatpush1.bf16.msra.mxu0 %v2785
    %2918 = vmatprep.subr.bf16.mxu0 %v2788
    %2919 = vmatpush1.bf16.msra.mxu0 %v2787
    %2920 = vmatprep.subr.bf16.mxu0 %v2790
    %2921 = vmatpush1.bf16.msra.mxu0 %v2789
    %2922 = vmatprep.subr.bf16.mxu0 %v2792
    %2923 = vmatpush1.bf16.msra.mxu0 %v2791
    %2924 = vmatprep.subr.bf16.mxu0 0
    %2925 = vmatpush1.bf16.msra.mxu0 0
    %2926 = vmatprep.subr.bf16.mxu0 0
    %2927 = vmatpush1.bf16.msra.mxu0 0
    %2928 = vmatprep.subr.bf16.mxu0 0
    %2929 = vmatpush1.bf16.msra.mxu0 0
    %2930 = vmatprep.subr.bf16.mxu0 0
    %2931 = vmatpush1.bf16.msra.mxu0 0
    %2932 = vmatprep.subr.bf16.mxu0 0
    %2933 = vmatpush1.bf16.msra.mxu0 0
    %2934 = vmatprep.subr.bf16.mxu0 0
    %2935 = vmatpush1.bf16.msra.mxu0 0
    %2936 = vmatprep.subr.bf16.mxu0 0
    %2937 = vmatpush1.bf16.msra.mxu0 0
    %2938 = vmatprep.subr.bf16.mxu0 0
    %2939 = vmatpush1.bf16.msra.mxu0 0
    %2940 = vmatprep.subr.bf16.mxu0 0
    %2941 = vmatpush1.bf16.msra.mxu0 0
    %2942 = vmatprep.subr.bf16.mxu0 0
    %2943 = vmatpush1.bf16.msra.mxu0 0
    %2944 = vmatprep.subr.bf16.mxu0 0
    %2945 = vmatpush1.bf16.msra.mxu0 0
    %2946 = vmatprep.subr.bf16.mxu0 0
    %2947 = vmatpush1.bf16.msra.mxu0 0
    %2948 = vmatprep.mubr.bf16.mxu0 0
    %2949 = vmatmul.mubr.bf16.gmra.mrb[0].mxu0 %v2914
    %v2950 = vpop.f32.mrb[0].mxu0
    %v2951 = vadd.f32 %v2911, %v2950
    %v2952 = vpop.f32.mrb[0].mxu0
    %v2953 = vadd.f32 %v2912, %v2952
    %v2954 = vpop.f32.mrb[0].mxu0
    %v2955 = vpop.f32.mrb[0].mxu0
    %2956 = vdwg.mxu0
    %v2957 = vxor.u32 %v2951, 2147483648
    %v2958 = vxor.u32 %v2953, 2147483648
    %v2959 = vmul.f32 %v2957, 1.442695
    %v2960 = vpow.pop %v2959
    %v2961 = vmul.f32 %v2958, 1.442695
    %v2962 = vpow.pop %v2961
    %v2963 = vadd.f32 %v2960, 1.0
    %v2964 = vadd.f32 %v2962, 1.0
    %v2965 = vrcp.pop %v2963
    %v2966 = vmul.f32 1.0, %v2965
    %v2967 = vrcp.pop %v2964
    %v2968 = vmul.f32 1.0, %v2967
    %v2969 = vtanh.pop %v2951
    %v2970 = vtanh.pop %v2953
    %2972 = vrot.lane.b32.xlu0 %v2882, 32
    %v2973 = vpop.permute.xlu0 %2972
    %v2975 = vmul.f32 %v2966, %v2973
    %2977 = vrot.lane.b32.xlu0 %v2969, 64
    %v2978 = vpop.permute.xlu0 %2977
    %v2980 = vmul.f32 %v2966, %v2978
    %2982 = vrot.lane.b32.xlu0 %v2980, 32
    %v2983 = vpop.permute.xlu0 %2982
    %v2985 = vadd.f32 %v2975, %v2983
    %v2986 = vmul.f32 %v2968, %v2882
    %2988 = vrot.lane.b32.xlu0 %v2970, 64
    %v2989 = vpop.permute.xlu0 %2988
    %v2991 = vmul.f32 %v2968, %v2989
    %2993 = vrot.lane.b32.xlu0 %v2991, 32
    %v2994 = vpop.permute.xlu0 %2993
    %v2996 = vadd.f32 %v2986, %v2994
    %2998 = vrot.lane.b32.xlu0 %v2985, 96
    %v2999 = vpop.permute.xlu0 %2998
    %v3001 = vsel %vm131, %v2999, %v2996
    %3003 = vrot.lane.b32.xlu0 %v2966, 32
    %v3004 = vpop.permute.xlu0 %3003
    %3007 = vrot.lane.b32.xlu0 %v2968, 64
    %v3008 = vpop.permute.xlu0 %3007
    %v3010 = vsel %vm131, %v3004, %v3008
    %v3011 = vtanh.pop %v3001
    %v3012 = vmul.f32 %v3010, %v3011
    %v3013 = vsel %vm2894, 1, 6
    %vm3014 = vcmp.eq.s32.totalorder %v2898, %v3013
    %v3015 = vsel %vm3014, %v3012, %v2900
    %v3016 = vpack.c.bf16 %v3012, %v3012
    %v3017 = vld [vmem:[#allocation2 + $0x10] sm:$0xf]
    %v3018 = vld [vmem:[#allocation2 + $0x28] sm:$0xf0]
    %v3020 = vrot.slane %v3018, 4
    %v3022 = vunpack.c.l.bf16 %v3017
    %v3023 = vunpack.c.l.bf16 %v3020
    %v3025 = vsel %vm288, %v3016, 0
    %3027 = vmatprep.subr.bf16.mxu0 %v2786
    %3028 = vmatpush1.bf16.msra.mxu0 %v2785
    %3029 = vmatprep.subr.bf16.mxu0 %v2788
    %3030 = vmatpush1.bf16.msra.mxu0 %v2787
    %3031 = vmatprep.subr.bf16.mxu0 %v2790
    %3032 = vmatpush1.bf16.msra.mxu0 %v2789
    %3033 = vmatprep.subr.bf16.mxu0 %v2792
    %3034 = vmatpush1.bf16.msra.mxu0 %v2791
    %3035 = vmatprep.subr.bf16.mxu0 0
    %3036 = vmatpush1.bf16.msra.mxu0 0
    %3037 = vmatprep.subr.bf16.mxu0 0
    %3038 = vmatpush1.bf16.msra.mxu0 0
    %3039 = vmatprep.subr.bf16.mxu0 0
    %3040 = vmatpush1.bf16.msra.mxu0 0
    %3041 = vmatprep.subr.bf16.mxu0 0
    %3042 = vmatpush1.bf16.msra.mxu0 0
    %3043 = vmatprep.subr.bf16.mxu0 0
    %3044 = vmatpush1.bf16.msra.mxu0 0
    %3045 = vmatprep.subr.bf16.mxu0 0
    %3046 = vmatpush1.bf16.msra.mxu0 0
    %3047 = vmatprep.subr.bf16.mxu0 0
    %3048 = vmatpush1.bf16.msra.mxu0 0
    %3049 = vmatprep.subr.bf16.mxu0 0
    %3050 = vmatpush1.bf16.msra.mxu0 0
    %3051 = vmatprep.subr.bf16.mxu0 0
    %3052 = vmatpush1.bf16.msra.mxu0 0
    %3053 = vmatprep.subr.bf16.mxu0 0
    %3054 = vmatpush1.bf16.msra.mxu0 0
    %3055 = vmatprep.subr.bf16.mxu0 0
    %3056 = vmatpush1.bf16.msra.mxu0 0
    %3057 = vmatprep.subr.bf16.mxu0 0
    %3058 = vmatpush1.bf16.msra.mxu0 0
    %3059 = vmatprep.mubr.bf16.mxu0 0
    %3060 = vmatmul.mubr.bf16.gmra.mrb[0].mxu0 %v3025
    %v3061 = vpop.f32.mrb[0].mxu0
    %v3062 = vadd.f32 %v3022, %v3061
    %v3063 = vpop.f32.mrb[0].mxu0
    %v3064 = vadd.f32 %v3023, %v3063
    %v3065 = vpop.f32.mrb[0].mxu0
    %v3066 = vpop.f32.mrb[0].mxu0
    %3067 = vdwg.mxu0
    %v3068 = vxor.u32 %v3062, 2147483648
    %v3069 = vxor.u32 %v3064, 2147483648
    %v3070 = vmul.f32 %v3068, 1.442695
    %v3071 = vpow.pop %v3070
    %v3072 = vmul.f32 %v3069, 1.442695
    %v3073 = vpow.pop %v3072
    %v3074 = vadd.f32 %v3071, 1.0
    %v3075 = vadd.f32 %v3073, 1.0
    %v3076 = vrcp.pop %v3074
    %v3077 = vmul.f32 1.0, %v3076
    %v3078 = vrcp.pop %v3075
    %v3079 = vmul.f32 1.0, %v3078
    %v3080 = vtanh.pop %v3062
    %v3081 = vtanh.pop %v3064
    %3083 = vrot.lane.b32.xlu0 %v3001, 32
    %v3084 = vpop.permute.xlu0 %3083
    %v3086 = vmul.f32 %v3077, %v3084
    %3088 = vrot.lane.b32.xlu0 %v3080, 64
    %v3089 = vpop.permute.xlu0 %3088
    %v3091 = vmul.f32 %v3077, %v3089
    %3093 = vrot.lane.b32.xlu0 %v3091, 32
    %v3094 = vpop.permute.xlu0 %3093
    %v3096 = vadd.f32 %v3086, %v3094
    %v3097 = vmul.f32 %v3079, %v3001
    %3099 = vrot.lane.b32.xlu0 %v3081, 64
    %v3100 = vpop.permute.xlu0 %3099
    %v3102 = vmul.f32 %v3079, %v3100
    %3104 = vrot.lane.b32.xlu0 %v3102, 32
    %v3105 = vpop.permute.xlu0 %3104
    %v3107 = vadd.f32 %v3097, %v3105
    %3109 = vrot.lane.b32.xlu0 %v3096, 96
    %v3110 = vpop.permute.xlu0 %3109
    %v3112 = vsel %vm131, %v3110, %v3107
    %3114 = vrot.lane.b32.xlu0 %v3077, 32
    %v3115 = vpop.permute.xlu0 %3114
    %3118 = vrot.lane.b32.xlu0 %v3079, 64
    %v3119 = vpop.permute.xlu0 %3118
    %v3121 = vsel %vm131, %v3115, %v3119
    %v3122 = vtanh.pop %v3112
    %v3123 = vmul.f32 %v3121, %v3122
    %v3124 = vsel %vm2894, 2, 5
    %vm3125 = vcmp.eq.s32.totalorder %v2898, %v3124
    %v3126 = vsel %vm3125, %v3123, %v3015
    %v3127 = vpack.c.bf16 %v3123, %v3123
    %v3128 = vld [vmem:[#allocation2 + $0x10] sm:$0xf0]
    %v3129 = vld [vmem:[#allocation2 + $0x28] sm:$0xf]
    %v3131 = vrot.slane %v3129, 4
    %v3133 = vrot.slane %v3128, 4
    %v3134 = vrot.slane %v3131, 4
    %v3137 = vunpack.c.l.bf16 %v3133
    %v3138 = vunpack.c.l.bf16 %v3134
    %v3140 = vsel %vm288, %v3127, 0
    %3142 = vmatprep.subr.bf16.mxu0 %v2786
    %3143 = vmatpush1.bf16.msra.mxu0 %v2785
    %3144 = vmatprep.subr.bf16.mxu0 %v2788
    %3145 = vmatpush1.bf16.msra.mxu0 %v2787
    %3146 = vmatprep.subr.bf16.mxu0 %v2790
    %3147 = vmatpush1.bf16.msra.mxu0 %v2789
    %3148 = vmatprep.subr.bf16.mxu0 %v2792
    %3149 = vmatpush1.bf16.msra.mxu0 %v2791
    %3150 = vmatprep.subr.bf16.mxu0 0
    %3151 = vmatpush1.bf16.msra.mxu0 0
    %3152 = vmatprep.subr.bf16.mxu0 0
    %3153 = vmatpush1.bf16.msra.mxu0 0
    %3154 = vmatprep.subr.bf16.mxu0 0
    %3155 = vmatpush1.bf16.msra.mxu0 0
    %3156 = vmatprep.subr.bf16.mxu0 0
    %3157 = vmatpush1.bf16.msra.mxu0 0
    %3158 = vmatprep.subr.bf16.mxu0 0
    %3159 = vmatpush1.bf16.msra.mxu0 0
    %3160 = vmatprep.subr.bf16.mxu0 0
    %3161 = vmatpush1.bf16.msra.mxu0 0
    %3162 = vmatprep.subr.bf16.mxu0 0
    %3163 = vmatpush1.bf16.msra.mxu0 0
    %3164 = vmatprep.subr.bf16.mxu0 0
    %3165 = vmatpush1.bf16.msra.mxu0 0
    %3166 = vmatprep.subr.bf16.mxu0 0
    %3167 = vmatpush1.bf16.msra.mxu0 0
    %3168 = vmatprep.subr.bf16.mxu0 0
    %3169 = vmatpush1.bf16.msra.mxu0 0
    %3170 = vmatprep.subr.bf16.mxu0 0
    %3171 = vmatpush1.bf16.msra.mxu0 0
    %3172 = vmatprep.subr.bf16.mxu0 0
    %3173 = vmatpush1.bf16.msra.mxu0 0
    %3174 = vmatprep.mubr.bf16.mxu0 0
    %3175 = vmatmul.mubr.bf16.gmra.mrb[0].mxu0 %v3140
    %v3176 = vpop.f32.mrb[0].mxu0
    %v3177 = vadd.f32 %v3137, %v3176
    %v3178 = vpop.f32.mrb[0].mxu0
    %v3179 = vadd.f32 %v3138, %v3178
    %v3180 = vpop.f32.mrb[0].mxu0
    %v3181 = vpop.f32.mrb[0].mxu0
    %3182 = vdwg.mxu0
    %v3183 = vxor.u32 %v3177, 2147483648
    %v3184 = vxor.u32 %v3179, 2147483648
    %v3185 = vmul.f32 %v3183, 1.442695
    %v3186 = vpow.pop %v3185
    %v3187 = vmul.f32 %v3184, 1.442695
    %v3188 = vpow.pop %v3187
    %v3189 = vadd.f32 %v3186, 1.0
    %v3190 = vadd.f32 %v3188, 1.0
    %v3191 = vrcp.pop %v3189
    %v3192 = vmul.f32 1.0, %v3191
    %v3193 = vrcp.pop %v3190
    %v3194 = vmul.f32 1.0, %v3193
    %v3195 = vtanh.pop %v3177
    %v3196 = vtanh.pop %v3179
    %3198 = vrot.lane.b32.xlu0 %v3112, 32
    %v3199 = vpop.permute.xlu0 %3198
    %v3201 = vmul.f32 %v3192, %v3199
    %3203 = vrot.lane.b32.xlu0 %v3195, 64
    %v3204 = vpop.permute.xlu0 %3203
    %v3206 = vmul.f32 %v3192, %v3204
    %3208 = vrot.lane.b32.xlu0 %v3206, 32
    %v3209 = vpop.permute.xlu0 %3208
    %v3211 = vadd.f32 %v3201, %v3209
    %v3212 = vmul.f32 %v3194, %v3112
    %3214 = vrot.lane.b32.xlu0 %v3196, 64
    %v3215 = vpop.permute.xlu0 %3214
    %v3217 = vmul.f32 %v3194, %v3215
    %3219 = vrot.lane.b32.xlu0 %v3217, 32
    %v3220 = vpop.permute.xlu0 %3219
    %v3222 = vadd.f32 %v3212, %v3220
    %3224 = vrot.lane.b32.xlu0 %v3211, 96
    %v3225 = vpop.permute.xlu0 %3224
    %v3227 = vsel %vm131, %v3225, %v3222
    %3229 = vrot.lane.b32.xlu0 %v3192, 32
    %v3230 = vpop.permute.xlu0 %3229
    %3233 = vrot.lane.b32.xlu0 %v3194, 64
    %v3234 = vpop.permute.xlu0 %3233
    %v3236 = vsel %vm131, %v3230, %v3234
    %v3237 = vtanh.pop %v3227
    %v3238 = vmul.f32 %v3236, %v3237
    %v3239 = vsel %vm2894, 3, 4
    %vm3240 = vcmp.eq.s32.totalorder %v2898, %v3239
    %v3241 = vsel %vm3240, %v3238, %v3126
    %v3242 = vpack.c.bf16 %v3238, %v3238
    %v3243 = vld [vmem:[#allocation2 + $0x20] sm:$0xf]
    %v3244 = vld [vmem:[#allocation2 + $0x18] sm:$0xf0]
    %v3246 = vrot.slane %v3244, 4
    %v3248 = vunpack.c.l.bf16 %v3243
    %v3249 = vunpack.c.l.bf16 %v3246
    %v3251 = vsel %vm288, %v3242, 0
    %3253 = vmatprep.subr.bf16.mxu0 %v2786
    %3254 = vmatpush1.bf16.msra.mxu0 %v2785
    %3255 = vmatprep.subr.bf16.mxu0 %v2788
    %3256 = vmatpush1.bf16.msra.mxu0 %v2787
    %3257 = vmatprep.subr.bf16.mxu0 %v2790
    %3258 = vmatpush1.bf16.msra.mxu0 %v2789
    %3259 = vmatprep.subr.bf16.mxu0 %v2792
    %3260 = vmatpush1.bf16.msra.mxu0 %v2791
    %3261 = vmatprep.subr.bf16.mxu0 0
    %3262 = vmatpush1.bf16.msra.mxu0 0
    %3263 = vmatprep.subr.bf16.mxu0 0
    %3264 = vmatpush1.bf16.msra.mxu0 0
    %3265 = vmatprep.subr.bf16.mxu0 0
    %3266 = vmatpush1.bf16.msra.mxu0 0
    %3267 = vmatprep.subr.bf16.mxu0 0
    %3268 = vmatpush1.bf16.msra.mxu0 0
    %3269 = vmatprep.subr.bf16.mxu0 0
    %3270 = vmatpush1.bf16.msra.mxu0 0
    %3271 = vmatprep.subr.bf16.mxu0 0
    %3272 = vmatpush1.bf16.msra.mxu0 0
    %3273 = vmatprep.subr.bf16.mxu0 0
    %3274 = vmatpush1.bf16.msra.mxu0 0
    %3275 = vmatprep.subr.bf16.mxu0 0
    %3276 = vmatpush1.bf16.msra.mxu0 0
    %3277 = vmatprep.subr.bf16.mxu0 0
    %3278 = vmatpush1.bf16.msra.mxu0 0
    %3279 = vmatprep.subr.bf16.mxu0 0
    %3280 = vmatpush1.bf16.msra.mxu0 0
    %3281 = vmatprep.subr.bf16.mxu0 0
    %3282 = vmatpush1.bf16.msra.mxu0 0
    %3283 = vmatprep.subr.bf16.mxu0 0
    %3284 = vmatpush1.bf16.msra.mxu0 0
    %3285 = vmatprep.mubr.bf16.mxu0 0
    %3286 = vmatmul.mubr.bf16.gmra.mrb[0].mxu0 %v3251
    %v3287 = vpop.f32.mrb[0].mxu0
    %v3288 = vadd.f32 %v3248, %v3287
    %v3289 = vpop.f32.mrb[0].mxu0
    %v3290 = vadd.f32 %v3249, %v3289
    %v3291 = vpop.f32.mrb[0].mxu0
    %v3292 = vpop.f32.mrb[0].mxu0
    %3293 = vdwg.mxu0
    %v3294 = vxor.u32 %v3288, 2147483648
    %v3295 = vxor.u32 %v3290, 2147483648
    %v3296 = vmul.f32 %v3294, 1.442695
    %v3297 = vpow.pop %v3296
    %v3298 = vmul.f32 %v3295, 1.442695
    %v3299 = vpow.pop %v3298
    %v3300 = vadd.f32 %v3297, 1.0
    %v3301 = vadd.f32 %v3299, 1.0
    %v3302 = vrcp.pop %v3300
    %v3303 = vmul.f32 1.0, %v3302
    %v3304 = vrcp.pop %v3301
    %v3305 = vmul.f32 1.0, %v3304
    %v3306 = vtanh.pop %v3288
    %v3307 = vtanh.pop %v3290
    %3309 = vrot.lane.b32.xlu0 %v3227, 32
    %v3310 = vpop.permute.xlu0 %3309
    %v3312 = vmul.f32 %v3303, %v3310
    %3314 = vrot.lane.b32.xlu0 %v3306, 64
    %v3315 = vpop.permute.xlu0 %3314
    %v3317 = vmul.f32 %v3303, %v3315
    %3319 = vrot.lane.b32.xlu0 %v3317, 32
    %v3320 = vpop.permute.xlu0 %3319
    %v3322 = vadd.f32 %v3312, %v3320
    %v3323 = vmul.f32 %v3305, %v3227
    %3325 = vrot.lane.b32.xlu0 %v3307, 64
    %v3326 = vpop.permute.xlu0 %3325
    %v3328 = vmul.f32 %v3305, %v3326
    %3330 = vrot.lane.b32.xlu0 %v3328, 32
    %v3331 = vpop.permute.xlu0 %3330
    %v3333 = vadd.f32 %v3323, %v3331
    %3335 = vrot.lane.b32.xlu0 %v3322, 96
    %v3336 = vpop.permute.xlu0 %3335
    %v3338 = vsel %vm131, %v3336, %v3333
    %3340 = vrot.lane.b32.xlu0 %v3303, 32
    %v3341 = vpop.permute.xlu0 %3340
    %3344 = vrot.lane.b32.xlu0 %v3305, 64
    %v3345 = vpop.permute.xlu0 %3344
    %v3347 = vsel %vm131, %v3341, %v3345
    %v3348 = vtanh.pop %v3338
    %v3349 = vmul.f32 %v3347, %v3348
    %v3350 = vsel %vm2894, 4, 3
    %vm3351 = vcmp.eq.s32.totalorder %v2898, %v3350
    %v3352 = vsel %vm3351, %v3349, %v3241
    %v3353 = vpack.c.bf16 %v3349, %v3349
    %v3354 = vld [vmem:[#allocation2 + $0x20] sm:$0xf0]
    %v3355 = vld [vmem:[#allocation2 + $0x18] sm:$0xf]
    %v3357 = vrot.slane %v3355, 4
    %v3359 = vrot.slane %v3354, 4
    %v3360 = vrot.slane %v3357, 4
    %v3363 = vunpack.c.l.bf16 %v3359
    %v3364 = vunpack.c.l.bf16 %v3360
    %v3366 = vsel %vm288, %v3353, 0
    %3368 = vmatprep.subr.bf16.mxu0 %v2786
    %3369 = vmatpush1.bf16.msra.mxu0 %v2785
    %3370 = vmatprep.subr.bf16.mxu0 %v2788
    %3371 = vmatpush1.bf16.msra.mxu0 %v2787
    %3372 = vmatprep.subr.bf16.mxu0 %v2790
    %3373 = vmatpush1.bf16.msra.mxu0 %v2789
    %3374 = vmatprep.subr.bf16.mxu0 %v2792
    %3375 = vmatpush1.bf16.msra.mxu0 %v2791
    %3376 = vmatprep.subr.bf16.mxu0 0
    %3377 = vmatpush1.bf16.msra.mxu0 0
    %3378 = vmatprep.subr.bf16.mxu0 0
    %3379 = vmatpush1.bf16.msra.mxu0 0
    %3380 = vmatprep.subr.bf16.mxu0 0
    %3381 = vmatpush1.bf16.msra.mxu0 0
    %3382 = vmatprep.subr.bf16.mxu0 0
    %3383 = vmatpush1.bf16.msra.mxu0 0
    %3384 = vmatprep.subr.bf16.mxu0 0
    %3385 = vmatpush1.bf16.msra.mxu0 0
    %3386 = vmatprep.subr.bf16.mxu0 0
    %3387 = vmatpush1.bf16.msra.mxu0 0
    %3388 = vmatprep.subr.bf16.mxu0 0
    %3389 = vmatpush1.bf16.msra.mxu0 0
    %3390 = vmatprep.subr.bf16.mxu0 0
    %3391 = vmatpush1.bf16.msra.mxu0 0
    %3392 = vmatprep.subr.bf16.mxu0 0
    %3393 = vmatpush1.bf16.msra.mxu0 0
    %3394 = vmatprep.subr.bf16.mxu0 0
    %3395 = vmatpush1.bf16.msra.mxu0 0
    %3396 = vmatprep.subr.bf16.mxu0 0
    %3397 = vmatpush1.bf16.msra.mxu0 0
    %3398 = vmatprep.subr.bf16.mxu0 0
    %3399 = vmatpush1.bf16.msra.mxu0 0
    %3400 = vmatprep.mubr.bf16.mxu0 0
    %3401 = vmatmul.mubr.bf16.gmra.mrb[0].mxu0 %v3366
    %v3402 = vpop.f32.mrb[0].mxu0
    %v3403 = vadd.f32 %v3363, %v3402
    %v3404 = vpop.f32.mrb[0].mxu0
    %v3405 = vadd.f32 %v3364, %v3404
    %v3406 = vpop.f32.mrb[0].mxu0
    %v3407 = vpop.f32.mrb[0].mxu0
    %3408 = vdwg.mxu0
    %v3409 = vxor.u32 %v3403, 2147483648
    %v3410 = vxor.u32 %v3405, 2147483648
    %v3411 = vmul.f32 %v3409, 1.442695
    %v3412 = vpow.pop %v3411
    %v3413 = vmul.f32 %v3410, 1.442695
    %v3414 = vpow.pop %v3413
    %v3415 = vadd.f32 %v3412, 1.0
    %v3416 = vadd.f32 %v3414, 1.0
    %v3417 = vrcp.pop %v3415
    %v3418 = vmul.f32 1.0, %v3417
    %v3419 = vrcp.pop %v3416
    %v3420 = vmul.f32 1.0, %v3419
    %v3421 = vtanh.pop %v3403
    %v3422 = vtanh.pop %v3405
    %3424 = vrot.lane.b32.xlu0 %v3338, 32
    %v3425 = vpop.permute.xlu0 %3424
    %v3427 = vmul.f32 %v3418, %v3425
    %3429 = vrot.lane.b32.xlu0 %v3421, 64
    %v3430 = vpop.permute.xlu0 %3429
    %v3432 = vmul.f32 %v3418, %v3430
    %3434 = vrot.lane.b32.xlu0 %v3432, 32
    %v3435 = vpop.permute.xlu0 %3434
    %v3437 = vadd.f32 %v3427, %v3435
    %v3438 = vmul.f32 %v3420, %v3338
    %3440 = vrot.lane.b32.xlu0 %v3422, 64
    %v3441 = vpop.permute.xlu0 %3440
    %v3443 = vmul.f32 %v3420, %v3441
    %3445 = vrot.lane.b32.xlu0 %v3443, 32
    %v3446 = vpop.permute.xlu0 %3445
    %v3448 = vadd.f32 %v3438, %v3446
    %3450 = vrot.lane.b32.xlu0 %v3437, 96
    %v3451 = vpop.permute.xlu0 %3450
    %v3453 = vsel %vm131, %v3451, %v3448
    %3455 = vrot.lane.b32.xlu0 %v3418, 32
    %v3456 = vpop.permute.xlu0 %3455
    %3459 = vrot.lane.b32.xlu0 %v3420, 64
    %v3460 = vpop.permute.xlu0 %3459
    %v3462 = vsel %vm131, %v3456, %v3460
    %v3463 = vtanh.pop %v3453
    %v3464 = vmul.f32 %v3462, %v3463
    %v3465 = vsel %vm2894, 5, 2
    %vm3466 = vcmp.eq.s32.totalorder %v2898, %v3465
    %v3467 = vsel %vm3466, %v3464, %v3352
    %v3468 = vpack.c.bf16 %v3464, %v3464
    %v3469 = vld [vmem:[#allocation2 + $0x30] sm:$0xf]
    %v3470 = vld [vmem:[#allocation2 + $0x8] sm:$0xf0]
    %v3472 = vrot.slane %v3470, 4
    %v3474 = vunpack.c.l.bf16 %v3469
    %v3475 = vunpack.c.l.bf16 %v3472
    %v3477 = vsel %vm288, %v3468, 0
    %3479 = vmatprep.subr.bf16.mxu0 %v2786
    %3480 = vmatpush1.bf16.msra.mxu0 %v2785
    %3481 = vmatprep.subr.bf16.mxu0 %v2788
    %3482 = vmatpush1.bf16.msra.mxu0 %v2787
    %3483 = vmatprep.subr.bf16.mxu0 %v2790
    %3484 = vmatpush1.bf16.msra.mxu0 %v2789
    %3485 = vmatprep.subr.bf16.mxu0 %v2792
    %3486 = vmatpush1.bf16.msra.mxu0 %v2791
    %3487 = vmatprep.subr.bf16.mxu0 0
    %3488 = vmatpush1.bf16.msra.mxu0 0
    %3489 = vmatprep.subr.bf16.mxu0 0
    %3490 = vmatpush1.bf16.msra.mxu0 0
    %3491 = vmatprep.subr.bf16.mxu0 0
    %3492 = vmatpush1.bf16.msra.mxu0 0
    %3493 = vmatprep.subr.bf16.mxu0 0
    %3494 = vmatpush1.bf16.msra.mxu0 0
    %3495 = vmatprep.subr.bf16.mxu0 0
    %3496 = vmatpush1.bf16.msra.mxu0 0
    %3497 = vmatprep.subr.bf16.mxu0 0
    %3498 = vmatpush1.bf16.msra.mxu0 0
    %3499 = vmatprep.subr.bf16.mxu0 0
    %3500 = vmatpush1.bf16.msra.mxu0 0
    %3501 = vmatprep.subr.bf16.mxu0 0
    %3502 = vmatpush1.bf16.msra.mxu0 0
    %3503 = vmatprep.subr.bf16.mxu0 0
    %3504 = vmatpush1.bf16.msra.mxu0 0
    %3505 = vmatprep.subr.bf16.mxu0 0
    %3506 = vmatpush1.bf16.msra.mxu0 0
    %3507 = vmatprep.subr.bf16.mxu0 0
    %3508 = vmatpush1.bf16.msra.mxu0 0
    %3509 = vmatprep.subr.bf16.mxu0 0
    %3510 = vmatpush1.bf16.msra.mxu0 0
    %3511 = vmatprep.mubr.bf16.mxu0 0
    %3512 = vmatmul.mubr.bf16.gmra.mrb[0].mxu0 %v3477
    %v3513 = vpop.f32.mrb[0].mxu0
    %v3514 = vadd.f32 %v3474, %v3513
    %v3515 = vpop.f32.mrb[0].mxu0
    %v3516 = vadd.f32 %v3475, %v3515
    %v3517 = vpop.f32.mrb[0].mxu0
    %v3518 = vpop.f32.mrb[0].mxu0
    %3519 = vdwg.mxu0
    %v3520 = vxor.u32 %v3514, 2147483648
    %v3521 = vxor.u32 %v3516, 2147483648
    %v3522 = vmul.f32 %v3520, 1.442695
    %v3523 = vpow.pop %v3522
    %v3524 = vmul.f32 %v3521, 1.442695
    %v3525 = vpow.pop %v3524
    %v3526 = vadd.f32 %v3523, 1.0
    %v3527 = vadd.f32 %v3525, 1.0
    %v3528 = vrcp.pop %v3526
    %v3529 = vmul.f32 1.0, %v3528
    %v3530 = vrcp.pop %v3527
    %v3531 = vmul.f32 1.0, %v3530
    %v3532 = vtanh.pop %v3514
    %v3533 = vtanh.pop %v3516
    %3535 = vrot.lane.b32.xlu0 %v3453, 32
    %v3536 = vpop.permute.xlu0 %3535
    %v3538 = vmul.f32 %v3529, %v3536
    %3540 = vrot.lane.b32.xlu0 %v3532, 64
    %v3541 = vpop.permute.xlu0 %3540
    %v3543 = vmul.f32 %v3529, %v3541
    %3545 = vrot.lane.b32.xlu0 %v3543, 32
    %v3546 = vpop.permute.xlu0 %3545
    %v3548 = vadd.f32 %v3538, %v3546
    %v3549 = vmul.f32 %v3531, %v3453
    %3551 = vrot.lane.b32.xlu0 %v3533, 64
    %v3552 = vpop.permute.xlu0 %3551
    %v3554 = vmul.f32 %v3531, %v3552
    %3556 = vrot.lane.b32.xlu0 %v3554, 32
    %v3557 = vpop.permute.xlu0 %3556
    %v3559 = vadd.f32 %v3549, %v3557
    %3561 = vrot.lane.b32.xlu0 %v3548, 96
    %v3562 = vpop.permute.xlu0 %3561
    %v3564 = vsel %vm131, %v3562, %v3559
    %3566 = vrot.lane.b32.xlu0 %v3529, 32
    %v3567 = vpop.permute.xlu0 %3566
    %3570 = vrot.lane.b32.xlu0 %v3531, 64
    %v3571 = vpop.permute.xlu0 %3570
    %v3573 = vsel %vm131, %v3567, %v3571
    %v3574 = vtanh.pop %v3564
    %v3575 = vmul.f32 %v3573, %v3574
    %v3576 = vsel %vm2894, 6, 1
    %vm3577 = vcmp.eq.s32.totalorder %v2898, %v3576
    %v3578 = vsel %vm3577, %v3575, %v3467
    %v3579 = vpack.c.bf16 %v3575, %v3575
    %v3580 = vld [vmem:[#allocation2 + $0x30] sm:$0xf0]
    %v3581 = vld [vmem:[#allocation2 + $0x8] sm:$0xf]
    %v3583 = vrot.slane %v3581, 4
    %v3585 = vrot.slane %v3580, 4
    %v3586 = vrot.slane %v3583, 4
    %v3589 = vunpack.c.l.bf16 %v3585
    %v3590 = vunpack.c.l.bf16 %v3586
    %v3592 = vsel %vm288, %v3579, 0
    %3594 = vmatprep.subr.bf16.mxu0 %v2786
    %3595 = vmatpush1.bf16.msra.mxu0 %v2785
    %3596 = vmatprep.subr.bf16.mxu0 %v2788
    %3597 = vmatpush1.bf16.msra.mxu0 %v2787
    %3598 = vmatprep.subr.bf16.mxu0 %v2790
    %3599 = vmatpush1.bf16.msra.mxu0 %v2789
    %3600 = vmatprep.subr.bf16.mxu0 %v2792
    %3601 = vmatpush1.bf16.msra.mxu0 %v2791
    %3602 = vmatprep.subr.bf16.mxu0 0
    %3603 = vmatpush1.bf16.msra.mxu0 0
    %3604 = vmatprep.subr.bf16.mxu0 0
    %3605 = vmatpush1.bf16.msra.mxu0 0
    %3606 = vmatprep.subr.bf16.mxu0 0
    %3607 = vmatpush1.bf16.msra.mxu0 0
    %3608 = vmatprep.subr.bf16.mxu0 0
    %3609 = vmatpush1.bf16.msra.mxu0 0
    %3610 = vmatprep.subr.bf16.mxu0 0
    %3611 = vmatpush1.bf16.msra.mxu0 0
    %3612 = vmatprep.subr.bf16.mxu0 0
    %3613 = vmatpush1.bf16.msra.mxu0 0
    %3614 = vmatprep.subr.bf16.mxu0 0
    %3615 = vmatpush1.bf16.msra.mxu0 0
    %3616 = vmatprep.subr.bf16.mxu0 0
    %3617 = vmatpush1.bf16.msra.mxu0 0
    %3618 = vmatprep.subr.bf16.mxu0 0
    %3619 = vmatpush1.bf16.msra.mxu0 0
    %3620 = vmatprep.subr.bf16.mxu0 0
    %3621 = vmatpush1.bf16.msra.mxu0 0
    %3622 = vmatprep.subr.bf16.mxu0 0
    %3623 = vmatpush1.bf16.msra.mxu0 0
    %3624 = vmatprep.subr.bf16.mxu0 0
    %3625 = vmatpush1.bf16.msra.mxu0 0
    %3626 = vmatprep.mubr.bf16.mxu0 0
    %3627 = vmatmul.mubr.bf16.gmra.mrb[0].mxu0 %v3592
    %v3628 = vpop.f32.mrb[0].mxu0
    %v3629 = vadd.f32 %v3589, %v3628
    %v3630 = vpop.f32.mrb[0].mxu0
    %v3631 = vadd.f32 %v3590, %v3630
    %v3632 = vpop.f32.mrb[0].mxu0
    %v3633 = vpop.f32.mrb[0].mxu0
    %3634 = vdwg.mxu0
    %v3635 = vxor.u32 %v3629, 2147483648
    %v3636 = vxor.u32 %v3631, 2147483648
    %v3637 = vmul.f32 %v3635, 1.442695
    %v3638 = vpow.pop %v3637
    %v3639 = vmul.f32 %v3636, 1.442695
    %v3640 = vpow.pop %v3639
    %v3641 = vadd.f32 %v3638, 1.0
    %v3642 = vadd.f32 %v3640, 1.0
    %v3643 = vrcp.pop %v3641
    %v3644 = vmul.f32 1.0, %v3643
    %v3645 = vrcp.pop %v3642
    %v3646 = vmul.f32 1.0, %v3645
    %v3647 = vtanh.pop %v3629
    %v3648 = vtanh.pop %v3631
    %3650 = vrot.lane.b32.xlu0 %v3564, 32
    %v3651 = vpop.permute.xlu0 %3650
    %v3653 = vmul.f32 %v3644, %v3651
    %3655 = vrot.lane.b32.xlu0 %v3647, 64
    %v3656 = vpop.permute.xlu0 %3655
    %v3658 = vmul.f32 %v3644, %v3656
    %3660 = vrot.lane.b32.xlu0 %v3658, 32
    %v3661 = vpop.permute.xlu0 %3660
    %v3663 = vadd.f32 %v3653, %v3661
    %v3664 = vmul.f32 %v3646, %v3564
    %3666 = vrot.lane.b32.xlu0 %v3648, 64
    %v3667 = vpop.permute.xlu0 %3666
    %v3669 = vmul.f32 %v3646, %v3667
    %3671 = vrot.lane.b32.xlu0 %v3669, 32
    %v3672 = vpop.permute.xlu0 %3671
    %v3674 = vadd.f32 %v3664, %v3672
    %3676 = vrot.lane.b32.xlu0 %v3663, 96
    %v3677 = vpop.permute.xlu0 %3676
    %v3679 = vsel %vm131, %v3677, %v3674
    %3681 = vrot.lane.b32.xlu0 %v3644, 32
    %v3682 = vpop.permute.xlu0 %3681
    %3685 = vrot.lane.b32.xlu0 %v3646, 64
    %v3686 = vpop.permute.xlu0 %3685
    %v3688 = vsel %vm131, %v3682, %v3686
    %v3689 = vtanh.pop %v3679
    %v3690 = vmul.f32 %v3688, %v3689
    %v3691 = vsel %vm2894, 7, 0
    %vm3692 = vcmp.eq.s32.totalorder %v2898, %v3691
    %v3693 = vsel %vm3692, %v3690, %v3578
    %v3694 = vpack.c.bf16 %v3693, %v3693
    %v3695 = vld [vmem:[%s8] sm:$0xf]
    %v3696 = vld [vmem:[%s8 + $0x4] sm:$0xf]
    %v3697 = vld [vmem:[%s8 + $0x8] sm:$0xf]
    %v3698 = vld [vmem:[%s8 + $0xc] sm:$0xf]
    %v3699 = vld [vmem:[%s8 + $0x10] sm:$0xf]
    %v3700 = vld [vmem:[%s8 + $0x14] sm:$0xf]
    %v3701 = vld [vmem:[%s8 + $0x18] sm:$0xf]
    %v3702 = vld [vmem:[%s8 + $0x1c] sm:$0xf]
    %v3703 = vld [vmem:[%s9] sm:$0x1]
    %v3705 = vlaneseq
    %v3706 = vshrl.u32 %v3705, 7
    %v3707 = vsub.s32 0, %v3706
    %v3708 = vrot.slane %v3703, %v3707
    %v3718 = vunpack.c.l.b16 %v3695
    %v3719 = vunpack.c.l.b16 %v3696
    %v3720 = vunpack.c.l.b16 %v3697
    %v3721 = vunpack.c.l.b16 %v3698
    %v3722 = vunpack.c.l.b16 %v3699
    %v3723 = vunpack.c.l.b16 %v3700
    %v3724 = vunpack.c.l.b16 %v3701
    %v3725 = vunpack.c.l.b16 %v3702
    %v3726 = vpack.c.b16 %v3719, %v3718
    %v3727 = vpack.c.b16 %v3721, %v3720
    %v3728 = vpack.c.b16 %v3723, %v3722
    %v3729 = vpack.c.b16 %v3725, %v3724
    %v3735 = vsel %vm288, %v3694, 0
    %3737 = vmatprep.subr.bf16.mxu0 0
    %3738 = vmatpush1.bf16.msra.mxu0 %v3726
    %3739 = vmatprep.subr.bf16.mxu0 0
    %3740 = vmatpush1.bf16.msra.mxu0 %v3727
    %3741 = vmatprep.subr.bf16.mxu0 0
    %3742 = vmatpush1.bf16.msra.mxu0 %v3728
    %3743 = vmatprep.subr.bf16.mxu0 0
    %3744 = vmatpush1.bf16.msra.mxu0 %v3729
    %3745 = vmatprep.subr.bf16.mxu0 0
    %3746 = vmatpush1.bf16.msra.mxu0 0
    %3747 = vmatprep.subr.bf16.mxu0 0
    %3748 = vmatpush1.bf16.msra.mxu0 0
    %3749 = vmatprep.subr.bf16.mxu0 0
    %3750 = vmatpush1.bf16.msra.mxu0 0
    %3751 = vmatprep.subr.bf16.mxu0 0
    %3752 = vmatpush1.bf16.msra.mxu0 0
    %3753 = vmatprep.subr.bf16.mxu0 0
    %3754 = vmatpush1.bf16.msra.mxu0 0
    %3755 = vmatprep.subr.bf16.mxu0 0
    %3756 = vmatpush1.bf16.msra.mxu0 0
    %3757 = vmatprep.subr.bf16.mxu0 0
    %3758 = vmatpush1.bf16.msra.mxu0 0
    %3759 = vmatprep.subr.bf16.mxu0 0
    %3760 = vmatpush1.bf16.msra.mxu0 0
    %3761 = vmatprep.subr.bf16.mxu0 0
    %3762 = vmatpush1.bf16.msra.mxu0 0
    %3763 = vmatprep.subr.bf16.mxu0 0
    %3764 = vmatpush1.bf16.msra.mxu0 0
    %3765 = vmatprep.subr.bf16.mxu0 0
    %3766 = vmatpush1.bf16.msra.mxu0 0
    %3767 = vmatprep.subr.bf16.mxu0 0
    %3768 = vmatpush1.bf16.msra.mxu0 0
    %3769 = vmatprep.mubr.bf16.mxu0 0
    %3770 = vmatmul.mubr.bf16.gmra.mrb[0].mxu0 %v3735
    %v3771 = vpop.f32.mrb[0].mxu0
    %v3772 = vadd.f32 %v3708, %v3771
    %v3773 = vpop.f32.mrb[0].mxu0
    %v3774 = vpop.f32.mrb[0].mxu0
    %v3775 = vpop.f32.mrb[0].mxu0
    %3776 = vdwg.mxu0
    %vm3777 = vcmask 15360
    %v3778 = vsel %vm3777, %v3772, -inf
    %3779 = vmax.xlane.f32.xlu0 %v3778
    %v3780 = vpop.xlane.xlu0 %3779
    %v3781 = vsub.f32 %v3772, %v3780
    %v3782 = vmul.f32 %v3781, 1.442695
    %v3783 = vpow.pop %v3782
    %v3784 = vsel %vm3777, %v3783, 0.0
    %3785 = vadd.xlane.f32.xlu0 %v3784
    %v3786 = vpop.xlane.xlu0 %3785
    %v3787 = vlog2.pop %v3786
    %v3788 = vmul.f32 %v3787, 0.6931472
    %v3789 = vadd.f32 %v3780, %v3788
    %v3790 = vsub.f32 %v3772, %v3789
    %3791 = vst.msk [vmem:[%s10] sm:$0xff] %vm3777, %v3790
    // Predicated region
    $region50: #{tpu_custom_call.1} parent=1 // pred_check
      _
    $region51: #{tpu_custom_call.1} parent=1 // pred_check_branch
      %3793 = sbr.rel (0) target = $region53
    $region52: #{tpu_custom_call.1} parent=1 // pred_region
      _
    $region53: #{tpu_custom_call.1} parent=1 // pred_fallthru
      _
    // Predicated region
    $region54: #{tpu_custom_call.1} parent=1 // pred_check
      _
    $region55: #{tpu_custom_call.1} parent=1 // pred_check_branch
      %3795 = sbr.rel (0) target = $region57
    $region56: #{tpu_custom_call.1} parent=1 // pred_region
      _
    $region57: #{tpu_custom_call.1} parent=1 // pred_fallthru
      _
    %3796 = vsyncpa [#allocation6], 1
    %3797 = vsyncpa [#allocation8], 1

</llo_original>
